<compile_context>
chip_gen: v6e
topology: v6e:2x2x1
jax: 0.10.0
libtpu: 0.0.40
codegen_flags: <defaults>
</compile_context>

<pallas_src>
import functools

import jax
import jax.numpy as jnp
from jax.experimental import pallas as pl
from jax.experimental.pallas import tpu as pltpu


def _pick_tile(dim, preferred):
    """Largest preferred tile that divides dim, else the full dim."""
    for t in preferred:
        if dim % t == 0:
            return t
    return dim


def _vmem_capacity_bytes():
    """Physical VMEM of the current device; conservative fallback = v7x TC."""
    try:
        return int(pltpu.get_tpu_info().vmem_capacity_bytes)
    except Exception:
        return 64 << 20


def choose_tiles(n, h, inter, x_dtype, w_dtype, o_dtype):
    """Pick (TN, TI) for the expert kernel.

    Preference order: (a) >= 2 token tiles (so the leading 'parallel' grid axis
    can split across TensorCores on v7x), (b) largest TN (weights are
    re-streamed once per token tile, so arithmetic intensity ~ TN flops per
    weight byte), (c) largest TI (fewer reduction steps / accumulator adds) —
    subject to the double-buffered working set fitting ~80% of physical VMEM.
    Deterministic, so the offline gate/up weight packing and the kernel agree
    on TI.
    """
    x_b = jnp.dtype(x_dtype).itemsize
    w_b = jnp.dtype(w_dtype).itemsize
    o_b = jnp.dtype(o_dtype).itemsize
    budget = int(_vmem_capacity_bytes() * 0.8)

    tn_opts = [t for t in (512, 256, 128, 64, 32, 16, 8) if n % t == 0] or [n]
    ti_opts = [t for t in (1024, 512, 256, 128) if inter % t == 0] or [inter]

    def need(tn, ti):
        wbuf = 2 * 3 * h * ti * w_b            # 2-buffered fused gate/up + down tiles
        tbuf = 2 * tn * h * (x_b + o_b)        # 2-buffered x + out tiles
        sbuf = 2 * tn * 4                      # scale column
        acc = tn * h * 4                       # resident f32 accumulator
        return wbuf + tbuf + sbuf + acc + (2 << 20)

    best_key, best_tiles = None, None
    for tn in tn_opts:
        for ti in ti_opts:
            if need(tn, ti) > budget:
                continue
            key = (n // tn >= 2, tn, ti)
            if best_key is None or key > best_key:
                best_key, best_tiles = key, (tn, ti)
    if best_tiles is None:                      # nothing fits: smallest tiles
        best_tiles = (tn_opts[-1], ti_opts[-1])
    tn, ti = best_tiles
    return tn, ti, need(tn, ti)


# ----------------------------------------------------------------------------
# Router kernel: logits = x @ Wr + br ; softmax over experts. Tiled over N.
# ----------------------------------------------------------------------------
def _router_kernel(x_ref, wr_ref, br_ref, rw_ref):
    logits = jnp.dot(x_ref[...], wr_ref[...],
                     preferred_element_type=jnp.float32) + br_ref[...]
    m = jnp.max(logits, axis=-1, keepdims=True)
    p = jnp.exp(logits - m)
    rw_ref[...] = p / jnp.sum(p, axis=-1, keepdims=True)


def router_softmax(x_flat, wr_t, br):
    n, h = x_flat.shape
    e = wr_t.shape[1]
    tn = _pick_tile(n, (512, 256, 128, 64, 32, 16, 8))
    return pl.pallas_call(
        _router_kernel,
        out_shape=jax.ShapeDtypeStruct((n, e), jnp.float32),
        grid_spec=pltpu.PrefetchScalarGridSpec(
            num_scalar_prefetch=0,
            grid=(n // tn,),
            in_specs=[
                pl.BlockSpec((tn, h), lambda i: (i, 0)),
                pl.BlockSpec((h, e), lambda i: (0, 0)),
                pl.BlockSpec((1, e), lambda i: (0, 0)),
            ],
            out_specs=pl.BlockSpec((tn, e), lambda i: (i, 0)),
        ),
        compiler_params=pltpu.CompilerParams(
            dimension_semantics=("parallel",)),
    )(x_flat, wr_t, br.reshape(1, e))


# ----------------------------------------------------------------------------
# MoE expert kernel.
#   grid = (token tiles [parallel], experts, intermediate tiles)
#   acc(TN,H) f32 accumulates over (expert, I-tile); written out on last step.
# ----------------------------------------------------------------------------
def _moe_expert_kernel(x_ref, wgu_ref, wd_ref, scale_ref, out_ref, acc_ref, *,
                       ti):
    e = pl.program_id(1)
    it = pl.program_id(2)

    @pl.when((e == 0) & (it == 0))
    def _():
        acc_ref[...] = jnp.zeros_like(acc_ref)

    x = x_ref[...]                                                  # (TN,H) bf16
    # One MXU dot for both projections: wgu tile is [Wg_tile | Wu_tile].
    gu = jnp.dot(x, wgu_ref[...],
                 preferred_element_type=jnp.float32)                # (TN,2TI) f32
    gate = gu[:, :ti]
    up = gu[:, ti:]
    gate = gate * jax.nn.sigmoid(gate)                              # SiLU in f32
    # Routing scale (active-expert mask already folded in) applied on the
    # narrow (TN,TI) intermediate; row scaling commutes with the down matmul.
    hmid = (gate * up * scale_ref[...]).astype(wd_ref.dtype)        # bf16 for MXU
    acc_ref[...] += jnp.dot(hmid, wd_ref[...],
                            preferred_element_type=jnp.float32)     # (TN,H) f32

    @pl.when((e == pl.num_programs(1) - 1) & (it == pl.num_programs(2) - 1))
    def _():
        out_ref[...] = acc_ref[...].astype(out_ref.dtype)


def moe_experts(x_flat, wgu_t, wd_t, scale_t, out_dtype):
    n, h = x_flat.shape
    num_experts, inter, _ = wd_t.shape
    assert wgu_t.shape == (num_experts, h, 2 * inter)

    tn, ti, vmem_need = choose_tiles(n, h, inter, x_flat.dtype, wgu_t.dtype,
                                     out_dtype)
    n_tiles = n // tn
    i_tiles = inter // ti

    w_bytes = jnp.dtype(wgu_t.dtype).itemsize
    x_bytes = jnp.dtype(x_flat.dtype).itemsize
    o_bytes = jnp.dtype(out_dtype).itemsize

    vmem_limit = int(min(max(int(vmem_need * 1.25), 32 << 20),
                         _vmem_capacity_bytes()))

    cost = pl.CostEstimate(
        flops=6 * n * h * inter * num_experts,
        transcendentals=n * inter * num_experts,
        bytes_accessed=int(3 * num_experts * h * inter * w_bytes * n_tiles
                           + n * h * (x_bytes + o_bytes)
                           + num_experts * n * 4),
    )

    grid_spec = pltpu.PrefetchScalarGridSpec(
        num_scalar_prefetch=0,
        grid=(n_tiles, num_experts, i_tiles),
        in_specs=[
            pl.BlockSpec((tn, h), lambda nb, eb, ib: (nb, 0)),                # tokens
            pl.BlockSpec((None, h, 2 * ti), lambda nb, eb, ib: (eb, 0, ib)),  # [Wg|Wu]
            pl.BlockSpec((None, ti, h), lambda nb, eb, ib: (eb, ib, 0)),      # Wd^T
            pl.BlockSpec((None, tn, 1), lambda nb, eb, ib: (eb, nb, 0)),      # scale
        ],
        out_specs=pl.BlockSpec((tn, h), lambda nb, eb, ib: (nb, 0)),
        scratch_shapes=[pltpu.VMEM((tn, h), jnp.float32)],
    )

    return pl.pallas_call(
        functools.partial(_moe_expert_kernel, ti=ti),
        out_shape=jax.ShapeDtypeStruct((n, h), out_dtype),
        grid_spec=grid_spec,
        compiler_params=pltpu.CompilerParams(
            dimension_semantics=("parallel", "arbitrary", "arbitrary"),
            vmem_limit_bytes=vmem_limit),
        cost_estimate=cost,
    )(x_flat, wgu_t, wd_t, scale_t)


# ----------------------------------------------------------------------------
# Full MoELayer forward.
# ----------------------------------------------------------------------------
@jax.jit
def moe_layer_forward(hidden_states, params):
    b, s, h = hidden_states.shape
    num_experts = params["wr_t"].shape[1]
    n = b * s
    x_flat = hidden_states.reshape(n, h)

    # Router + softmax (f32, matches the PyTorch module).
    routing_weights = router_softmax(x_flat, params["wr_t"], params["br"])  # (N,E)

    # Balance loss: mean over batch dim, MSE against uniform.
    mean_routing = routing_weights.reshape(b, s, num_experts).mean(axis=0)
    balance_loss = jnp.mean((mean_routing - 1.0 / num_experts) ** 2) * 0.01

    # Module semantics: an expert contributes to ALL tokens (weighted by its
    # full softmax column) iff it appears in the top-2 of at least one token.
    _, topk_idx = jax.lax.top_k(routing_weights, 2)
    active = jnp.any(topk_idx[..., None] == jnp.arange(num_experts),
                     axis=(0, 1))                                      # (E,) bool
    scale = routing_weights * active.astype(routing_weights.dtype)[None, :]
    scale_t = scale.T.reshape(num_experts, n, 1)                       # (E,N,1)

    # Hoisted once: bf16 operand for the MXU.
    x_bf16 = x_flat.astype(params["wgu_t"].dtype)

    out_flat = moe_experts(x_bf16, params["wgu_t"], params["wd_t"], scale_t,
                           hidden_states.dtype)
    return out_flat.reshape(b, s, h), balance_loss


# ----------------------------------------------------------------------------
# Parameter init + one-time fused gate/up weight packing.
# ----------------------------------------------------------------------------
def init_params(key, hidden_size, intermediate_size, num_experts):
    keys = jax.random.split(key, 5)
    scale = 0.02
    wg_t = (scale * jax.random.normal(
        keys[0], (num_experts, hidden_size, intermediate_size),
        jnp.float32)).astype(jnp.bfloat16)
    wu_t = (scale * jax.random.normal(
        keys[1], (num_experts, hidden_size, intermediate_size),
        jnp.float32)).astype(jnp.bfloat16)
    wd_t = (scale * jax.random.normal(
        keys[2], (num_experts, intermediate_size, hidden_size),
        jnp.float32)).astype(jnp.bfloat16)
    wr_t = scale * jax.random.normal(
        keys[3], (hidden_size, num_experts), jnp.float32)
    br = scale * jax.random.normal(keys[4], (num_experts,), jnp.float32)
    return {"wg_t": wg_t, "wu_t": wu_t, "wd_t": wd_t, "wr_t": wr_t, "br": br}


def pack_gate_up(wg_t, wu_t, ti):
    """Interleave gate/up weights per TI-tile so column block ib (width 2*TI)
    of the packed array is [Wg[:, ib*TI:(ib+1)*TI] | Wu[:, ib*TI:(ib+1)*TI]]."""
    e, h, inter = wg_t.shape
    it = inter // ti
    wg4 = wg_t.reshape(e, h, it, ti)
    wu4 = wu_t.reshape(e, h, it, ti)
    return jnp.concatenate([wg4, wu4], axis=-1).reshape(e, h, 2 * inter)


def prepare_params(params, n_tokens, out_dtype=jnp.float32):
    """Offline (outside jit) weight re-layout using the same deterministic tile
    choice the expert kernel will make for this token count / device."""
    _, h, inter = params["wg_t"].shape
    _, ti, _ = choose_tiles(n_tokens, h, inter, jnp.bfloat16,
                            params["wg_t"].dtype, out_dtype)
    p = dict(params)
    p["wgu_t"] = pack_gate_up(params["wg_t"], params["wu_t"], ti)
    return p


# Pure-JAX reference (same precision recipe: bf16 weights/operands, f32 acc,
# routing scale applied in f32 before the bf16 cast of the intermediate).
def reference_forward(x, params):
    num_experts = params["wr_t"].shape[1]
    logits = jnp.einsum("bsh,he->bse", x, params["wr_t"]) + params["br"]
    rw = jax.nn.softmax(logits, axis=-1)
    mean_routing = rw.mean(axis=0)
    balance_loss = jnp.mean((mean_routing - 1.0 / num_experts) ** 2) * 0.01
    _, topk_idx = jax.lax.top_k(rw, 2)
    x_bf = x.astype(params["wg_t"].dtype)
    out = jnp.zeros_like(x)
    for i in range(num_experts):
        any_i = jnp.any(topk_idx == i).astype(jnp.float32)
        g = jnp.einsum("bsh,hi->bsi", x_bf, params["wg_t"][i],
                       preferred_element_type=jnp.float32)
        g = g * jax.nn.sigmoid(g)
        u = jnp.einsum("bsh,hi->bsi", x_bf, params["wu_t"][i],
                       preferred_element_type=jnp.float32)
        hmid = (g * u * rw[..., i:i + 1] * any_i).astype(params["wd_t"].dtype)
        y = jnp.einsum("bsi,ih->bsh", hmid, params["wd_t"][i],
                       preferred_element_type=jnp.float32)
        out = out + y
    return out.astype(x.dtype), balance_loss


if __name__ == "__main__":
    # Small but tiling-exercising shapes: 2 token tiles (megacore-parallel
    # axis), lane-aligned H/I.
    batch, seq, hidden, inter, n_exp = 2, 128, 256, 1024, 4

    key = jax.random.PRNGKey(0)
    x = jax.random.normal(key, (batch, seq, hidden), jnp.float32)
    params = init_params(jax.random.PRNGKey(42), hidden, inter, n_exp)
    params = prepare_params(params, batch * seq, x.dtype)

    out, bal_loss = moe_layer_forward(x, params)
    out = jax.block_until_ready(out)
    bal_loss = jax.block_until_ready(bal_loss)

    ref_out, ref_loss = reference_forward(x, params)
    assert out.shape == (batch, seq, hidden)
    assert jnp.allclose(out, ref_out, atol=2e-4, rtol=2e-2), (
        float(jnp.max(jnp.abs(out - ref_out))))
    assert jnp.allclose(bal_loss, ref_loss, atol=1e-6)

    print("KERNEL_OK")
</pallas_src>

<mosaic_0001>
module attributes {stable_mosaic.version = 11 : i64} {
  func.func @_router_kernel(%arg0: i32, %arg1: memref<256x256xf32, #tpu.memory_space<vmem>>, %arg2: memref<256x4xf32, #tpu.memory_space<vmem>>, %arg3: memref<1x4xf32, #tpu.memory_space<vmem>>, %arg4: memref<256x4xf32, #tpu.memory_space<vmem>>) attributes {dimension_semantics = [#tpu.dimension_semantics<parallel>], iteration_bounds = array<i64: 1>, scalar_prefetch = 0 : i64, scratch_operands = 0 : i64, tpu.core_type = #tpu.core_type<tc>, window_params = [{transform_indices = @transform_0, window_bounds = array<i64: 256, 256>}, {pipeline_mode = #tpu.pipeline_mode<synchronous>, transform_indices = @transform_1, window_bounds = array<i64: 256, 4>}, {pipeline_mode = #tpu.pipeline_mode<synchronous>, transform_indices = @transform_2, window_bounds = array<i64: 1, 4>}, {transform_indices = @transform_3, window_bounds = array<i64: 256, 4>}]} {
    %c0 = arith.constant 0 : index
    %c0_0 = arith.constant 0 : index
    %0 = vector.load %arg1[%c0, %c0_0] : memref<256x256xf32, #tpu.memory_space<vmem>>, vector<256x256xf32>
    %c0_1 = arith.constant 0 : index
    %c0_2 = arith.constant 0 : index
    %1 = vector.load %arg2[%c0_1, %c0_2] : memref<256x4xf32, #tpu.memory_space<vmem>>, vector<256x4xf32>
    %cst = arith.constant dense<0.000000e+00> : vector<256x4xf32>
    %2 = tpu.matmul %0, %1, %cst {dimension_numbers = #tpu.dot_dimension_numbers<[1], [0], [0], [1], [0, 0, 1, 1], [], []>} : vector<256x256xf32>, vector<256x4xf32>, vector<256x4xf32> -> vector<256x4xf32>
    %c0_3 = arith.constant 0 : index
    %c0_4 = arith.constant 0 : index
    %3 = vector.load %arg3[%c0_3, %c0_4] : memref<1x4xf32, #tpu.memory_space<vmem>>, vector<1x4xf32>
    %4 = vector.broadcast %3 : vector<1x4xf32> to vector<256x4xf32>
    %5 = arith.addf %2, %4 : vector<256x4xf32>
    %cst_5 = arith.constant dense<0xFF800000> : vector<256xf32>
    %6 = vector.multi_reduction <maximumf>, %5, %cst_5 [1] : vector<256x4xf32> to vector<256xf32>
    %7 = vector.shape_cast %6 : vector<256xf32> to vector<256x1xf32>
    %8 = vector.broadcast %7 : vector<256x1xf32> to vector<256x4xf32>
    %9 = arith.subf %5, %8 : vector<256x4xf32>
    %10 = math.exp %9 : vector<256x4xf32>
    %cst_6 = arith.constant dense<0.000000e+00> : vector<256xf32>
    %11 = vector.multi_reduction <add>, %10, %cst_6 [1] : vector<256x4xf32> to vector<256xf32>
    %12 = vector.shape_cast %11 : vector<256xf32> to vector<256x1xf32>
    %13 = vector.broadcast %12 : vector<256x1xf32> to vector<256x4xf32>
    %14 = arith.divf %10, %13 : vector<256x4xf32>
    %c0_7 = arith.constant 0 : index
    %c0_8 = arith.constant 0 : index
    %15 = vector.load %arg4[%c0_7, %c0_8] : memref<256x4xf32, #tpu.memory_space<vmem>>, vector<256x4xf32>
    tpu.vector_store %arg4[%c0_7, %c0_8], %14 {strides = array<i32>} : memref<256x4xf32, #tpu.memory_space<vmem>>, vector<256x4xf32>,
    return
  }
  func.func @transform_0(%arg0: i32) -> (i32, i32) {
    %c0_i32 = arith.constant 0 : i32
    %c0_i32_0 = arith.constant 0 : i32
    return %arg0, %c0_i32 : i32, i32
  }
  func.func @transform_1(%arg0: i32) -> (i32, i32) {
    %c0_i32 = arith.constant 0 : i32
    %c0_i32_0 = arith.constant 0 : i32
    %c0_i32_1 = arith.constant 0 : i32
    return %c0_i32, %c0_i32_0 : i32, i32
  }
  func.func @transform_2(%arg0: i32) -> (i32, i32) {
    %c0_i32 = arith.constant 0 : i32
    %c0_i32_0 = arith.constant 0 : i32
    %c0_i32_1 = arith.constant 0 : i32
    return %c0_i32, %c0_i32_0 : i32, i32
  }
  func.func @transform_3(%arg0: i32) -> (i32, i32) {
    %c0_i32 = arith.constant 0 : i32
    %c0_i32_0 = arith.constant 0 : i32
    return %arg0, %c0_i32 : i32, i32
  }
}

module attributes {stable_mosaic.version = 11 : i64} {
  func.func @_moe_expert_kernel(%arg0: i32, %arg1: i32, %arg2: i32, %arg3: memref<128x256xbf16, #tpu.memory_space<vmem>>, %arg4: memref<1x256x2048xbf16, #tpu.memory_space<vmem>>, %arg5: memref<1x1024x256xbf16, #tpu.memory_space<vmem>>, %arg6: memref<1x128x1xf32, #tpu.memory_space<vmem>>, %arg7: memref<128x256xf32, #tpu.memory_space<vmem>>, %arg8: memref<128x256xf32, #tpu.memory_space<vmem>>) attributes {dimension_semantics = [#tpu.dimension_semantics<parallel>, #tpu.dimension_semantics<arbitrary>, #tpu.dimension_semantics<arbitrary>], iteration_bounds = array<i64: 2, 4, 1>, scalar_prefetch = 0 : i64, scratch_operands = 1 : i64, tpu.core_type = #tpu.core_type<tc>, window_params = [{transform_indices = @transform_0, window_bounds = array<i64: 128, 256>}, {transform_indices = @transform_1, window_bounds = array<i64: 1, 256, 2048>}, {transform_indices = @transform_2, window_bounds = array<i64: 1, 1024, 256>}, {transform_indices = @transform_3, window_bounds = array<i64: 1, 128, 1>}, {transform_indices = @transform_4, window_bounds = array<i64: 128, 256>}]} {
    %c0_i32 = arith.constant 0 : i32
    %0 = arith.cmpi eq, %arg1, %c0_i32 : i32
    %c0_i32_0 = arith.constant 0 : i32
    %1 = arith.cmpi eq, %arg2, %c0_i32_0 : i32
    %2 = arith.andi %0, %1 : i1
    %3 = arith.extui %2 : i1 to i32
    %c0_i32_1 = arith.constant 0 : i32
    %4 = arith.cmpi ne, %3, %c0_i32_1 : i32
    scf.if %4 {
      %cst_20 = arith.constant 0.000000e+00 : f32
      %34 = vector.broadcast %cst_20 : f32 to vector<128x256xf32>
      %c0_21 = arith.constant 0 : index
      %c0_22 = arith.constant 0 : index
      %35 = vector.load %arg8[%c0_21, %c0_22] : memref<128x256xf32, #tpu.memory_space<vmem>>, vector<128x256xf32>
      tpu.vector_store %arg8[%c0_21, %c0_22], %34 {strides = array<i32>} : memref<128x256xf32, #tpu.memory_space<vmem>>, vector<128x256xf32>,
    } else {
    }
    %c0 = arith.constant 0 : index
    %c0_2 = arith.constant 0 : index
    %5 = vector.load %arg3[%c0, %c0_2] : memref<128x256xbf16, #tpu.memory_space<vmem>>, vector<128x256xbf16>
    %c0_3 = arith.constant 0 : index
    %c0_4 = arith.constant 0 : index
    %c0_5 = arith.constant 0 : index
    %6 = vector.load %arg4[%c0_3, %c0_4, %c0_5] : memref<1x256x2048xbf16, #tpu.memory_space<vmem>>, vector<1x256x2048xbf16>
    %7 = vector.shape_cast %6 : vector<1x256x2048xbf16> to vector<256x2048xbf16>
    %cst = arith.constant dense<0.000000e+00> : vector<128x2048xf32>
    %8 = tpu.matmul %5, %7, %cst {dimension_numbers = #tpu.dot_dimension_numbers<[1], [0], [0], [1], [0, 0, 1, 1], [], []>} : vector<128x256xbf16>, vector<256x2048xbf16>, vector<128x2048xf32> -> vector<128x2048xf32>
    %9 = vector.extract_strided_slice %8 {offsets = [0, 0], sizes = [128, 1024], strides = [1, 1]} : vector<128x2048xf32> to vector<128x1024xf32>
    %10 = vector.extract_strided_slice %8 {offsets = [0, 1024], sizes = [128, 1024], strides = [1, 1]} : vector<128x2048xf32> to vector<128x1024xf32>
    %11 = arith.negf %9 : vector<128x1024xf32>
    %12 = math.exp %11 : vector<128x1024xf32>
    %cst_6 = arith.constant 1.000000e+00 : f32
    %13 = vector.broadcast %cst_6 : f32 to vector<128x1024xf32>
    %14 = arith.addf %13, %12 : vector<128x1024xf32>
    %15 = arith.divf %13, %14 : vector<128x1024xf32>
    %16 = arith.mulf %9, %15 : vector<128x1024xf32>
    %17 = arith.mulf %16, %10 : vector<128x1024xf32>
    %c0_7 = arith.constant 0 : index
    %c0_8 = arith.constant 0 : index
    %c0_9 = arith.constant 0 : index
    %18 = vector.load %arg6[%c0_7, %c0_8, %c0_9] : memref<1x128x1xf32, #tpu.memory_space<vmem>>, vector<1x128x1xf32>
    %19 = vector.shape_cast %18 : vector<1x128x1xf32> to vector<128x1xf32>
    %20 = vector.broadcast %19 : vector<128x1xf32> to vector<128x1024xf32>
    %21 = arith.mulf %17, %20 : vector<128x1024xf32>
    %22 = arith.truncf %21 : vector<128x1024xf32> to vector<128x1024xbf16>
    %c0_10 = arith.constant 0 : index
    %c0_11 = arith.constant 0 : index
    %23 = vector.load %arg8[%c0_10, %c0_11] : memref<128x256xf32, #tpu.memory_space<vmem>>, vector<128x256xf32>
    %c0_12 = arith.constant 0 : index
    %c0_13 = arith.constant 0 : index
    %c0_14 = arith.constant 0 : index
    %24 = vector.load %arg5[%c0_12, %c0_13, %c0_14] : memref<1x1024x256xbf16, #tpu.memory_space<vmem>>, vector<1x1024x256xbf16>
    %25 = vector.shape_cast %24 : vector<1x1024x256xbf16> to vector<1024x256xbf16>
    %cst_15 = arith.constant dense<0.000000e+00> : vector<128x256xf32>
    %26 = tpu.matmul %22, %25, %cst_15 {dimension_numbers = #tpu.dot_dimension_numbers<[1], [0], [0], [1], [0, 0, 1, 1], [], []>} : vector<128x1024xbf16>, vector<1024x256xbf16>, vector<128x256xf32> -> vector<128x256xf32>
    %27 = arith.addf %23, %26 : vector<128x256xf32>
    %c0_16 = arith.constant 0 : index
    %c0_17 = arith.constant 0 : index
    %28 = vector.load %arg8[%c0_16, %c0_17] : memref<128x256xf32, #tpu.memory_space<vmem>>, vector<128x256xf32>
    tpu.vector_store %arg8[%c0_16, %c0_17], %27 {strides = array<i32>} : memref<128x256xf32, #tpu.memory_space<vmem>>, vector<128x256xf32>,
    %c3_i32 = arith.constant 3 : i32
    %29 = arith.cmpi eq, %arg1, %c3_i32 : i32
    %c0_i32_18 = arith.constant 0 : i32
    %30 = arith.cmpi eq, %arg2, %c0_i32_18 : i32
    %31 = arith.andi %29, %30 : i1
    %32 = arith.extui %31 : i1 to i32
    %c0_i32_19 = arith.constant 0 : i32
    %33 = arith.cmpi ne, %32, %c0_i32_19 : i32
    scf.if %33 {
      %c0_20 = arith.constant 0 : index
      %c0_21 = arith.constant 0 : index
      %34 = vector.load %arg8[%c0_20, %c0_21] : memref<128x256xf32, #tpu.memory_space<vmem>>, vector<128x256xf32>
      %c0_22 = arith.constant 0 : index
      %c0_23 = arith.constant 0 : index
      %35 = vector.load %arg7[%c0_22, %c0_23] : memref<128x256xf32, #tpu.memory_space<vmem>>, vector<128x256xf32>
      tpu.vector_store %arg7[%c0_22, %c0_23], %34 {strides = array<i32>} : memref<128x256xf32, #tpu.memory_space<vmem>>, vector<128x256xf32>,
    } else {
    }
    return
  }
  func.func @transform_0(%arg0: i32, %arg1: i32, %arg2: i32) -> (i32, i32) {
    %c0_i32 = arith.constant 0 : i32
    %c0_i32_0 = arith.constant 0 : i32
    return %arg0, %c0_i32 : i32, i32
  }
  func.func @transform_1(%arg0: i32, %arg1: i32, %arg2: i32) -> (i32, i32, i32) {
    %c0_i32 = arith.constant 0 : i32
    %c0_i32_0 = arith.constant 0 : i32
    return %arg1, %c0_i32, %arg2 : i32, i32, i32
  }
  func.func @transform_2(%arg0: i32, %arg1: i32, %arg2: i32) -> (i32, i32, i32) {
    %c0_i32 = arith.constant 0 : i32
    %c0_i32_0 = arith.constant 0 : i32
    return %arg1, %arg2, %c0_i32 : i32, i32, i32
  }
  func.func @transform_3(%arg0: i32, %arg1: i32, %arg2: i32) -> (i32, i32, i32) {
    %c0_i32 = arith.constant 0 : i32
    %c0_i32_0 = arith.constant 0 : i32
    return %arg1, %arg0, %c0_i32 : i32, i32, i32
  }
  func.func @transform_4(%arg0: i32, %arg1: i32, %arg2: i32) -> (i32, i32) {
    %c0_i32 = arith.constant 0 : i32
    %c0_i32_0 = arith.constant 0 : i32
    return %arg0, %c0_i32 : i32, i32
  }
}

</mosaic_0001>

<llo_original>
// kernel: moe_layer_forward.2
$region0: #{moe_layer_forward.2}
  #allocation0 [shape = 'u32[]', space=smem, size = 0x4, offset = 0x4, fixed_abs, tag = 'smem constant byte address 0x4 - core index']
  #allocation1 [shape = 'u32[144,128]{1,0:T(1,128)}', space=vmem, size = 0x12000, scoped, tag = 'internal scratch']
  %s0 = inlined_call_operand.hbm [shape: f32[256,256], index: 0, kind: input, shape index: {}]
  %s1 = inlined_call_operand.vmem [shape: f32[256,4], index: 1, kind: input, shape index: {}]
  %s2 = inlined_call_operand.hbm [shape: f32[1,4], index: 2, kind: input, shape index: {}]
  %s3 = inlined_call_operand.vmem [shape: f32[256,4], index: 3, kind: output, shape index: {}]
  %s4 = sld [smem:[#allocation0]]
  $region30: #{moe_layer_forward.2} parent=0
    _
  %s6 = ssub.s32 1, %s4
  %s7 = scalar_select 0, %s6, %s4
  $region1: #{moe_layer_forward.2} parent=0
    #allocation2 [shape = 'u8[262144]{0}', space=vmem, size = 0x40000, scoped, tag = 'input window, operand 0, single buffered']
    #allocation3 [shape = 's32[1]{0}', space=sflag, size = 0x4, scoped, tag = 'scoped memory for moe_layer_forward.2']
    #allocation4 [shape = 'u8[512]{0}', space=vmem, size = 0x400, scoped, tag = 'input window, operand 2, single buffered']
    #allocation5 [shape = 's32[1]{0}', space=sflag, size = 0x4, scoped, tag = 'scoped memory for moe_layer_forward.2']
    %8 = vsyncpa [#allocation3], 0
    %9 = vsyncpa [#allocation5], 0
    // Predicated region
    $region2: #{moe_layer_forward.2} parent=1 // pred_check
      _
    $region3: #{moe_layer_forward.2} parent=1 // pred_check_branch
      %11 = sbr.rel (0) target = $region5
    $region4: #{moe_layer_forward.2} parent=1 // pred_region
      %s13 = ssub.s32 8192, 8192
      %14 = vsyncadd [#allocation3], %s13
      %s15 = sshll.u32 [#allocation2], 4
      %s16 = int_to_ptr.vmem [resolvable:$true] %s15
      %21 = dma.hbm_to_vmem [thread:$0]  %s0, 8192, %s16, [#allocation3], 256, 256, 16
    $region5: #{moe_layer_forward.2} parent=1 // pred_fallthru
      _
    // Predicated region
    $region6: #{moe_layer_forward.2} parent=1 // pred_check
      _
    $region7: #{moe_layer_forward.2} parent=1 // pred_check_branch
      %23 = sbr.rel (0) target = $region9
    $region8: #{moe_layer_forward.2} parent=1 // pred_region
      _
    $region9: #{moe_layer_forward.2} parent=1 // pred_fallthru
      _
    // Predicated region
    $region10: #{moe_layer_forward.2} parent=1 // pred_check
      _
    $region11: #{moe_layer_forward.2} parent=1 // pred_check_branch
      %25 = sbr.rel (0) target = $region13
    $region12: #{moe_layer_forward.2} parent=1 // pred_region
      %s27 = ssub.s32 16, 16
      %28 = vsyncadd [#allocation5], %s27
      %s30 = sshll.u32 [#allocation4], 4
      %s31 = int_to_ptr.vmem [resolvable:$true] %s30
      %33 = dma.hbm_to_vmem [thread:$0]  %s2, 16, %s31, [#allocation5]
    $region13: #{moe_layer_forward.2} parent=1 // pred_fallthru
      _
    // Predicated region
    $region14: #{moe_layer_forward.2} parent=1 // pred_check
      _
    $region15: #{moe_layer_forward.2} parent=1 // pred_check_branch
      %35 = sbr.rel (0) target = $region17
    $region16: #{moe_layer_forward.2} parent=1 // pred_region
      %36 = dma.done [#allocation3], 8192
    $region17: #{moe_layer_forward.2} parent=1 // pred_fallthru
      _
    // Predicated region
    $region18: #{moe_layer_forward.2} parent=1 // pred_check
      _
    $region19: #{moe_layer_forward.2} parent=1 // pred_check_branch
      %38 = sbr.rel (0) target = $region21
    $region20: #{moe_layer_forward.2} parent=1 // pred_region
      %39 = dma.done [#allocation5], 16
    $region21: #{moe_layer_forward.2} parent=1 // pred_fallthru
      _
    %v40 = vld [vmem:[#allocation2] sm:$0xff]
    %v41 = vld [vmem:[#allocation2 + $0x8] sm:$0xff]
    %v42 = vld [vmem:[#allocation2 + $0x10] sm:$0xff]
    %v43 = vld [vmem:[#allocation2 + $0x18] sm:$0xff]
    %v44 = vld [vmem:[#allocation2 + $0x20] sm:$0xff]
    %v45 = vld [vmem:[#allocation2 + $0x28] sm:$0xff]
    %v46 = vld [vmem:[#allocation2 + $0x30] sm:$0xff]
    %v47 = vld [vmem:[#allocation2 + $0x38] sm:$0xff]
    %v48 = vld [vmem:[#allocation2 + $0x40] sm:$0xff]
    %v49 = vld [vmem:[#allocation2 + $0x48] sm:$0xff]
    %v50 = vld [vmem:[#allocation2 + $0x50] sm:$0xff]
    %v51 = vld [vmem:[#allocation2 + $0x58] sm:$0xff]
    %v52 = vld [vmem:[#allocation2 + $0x60] sm:$0xff]
    %v53 = vld [vmem:[#allocation2 + $0x68] sm:$0xff]
    %v54 = vld [vmem:[#allocation2 + $0x70] sm:$0xff]
    %v55 = vld [vmem:[#allocation2 + $0x78] sm:$0xff]
    %v56 = vld [vmem:[#allocation2 + $0x80] sm:$0xff]
    %v57 = vld [vmem:[#allocation2 + $0x88] sm:$0xff]
    %v58 = vld [vmem:[#allocation2 + $0x90] sm:$0xff]
    %v59 = vld [vmem:[#allocation2 + $0x98] sm:$0xff]
    %v60 = vld [vmem:[#allocation2 + $0xa0] sm:$0xff]
    %v61 = vld [vmem:[#allocation2 + $0xa8] sm:$0xff]
    %v62 = vld [vmem:[#allocation2 + $0xb0] sm:$0xff]
    %v63 = vld [vmem:[#allocation2 + $0xb8] sm:$0xff]
    %v64 = vld [vmem:[#allocation2 + $0xc0] sm:$0xff]
    %v65 = vld [vmem:[#allocation2 + $0xc8] sm:$0xff]
    %v66 = vld [vmem:[#allocation2 + $0xd0] sm:$0xff]
    %v67 = vld [vmem:[#allocation2 + $0xd8] sm:$0xff]
    %v68 = vld [vmem:[#allocation2 + $0xe0] sm:$0xff]
    %v69 = vld [vmem:[#allocation2 + $0xe8] sm:$0xff]
    %v70 = vld [vmem:[#allocation2 + $0xf0] sm:$0xff]
    %v71 = vld [vmem:[#allocation2 + $0xf8] sm:$0xff]
    %v72 = vld [vmem:[#allocation2 + $0x100] sm:$0xff]
    %v73 = vld [vmem:[#allocation2 + $0x108] sm:$0xff]
    %v74 = vld [vmem:[#allocation2 + $0x110] sm:$0xff]
    %v75 = vld [vmem:[#allocation2 + $0x118] sm:$0xff]
    %v76 = vld [vmem:[#allocation2 + $0x120] sm:$0xff]
    %v77 = vld [vmem:[#allocation2 + $0x128] sm:$0xff]
    %v78 = vld [vmem:[#allocation2 + $0x130] sm:$0xff]
    %v79 = vld [vmem:[#allocation2 + $0x138] sm:$0xff]
    %v80 = vld [vmem:[#allocation2 + $0x140] sm:$0xff]
    %v81 = vld [vmem:[#allocation2 + $0x148] sm:$0xff]
    %v82 = vld [vmem:[#allocation2 + $0x150] sm:$0xff]
    %v83 = vld [vmem:[#allocation2 + $0x158] sm:$0xff]
    %v84 = vld [vmem:[#allocation2 + $0x160] sm:$0xff]
    %v85 = vld [vmem:[#allocation2 + $0x168] sm:$0xff]
    %v86 = vld [vmem:[#allocation2 + $0x170] sm:$0xff]
    %v87 = vld [vmem:[#allocation2 + $0x178] sm:$0xff]
    %v88 = vld [vmem:[#allocation2 + $0x180] sm:$0xff]
    %v89 = vld [vmem:[#allocation2 + $0x188] sm:$0xff]
    %v90 = vld [vmem:[#allocation2 + $0x190] sm:$0xff]
    %v91 = vld [vmem:[#allocation2 + $0x198] sm:$0xff]
    %v92 = vld [vmem:[#allocation2 + $0x1a0] sm:$0xff]
    %v93 = vld [vmem:[#allocation2 + $0x1a8] sm:$0xff]
    %v94 = vld [vmem:[#allocation2 + $0x1b0] sm:$0xff]
    %v95 = vld [vmem:[#allocation2 + $0x1b8] sm:$0xff]
    %v96 = vld [vmem:[#allocation2 + $0x1c0] sm:$0xff]
    %v97 = vld [vmem:[#allocation2 + $0x1c8] sm:$0xff]
    %v98 = vld [vmem:[#allocation2 + $0x1d0] sm:$0xff]
    %v99 = vld [vmem:[#allocation2 + $0x1d8] sm:$0xff]
    %v100 = vld [vmem:[#allocation2 + $0x1e0] sm:$0xff]
    %v101 = vld [vmem:[#allocation2 + $0x1e8] sm:$0xff]
    %v102 = vld [vmem:[#allocation2 + $0x1f0] sm:$0xff]
    %v103 = vld [vmem:[#allocation2 + $0x1f8] sm:$0xff]
    %v104 = vld [vmem:[%s1] sm:$0xff]
    %v105 = vld [vmem:[%s1 + $0x8] sm:$0xff]
    %v106 = vld [vmem:[%s1 + $0x10] sm:$0xff]
    %v107 = vld [vmem:[%s1 + $0x18] sm:$0xff]
    %v108 = vld [vmem:[%s1 + $0x20] sm:$0xff]
    %v109 = vld [vmem:[%s1 + $0x28] sm:$0xff]
    %v110 = vld [vmem:[%s1 + $0x30] sm:$0xff]
    %v111 = vld [vmem:[%s1 + $0x38] sm:$0xff]
    %v112 = vld [vmem:[%s1 + $0x40] sm:$0xff]
    %v113 = vld [vmem:[%s1 + $0x48] sm:$0xff]
    %v114 = vld [vmem:[%s1 + $0x50] sm:$0xff]
    %v115 = vld [vmem:[%s1 + $0x58] sm:$0xff]
    %v116 = vld [vmem:[%s1 + $0x60] sm:$0xff]
    %v117 = vld [vmem:[%s1 + $0x68] sm:$0xff]
    %v118 = vld [vmem:[%s1 + $0x70] sm:$0xff]
    %v119 = vld [vmem:[%s1 + $0x78] sm:$0xff]
    %v120 = vld [vmem:[%s1 + $0x80] sm:$0xff]
    %v121 = vld [vmem:[%s1 + $0x88] sm:$0xff]
    %v122 = vld [vmem:[%s1 + $0x90] sm:$0xff]
    %v123 = vld [vmem:[%s1 + $0x98] sm:$0xff]
    %v124 = vld [vmem:[%s1 + $0xa0] sm:$0xff]
    %v125 = vld [vmem:[%s1 + $0xa8] sm:$0xff]
    %v126 = vld [vmem:[%s1 + $0xb0] sm:$0xff]
    %v127 = vld [vmem:[%s1 + $0xb8] sm:$0xff]
    %v128 = vld [vmem:[%s1 + $0xc0] sm:$0xff]
    %v129 = vld [vmem:[%s1 + $0xc8] sm:$0xff]
    %v130 = vld [vmem:[%s1 + $0xd0] sm:$0xff]
    %v131 = vld [vmem:[%s1 + $0xd8] sm:$0xff]
    %v132 = vld [vmem:[%s1 + $0xe0] sm:$0xff]
    %v133 = vld [vmem:[%s1 + $0xe8] sm:$0xff]
    %v134 = vld [vmem:[%s1 + $0xf0] sm:$0xff]
    %v135 = vld [vmem:[%s1 + $0xf8] sm:$0xff]
    %v136 = vld [vmem:[#allocation4] sm:$0x1]
    %v138 = vlaneseq
    %v139 = vshrl.u32 %v138, 7
    %v140 = vsub.s32 0, %v139
    %v141 = vrot.slane %v136, %v140
    %143 = vmatprep.subr.mxu0 0.0
    %144 = vmatpush1.msra.mxu0 %v119
    %145 = vmatprep.subr.mxu0 0.0
    %146 = vmatpush1.msra.mxu0 %v118
    %147 = vmatprep.subr.mxu0 0.0
    %148 = vmatpush1.msra.mxu0 %v117
    %149 = vmatprep.subr.mxu0 0.0
    %150 = vmatpush1.msra.mxu0 %v116
    %151 = vmatprep.subr.mxu0 0.0
    %152 = vmatpush1.msra.mxu0 %v115
    %153 = vmatprep.subr.mxu0 0.0
    %154 = vmatpush1.msra.mxu0 %v114
    %155 = vmatprep.subr.mxu0 0.0
    %156 = vmatpush1.msra.mxu0 %v113
    %157 = vmatprep.subr.mxu0 0.0
    %158 = vmatpush1.msra.mxu0 %v112
    %159 = vmatprep.subr.mxu0 0.0
    %160 = vmatpush1.msra.mxu0 %v111
    %161 = vmatprep.subr.mxu0 0.0
    %162 = vmatpush1.msra.mxu0 %v110
    %163 = vmatprep.subr.mxu0 0.0
    %164 = vmatpush1.msra.mxu0 %v109
    %165 = vmatprep.subr.mxu0 0.0
    %166 = vmatpush1.msra.mxu0 %v108
    %167 = vmatprep.subr.mxu0 0.0
    %168 = vmatpush1.msra.mxu0 %v107
    %169 = vmatprep.subr.mxu0 0.0
    %170 = vmatpush1.msra.mxu0 %v106
    %171 = vmatprep.subr.mxu0 0.0
    %172 = vmatpush1.msra.mxu0 %v105
    %173 = vmatprep.subr.mxu0 0.0
    %174 = vmatpush1.msra.mxu0 %v104
    %175 = vmatprep.subr.mxu0 0.0
    %176 = vmatpush2.msra.mxu0 %v135
    %177 = vmatprep.subr.mxu0 0.0
    %178 = vmatpush2.msra.mxu0 %v134
    %179 = vmatprep.subr.mxu0 0.0
    %180 = vmatpush2.msra.mxu0 %v133
    %181 = vmatprep.subr.mxu0 0.0
    %182 = vmatpush2.msra.mxu0 %v132
    %183 = vmatprep.subr.mxu0 0.0
    %184 = vmatpush2.msra.mxu0 %v131
    %185 = vmatprep.subr.mxu0 0.0
    %186 = vmatpush2.msra.mxu0 %v130
    %187 = vmatprep.subr.mxu0 0.0
    %188 = vmatpush2.msra.mxu0 %v129
    %189 = vmatprep.subr.mxu0 0.0
    %190 = vmatpush2.msra.mxu0 %v128
    %191 = vmatprep.subr.mxu0 0.0
    %192 = vmatpush2.msra.mxu0 %v127
    %193 = vmatprep.subr.mxu0 0.0
    %194 = vmatpush2.msra.mxu0 %v126
    %195 = vmatprep.subr.mxu0 0.0
    %196 = vmatpush2.msra.mxu0 %v125
    %197 = vmatprep.subr.mxu0 0.0
    %198 = vmatpush2.msra.mxu0 %v124
    %199 = vmatprep.subr.mxu0 0.0
    %200 = vmatpush2.msra.mxu0 %v123
    %201 = vmatprep.subr.mxu0 0.0
    %202 = vmatpush2.msra.mxu0 %v122
    %203 = vmatprep.subr.mxu0 0.0
    %204 = vmatpush2.msra.mxu0 %v121
    %205 = vmatprep.subr.mxu0 0.0
    %206 = vmatpush2.msra.mxu0 %v120
    %207 = vmatprep.mubr.f32.mxu0 %v41
    %208 = vmatmul.mubr.f32.gmra.mxu0 %v40
    %v209 = vpop.f32.mrf.mxu0
    %v210 = vadd.f32 %v141, %v209
    %v211 = vpop.f32.mrf.mxu0
    %212 = vmatprep.mubr.f32.mxu0 %v43
    %213 = vmatmul.mubr.f32.gmra.mxu0 %v42
    %v214 = vpop.f32.mrf.mxu0
    %v215 = vadd.f32 %v141, %v214
    %v216 = vpop.f32.mrf.mxu0
    %217 = vmatprep.mubr.f32.mxu0 %v45
    %218 = vmatmul.mubr.f32.gmra.mxu0 %v44
    %v219 = vpop.f32.mrf.mxu0
    %v220 = vadd.f32 %v141, %v219
    %v221 = vpop.f32.mrf.mxu0
    %222 = vmatprep.mubr.f32.mxu0 %v47
    %223 = vmatmul.mubr.f32.gmra.mxu0 %v46
    %v224 = vpop.f32.mrf.mxu0
    %v225 = vadd.f32 %v141, %v224
    %v226 = vpop.f32.mrf.mxu0
    %227 = vmatprep.mubr.f32.mxu0 %v49
    %228 = vmatmul.mubr.f32.gmra.mxu0 %v48
    %v229 = vpop.f32.mrf.mxu0
    %v230 = vadd.f32 %v141, %v229
    %v231 = vpop.f32.mrf.mxu0
    %232 = vmatprep.mubr.f32.mxu0 %v51
    %233 = vmatmul.mubr.f32.gmra.mxu0 %v50
    %v234 = vpop.f32.mrf.mxu0
    %v235 = vadd.f32 %v141, %v234
    %v236 = vpop.f32.mrf.mxu0
    %237 = vmatprep.mubr.f32.mxu0 %v53
    %238 = vmatmul.mubr.f32.gmra.mxu0 %v52
    %v239 = vpop.f32.mrf.mxu0
    %v240 = vadd.f32 %v141, %v239
    %v241 = vpop.f32.mrf.mxu0
    %242 = vmatprep.mubr.f32.mxu0 %v55
    %243 = vmatmul.mubr.f32.gmra.mxu0 %v54
    %v244 = vpop.f32.mrf.mxu0
    %v245 = vadd.f32 %v141, %v244
    %v246 = vpop.f32.mrf.mxu0
    %247 = vmatprep.mubr.f32.mxu0 %v57
    %248 = vmatmul.mubr.f32.gmra.mxu0 %v56
    %v249 = vpop.f32.mrf.mxu0
    %v250 = vadd.f32 %v141, %v249
    %v251 = vpop.f32.mrf.mxu0
    %252 = vmatprep.mubr.f32.mxu0 %v59
    %253 = vmatmul.mubr.f32.gmra.mxu0 %v58
    %v254 = vpop.f32.mrf.mxu0
    %v255 = vadd.f32 %v141, %v254
    %v256 = vpop.f32.mrf.mxu0
    %257 = vmatprep.mubr.f32.mxu0 %v61
    %258 = vmatmul.mubr.f32.gmra.mxu0 %v60
    %v259 = vpop.f32.mrf.mxu0
    %v260 = vadd.f32 %v141, %v259
    %v261 = vpop.f32.mrf.mxu0
    %262 = vmatprep.mubr.f32.mxu0 %v63
    %263 = vmatmul.mubr.f32.gmra.mxu0 %v62
    %v264 = vpop.f32.mrf.mxu0
    %v265 = vadd.f32 %v141, %v264
    %v266 = vpop.f32.mrf.mxu0
    %267 = vmatprep.mubr.f32.mxu0 %v65
    %268 = vmatmul.mubr.f32.gmra.mxu0 %v64
    %v269 = vpop.f32.mrf.mxu0
    %v270 = vadd.f32 %v141, %v269
    %v271 = vpop.f32.mrf.mxu0
    %272 = vmatprep.mubr.f32.mxu0 %v67
    %273 = vmatmul.mubr.f32.gmra.mxu0 %v66
    %v274 = vpop.f32.mrf.mxu0
    %v275 = vadd.f32 %v141, %v274
    %v276 = vpop.f32.mrf.mxu0
    %277 = vmatprep.mubr.f32.mxu0 %v69
    %278 = vmatmul.mubr.f32.gmra.mxu0 %v68
    %v279 = vpop.f32.mrf.mxu0
    %v280 = vadd.f32 %v141, %v279
    %v281 = vpop.f32.mrf.mxu0
    %282 = vmatprep.mubr.f32.mxu0 %v71
    %283 = vmatmul.mubr.f32.gmra.mxu0 %v70
    %v284 = vpop.f32.mrf.mxu0
    %v285 = vadd.f32 %v141, %v284
    %v286 = vpop.f32.mrf.mxu0
    %287 = vmatprep.mubr.f32.mxu0 %v73
    %288 = vmatmul.mubr.f32.gmra.mxu0 %v72
    %v289 = vpop.f32.mrf.mxu0
    %v290 = vadd.f32 %v141, %v289
    %v291 = vpop.f32.mrf.mxu0
    %292 = vmatprep.mubr.f32.mxu0 %v75
    %293 = vmatmul.mubr.f32.gmra.mxu0 %v74
    %v294 = vpop.f32.mrf.mxu0
    %v295 = vadd.f32 %v141, %v294
    %v296 = vpop.f32.mrf.mxu0
    %297 = vmatprep.mubr.f32.mxu0 %v77
    %298 = vmatmul.mubr.f32.gmra.mxu0 %v76
    %v299 = vpop.f32.mrf.mxu0
    %v300 = vadd.f32 %v141, %v299
    %v301 = vpop.f32.mrf.mxu0
    %302 = vmatprep.mubr.f32.mxu0 %v79
    %303 = vmatmul.mubr.f32.gmra.mxu0 %v78
    %v304 = vpop.f32.mrf.mxu0
    %v305 = vadd.f32 %v141, %v304
    %v306 = vpop.f32.mrf.mxu0
    %307 = vmatprep.mubr.f32.mxu0 %v81
    %308 = vmatmul.mubr.f32.gmra.mxu0 %v80
    %v309 = vpop.f32.mrf.mxu0
    %v310 = vadd.f32 %v141, %v309
    %v311 = vpop.f32.mrf.mxu0
    %312 = vmatprep.mubr.f32.mxu0 %v83
    %313 = vmatmul.mubr.f32.gmra.mxu0 %v82
    %v314 = vpop.f32.mrf.mxu0
    %v315 = vadd.f32 %v141, %v314
    %v316 = vpop.f32.mrf.mxu0
    %317 = vmatprep.mubr.f32.mxu0 %v85
    %318 = vmatmul.mubr.f32.gmra.mxu0 %v84
    %v319 = vpop.f32.mrf.mxu0
    %v320 = vadd.f32 %v141, %v319
    %v321 = vpop.f32.mrf.mxu0
    %322 = vmatprep.mubr.f32.mxu0 %v87
    %323 = vmatmul.mubr.f32.gmra.mxu0 %v86
    %v324 = vpop.f32.mrf.mxu0
    %v325 = vadd.f32 %v141, %v324
    %v326 = vpop.f32.mrf.mxu0
    %327 = vmatprep.mubr.f32.mxu0 %v89
    %328 = vmatmul.mubr.f32.gmra.mxu0 %v88
    %v329 = vpop.f32.mrf.mxu0
    %v330 = vadd.f32 %v141, %v329
    %v331 = vpop.f32.mrf.mxu0
    %332 = vmatprep.mubr.f32.mxu0 %v91
    %333 = vmatmul.mubr.f32.gmra.mxu0 %v90
    %v334 = vpop.f32.mrf.mxu0
    %v335 = vadd.f32 %v141, %v334
    %v336 = vpop.f32.mrf.mxu0
    %337 = vmatprep.mubr.f32.mxu0 %v93
    %338 = vmatmul.mubr.f32.gmra.mxu0 %v92
    %v339 = vpop.f32.mrf.mxu0
    %v340 = vadd.f32 %v141, %v339
    %v341 = vpop.f32.mrf.mxu0
    %342 = vmatprep.mubr.f32.mxu0 %v95
    %343 = vmatmul.mubr.f32.gmra.mxu0 %v94
    %v344 = vpop.f32.mrf.mxu0
    %v345 = vadd.f32 %v141, %v344
    %v346 = vpop.f32.mrf.mxu0
    %347 = vmatprep.mubr.f32.mxu0 %v97
    %348 = vmatmul.mubr.f32.gmra.mxu0 %v96
    %v349 = vpop.f32.mrf.mxu0
    %v350 = vadd.f32 %v141, %v349
    %v351 = vpop.f32.mrf.mxu0
    %352 = vmatprep.mubr.f32.mxu0 %v99
    %353 = vmatmul.mubr.f32.gmra.mxu0 %v98
    %v354 = vpop.f32.mrf.mxu0
    %v355 = vadd.f32 %v141, %v354
    %v356 = vpop.f32.mrf.mxu0
    %357 = vmatprep.mubr.f32.mxu0 %v101
    %358 = vmatmul.mubr.f32.gmra.mxu0 %v100
    %v359 = vpop.f32.mrf.mxu0
    %v360 = vadd.f32 %v141, %v359
    %v361 = vpop.f32.mrf.mxu0
    %362 = vmatprep.mubr.f32.mxu0 %v103
    %363 = vmatmul.mubr.f32.gmra.mxu0 %v102
    %v364 = vpop.f32.mrf.mxu0
    %v365 = vadd.f32 %v141, %v364
    %v366 = vpop.f32.mrf.mxu0
    %367 = vdwg.mxu0
    %vm368 = vcmask 31744
    %v369 = vsel %vm368, %v210, -inf
    %370 = vmax.xlane.f32.xlu0 %v369
    %v371 = vpop.xlane.xlu0 %370
    %v372 = vsel %vm368, %v215, -inf
    %373 = vmax.xlane.f32.xlu0 %v372
    %v374 = vpop.xlane.xlu0 %373
    %v375 = vsel %vm368, %v220, -inf
    %376 = vmax.xlane.f32.xlu0 %v375
    %v377 = vpop.xlane.xlu0 %376
    %v378 = vsel %vm368, %v225, -inf
    %379 = vmax.xlane.f32.xlu0 %v378
    %v380 = vpop.xlane.xlu0 %379
    %v381 = vsel %vm368, %v230, -inf
    %382 = vmax.xlane.f32.xlu0 %v381
    %v383 = vpop.xlane.xlu0 %382
    %v384 = vsel %vm368, %v235, -inf
    %385 = vmax.xlane.f32.xlu0 %v384
    %v386 = vpop.xlane.xlu0 %385
    %v387 = vsel %vm368, %v240, -inf
    %388 = vmax.xlane.f32.xlu0 %v387
    %v389 = vpop.xlane.xlu0 %388
    %v390 = vsel %vm368, %v245, -inf
    %391 = vmax.xlane.f32.xlu0 %v390
    %v392 = vpop.xlane.xlu0 %391
    %v393 = vsel %vm368, %v250, -inf
    %394 = vmax.xlane.f32.xlu0 %v393
    %v395 = vpop.xlane.xlu0 %394
    %v396 = vsel %vm368, %v255, -inf
    %397 = vmax.xlane.f32.xlu0 %v396
    %v398 = vpop.xlane.xlu0 %397
    %v399 = vsel %vm368, %v260, -inf
    %400 = vmax.xlane.f32.xlu0 %v399
    %v401 = vpop.xlane.xlu0 %400
    %v402 = vsel %vm368, %v265, -inf
    %403 = vmax.xlane.f32.xlu0 %v402
    %v404 = vpop.xlane.xlu0 %403
    %v405 = vsel %vm368, %v270, -inf
    %406 = vmax.xlane.f32.xlu0 %v405
    %v407 = vpop.xlane.xlu0 %406
    %v408 = vsel %vm368, %v275, -inf
    %409 = vmax.xlane.f32.xlu0 %v408
    %v410 = vpop.xlane.xlu0 %409
    %v411 = vsel %vm368, %v280, -inf
    %412 = vmax.xlane.f32.xlu0 %v411
    %v413 = vpop.xlane.xlu0 %412
    %v414 = vsel %vm368, %v285, -inf
    %415 = vmax.xlane.f32.xlu0 %v414
    %v416 = vpop.xlane.xlu0 %415
    %v417 = vsel %vm368, %v290, -inf
    %418 = vmax.xlane.f32.xlu0 %v417
    %v419 = vpop.xlane.xlu0 %418
    %v420 = vsel %vm368, %v295, -inf
    %421 = vmax.xlane.f32.xlu0 %v420
    %v422 = vpop.xlane.xlu0 %421
    %v423 = vsel %vm368, %v300, -inf
    %424 = vmax.xlane.f32.xlu0 %v423
    %v425 = vpop.xlane.xlu0 %424
    %v426 = vsel %vm368, %v305, -inf
    %427 = vmax.xlane.f32.xlu0 %v426
    %v428 = vpop.xlane.xlu0 %427
    %v429 = vsel %vm368, %v310, -inf
    %430 = vmax.xlane.f32.xlu0 %v429
    %v431 = vpop.xlane.xlu0 %430
    %v432 = vsel %vm368, %v315, -inf
    %433 = vmax.xlane.f32.xlu0 %v432
    %v434 = vpop.xlane.xlu0 %433
    %v435 = vsel %vm368, %v320, -inf
    %436 = vmax.xlane.f32.xlu0 %v435
    %v437 = vpop.xlane.xlu0 %436
    %v438 = vsel %vm368, %v325, -inf
    %439 = vmax.xlane.f32.xlu0 %v438
    %v440 = vpop.xlane.xlu0 %439
    %v441 = vsel %vm368, %v330, -inf
    %442 = vmax.xlane.f32.xlu0 %v441
    %v443 = vpop.xlane.xlu0 %442
    %v444 = vsel %vm368, %v335, -inf
    %445 = vmax.xlane.f32.xlu0 %v444
    %v446 = vpop.xlane.xlu0 %445
    %v447 = vsel %vm368, %v340, -inf
    %448 = vmax.xlane.f32.xlu0 %v447
    %v449 = vpop.xlane.xlu0 %448
    %v450 = vsel %vm368, %v345, -inf
    %451 = vmax.xlane.f32.xlu0 %v450
    %v452 = vpop.xlane.xlu0 %451
    %v453 = vsel %vm368, %v350, -inf
    %454 = vmax.xlane.f32.xlu0 %v453
    %v455 = vpop.xlane.xlu0 %454
    %v456 = vsel %vm368, %v355, -inf
    %457 = vmax.xlane.f32.xlu0 %v456
    %v458 = vpop.xlane.xlu0 %457
    %v459 = vsel %vm368, %v360, -inf
    %460 = vmax.xlane.f32.xlu0 %v459
    %v461 = vpop.xlane.xlu0 %460
    %v462 = vsel %vm368, %v365, -inf
    %463 = vmax.xlane.f32.xlu0 %v462
    %v464 = vpop.xlane.xlu0 %463
    %v465 = vsub.f32 %v210, %v371
    %v466 = vsub.f32 %v215, %v374
    %v467 = vsub.f32 %v220, %v377
    %v468 = vsub.f32 %v225, %v380
    %v469 = vsub.f32 %v230, %v383
    %v470 = vsub.f32 %v235, %v386
    %v471 = vsub.f32 %v240, %v389
    %v472 = vsub.f32 %v245, %v392
    %v473 = vsub.f32 %v250, %v395
    %v474 = vsub.f32 %v255, %v398
    %v475 = vsub.f32 %v260, %v401
    %v476 = vsub.f32 %v265, %v404
    %v477 = vsub.f32 %v270, %v407
    %v478 = vsub.f32 %v275, %v410
    %v479 = vsub.f32 %v280, %v413
    %v480 = vsub.f32 %v285, %v416
    %v481 = vsub.f32 %v290, %v419
    %v482 = vsub.f32 %v295, %v422
    %v483 = vsub.f32 %v300, %v425
    %v484 = vsub.f32 %v305, %v428
    %v485 = vsub.f32 %v310, %v431
    %v486 = vsub.f32 %v315, %v434
    %v487 = vsub.f32 %v320, %v437
    %v488 = vsub.f32 %v325, %v440
    %v489 = vsub.f32 %v330, %v443
    %v490 = vsub.f32 %v335, %v446
    %v491 = vsub.f32 %v340, %v449
    %v492 = vsub.f32 %v345, %v452
    %v493 = vsub.f32 %v350, %v455
    %v494 = vsub.f32 %v355, %v458
    %v495 = vsub.f32 %v360, %v461
    %v496 = vsub.f32 %v365, %v464
    %v497 = vmul.f32 %v465, 1.442695
    %v498 = vpow.pop %v497
    %v499 = vmul.f32 %v466, 1.442695
    %v500 = vpow.pop %v499
    %v501 = vmul.f32 %v467, 1.442695
    %v502 = vpow.pop %v501
    %v503 = vmul.f32 %v468, 1.442695
    %v504 = vpow.pop %v503
    %v505 = vmul.f32 %v469, 1.442695
    %v506 = vpow.pop %v505
    %v507 = vmul.f32 %v470, 1.442695
    %v508 = vpow.pop %v507
    %v509 = vmul.f32 %v471, 1.442695
    %v510 = vpow.pop %v509
    %v511 = vmul.f32 %v472, 1.442695
    %v512 = vpow.pop %v511
    %v513 = vmul.f32 %v473, 1.442695
    %v514 = vpow.pop %v513
    %v515 = vmul.f32 %v474, 1.442695
    %v516 = vpow.pop %v515
    %v517 = vmul.f32 %v475, 1.442695
    %v518 = vpow.pop %v517
    %v519 = vmul.f32 %v476, 1.442695
    %v520 = vpow.pop %v519
    %v521 = vmul.f32 %v477, 1.442695
    %v522 = vpow.pop %v521
    %v523 = vmul.f32 %v478, 1.442695
    %v524 = vpow.pop %v523
    %v525 = vmul.f32 %v479, 1.442695
    %v526 = vpow.pop %v525
    %v527 = vmul.f32 %v480, 1.442695
    %v528 = vpow.pop %v527
    %v529 = vmul.f32 %v481, 1.442695
    %v530 = vpow.pop %v529
    %v531 = vmul.f32 %v482, 1.442695
    %v532 = vpow.pop %v531
    %v533 = vmul.f32 %v483, 1.442695
    %v534 = vpow.pop %v533
    %v535 = vmul.f32 %v484, 1.442695
    %v536 = vpow.pop %v535
    %v537 = vmul.f32 %v485, 1.442695
    %v538 = vpow.pop %v537
    %v539 = vmul.f32 %v486, 1.442695
    %v540 = vpow.pop %v539
    %v541 = vmul.f32 %v487, 1.442695
    %v542 = vpow.pop %v541
    %v543 = vmul.f32 %v488, 1.442695
    %v544 = vpow.pop %v543
    %v545 = vmul.f32 %v489, 1.442695
    %v546 = vpow.pop %v545
    %v547 = vmul.f32 %v490, 1.442695
    %v548 = vpow.pop %v547
    %v549 = vmul.f32 %v491, 1.442695
    %v550 = vpow.pop %v549
    %v551 = vmul.f32 %v492, 1.442695
    %v552 = vpow.pop %v551
    %v553 = vmul.f32 %v493, 1.442695
    %v554 = vpow.pop %v553
    %v555 = vmul.f32 %v494, 1.442695
    %v556 = vpow.pop %v555
    %v557 = vmul.f32 %v495, 1.442695
    %v558 = vpow.pop %v557
    %v559 = vmul.f32 %v496, 1.442695
    %v560 = vpow.pop %v559
    %v561 = vsel %vm368, %v498, 0.0
    %562 = vadd.xlane.f32.xlu0 %v561
    %v563 = vpop.xlane.xlu0 %562
    %v564 = vsel %vm368, %v500, 0.0
    %565 = vadd.xlane.f32.xlu0 %v564
    %v566 = vpop.xlane.xlu0 %565
    %v567 = vsel %vm368, %v502, 0.0
    %568 = vadd.xlane.f32.xlu0 %v567
    %v569 = vpop.xlane.xlu0 %568
    %v570 = vsel %vm368, %v504, 0.0
    %571 = vadd.xlane.f32.xlu0 %v570
    %v572 = vpop.xlane.xlu0 %571
    %v573 = vsel %vm368, %v506, 0.0
    %574 = vadd.xlane.f32.xlu0 %v573
    %v575 = vpop.xlane.xlu0 %574
    %v576 = vsel %vm368, %v508, 0.0
    %577 = vadd.xlane.f32.xlu0 %v576
    %v578 = vpop.xlane.xlu0 %577
    %v579 = vsel %vm368, %v510, 0.0
    %580 = vadd.xlane.f32.xlu0 %v579
    %v581 = vpop.xlane.xlu0 %580
    %v582 = vsel %vm368, %v512, 0.0
    %583 = vadd.xlane.f32.xlu0 %v582
    %v584 = vpop.xlane.xlu0 %583
    %v585 = vsel %vm368, %v514, 0.0
    %586 = vadd.xlane.f32.xlu0 %v585
    %v587 = vpop.xlane.xlu0 %586
    %v588 = vsel %vm368, %v516, 0.0
    %589 = vadd.xlane.f32.xlu0 %v588
    %v590 = vpop.xlane.xlu0 %589
    %v591 = vsel %vm368, %v518, 0.0
    %592 = vadd.xlane.f32.xlu0 %v591
    %v593 = vpop.xlane.xlu0 %592
    %v594 = vsel %vm368, %v520, 0.0
    %595 = vadd.xlane.f32.xlu0 %v594
    %v596 = vpop.xlane.xlu0 %595
    %v597 = vsel %vm368, %v522, 0.0
    %598 = vadd.xlane.f32.xlu0 %v597
    %v599 = vpop.xlane.xlu0 %598
    %v600 = vsel %vm368, %v524, 0.0
    %601 = vadd.xlane.f32.xlu0 %v600
    %v602 = vpop.xlane.xlu0 %601
    %v603 = vsel %vm368, %v526, 0.0
    %604 = vadd.xlane.f32.xlu0 %v603
    %v605 = vpop.xlane.xlu0 %604
    %v606 = vsel %vm368, %v528, 0.0
    %607 = vadd.xlane.f32.xlu0 %v606
    %v608 = vpop.xlane.xlu0 %607
    %v609 = vsel %vm368, %v530, 0.0
    %610 = vadd.xlane.f32.xlu0 %v609
    %v611 = vpop.xlane.xlu0 %610
    %v612 = vsel %vm368, %v532, 0.0
    %613 = vadd.xlane.f32.xlu0 %v612
    %v614 = vpop.xlane.xlu0 %613
    %v615 = vsel %vm368, %v534, 0.0
    %616 = vadd.xlane.f32.xlu0 %v615
    %v617 = vpop.xlane.xlu0 %616
    %v618 = vsel %vm368, %v536, 0.0
    %619 = vadd.xlane.f32.xlu0 %v618
    %v620 = vpop.xlane.xlu0 %619
    %v621 = vsel %vm368, %v538, 0.0
    %622 = vadd.xlane.f32.xlu0 %v621
    %v623 = vpop.xlane.xlu0 %622
    %v624 = vsel %vm368, %v540, 0.0
    %625 = vadd.xlane.f32.xlu0 %v624
    %v626 = vpop.xlane.xlu0 %625
    %v627 = vsel %vm368, %v542, 0.0
    %628 = vadd.xlane.f32.xlu0 %v627
    %v629 = vpop.xlane.xlu0 %628
    %v630 = vsel %vm368, %v544, 0.0
    %631 = vadd.xlane.f32.xlu0 %v630
    %v632 = vpop.xlane.xlu0 %631
    %v633 = vsel %vm368, %v546, 0.0
    %634 = vadd.xlane.f32.xlu0 %v633
    %v635 = vpop.xlane.xlu0 %634
    %v636 = vsel %vm368, %v548, 0.0
    %637 = vadd.xlane.f32.xlu0 %v636
    %v638 = vpop.xlane.xlu0 %637
    %v639 = vsel %vm368, %v550, 0.0
    %640 = vadd.xlane.f32.xlu0 %v639
    %v641 = vpop.xlane.xlu0 %640
    %v642 = vsel %vm368, %v552, 0.0
    %643 = vadd.xlane.f32.xlu0 %v642
    %v644 = vpop.xlane.xlu0 %643
    %v645 = vsel %vm368, %v554, 0.0
    %646 = vadd.xlane.f32.xlu0 %v645
    %v647 = vpop.xlane.xlu0 %646
    %v648 = vsel %vm368, %v556, 0.0
    %649 = vadd.xlane.f32.xlu0 %v648
    %v650 = vpop.xlane.xlu0 %649
    %v651 = vsel %vm368, %v558, 0.0
    %652 = vadd.xlane.f32.xlu0 %v651
    %v653 = vpop.xlane.xlu0 %652
    %v654 = vsel %vm368, %v560, 0.0
    %655 = vadd.xlane.f32.xlu0 %v654
    %v656 = vpop.xlane.xlu0 %655
    %v657 = vrcp.pop %v563
    %v658 = vmul.f32 %v498, %v657
    %v659 = vrcp.pop %v566
    %v660 = vmul.f32 %v500, %v659
    %v661 = vrcp.pop %v569
    %v662 = vmul.f32 %v502, %v661
    %v663 = vrcp.pop %v572
    %v664 = vmul.f32 %v504, %v663
    %v665 = vrcp.pop %v575
    %v666 = vmul.f32 %v506, %v665
    %v667 = vrcp.pop %v578
    %v668 = vmul.f32 %v508, %v667
    %v669 = vrcp.pop %v581
    %v670 = vmul.f32 %v510, %v669
    %v671 = vrcp.pop %v584
    %v672 = vmul.f32 %v512, %v671
    %v673 = vrcp.pop %v587
    %v674 = vmul.f32 %v514, %v673
    %v675 = vrcp.pop %v590
    %v676 = vmul.f32 %v516, %v675
    %v677 = vrcp.pop %v593
    %v678 = vmul.f32 %v518, %v677
    %v679 = vrcp.pop %v596
    %v680 = vmul.f32 %v520, %v679
    %v681 = vrcp.pop %v599
    %v682 = vmul.f32 %v522, %v681
    %v683 = vrcp.pop %v602
    %v684 = vmul.f32 %v524, %v683
    %v685 = vrcp.pop %v605
    %v686 = vmul.f32 %v526, %v685
    %v687 = vrcp.pop %v608
    %v688 = vmul.f32 %v528, %v687
    %v689 = vrcp.pop %v611
    %v690 = vmul.f32 %v530, %v689
    %v691 = vrcp.pop %v614
    %v692 = vmul.f32 %v532, %v691
    %v693 = vrcp.pop %v617
    %v694 = vmul.f32 %v534, %v693
    %v695 = vrcp.pop %v620
    %v696 = vmul.f32 %v536, %v695
    %v697 = vrcp.pop %v623
    %v698 = vmul.f32 %v538, %v697
    %v699 = vrcp.pop %v626
    %v700 = vmul.f32 %v540, %v699
    %v701 = vrcp.pop %v629
    %v702 = vmul.f32 %v542, %v701
    %v703 = vrcp.pop %v632
    %v704 = vmul.f32 %v544, %v703
    %v705 = vrcp.pop %v635
    %v706 = vmul.f32 %v546, %v705
    %v707 = vrcp.pop %v638
    %v708 = vmul.f32 %v548, %v707
    %v709 = vrcp.pop %v641
    %v710 = vmul.f32 %v550, %v709
    %v711 = vrcp.pop %v644
    %v712 = vmul.f32 %v552, %v711
    %v713 = vrcp.pop %v647
    %v714 = vmul.f32 %v554, %v713
    %v715 = vrcp.pop %v650
    %v716 = vmul.f32 %v556, %v715
    %v717 = vrcp.pop %v653
    %v718 = vmul.f32 %v558, %v717
    %v719 = vrcp.pop %v656
    %v720 = vmul.f32 %v560, %v719
    %721 = vst.msk [vmem:[%s3] sm:$0xff] %vm368, %v658
    %722 = vst.msk [vmem:[%s3 + $0x8] sm:$0xff] %vm368, %v660
    %723 = vst.msk [vmem:[%s3 + $0x10] sm:$0xff] %vm368, %v662
    %724 = vst.msk [vmem:[%s3 + $0x18] sm:$0xff] %vm368, %v664
    %725 = vst.msk [vmem:[%s3 + $0x20] sm:$0xff] %vm368, %v666
    %726 = vst.msk [vmem:[%s3 + $0x28] sm:$0xff] %vm368, %v668
    %727 = vst.msk [vmem:[%s3 + $0x30] sm:$0xff] %vm368, %v670
    %728 = vst.msk [vmem:[%s3 + $0x38] sm:$0xff] %vm368, %v672
    %729 = vst.msk [vmem:[%s3 + $0x40] sm:$0xff] %vm368, %v674
    %730 = vst.msk [vmem:[%s3 + $0x48] sm:$0xff] %vm368, %v676
    %731 = vst.msk [vmem:[%s3 + $0x50] sm:$0xff] %vm368, %v678
    %732 = vst.msk [vmem:[%s3 + $0x58] sm:$0xff] %vm368, %v680
    %733 = vst.msk [vmem:[%s3 + $0x60] sm:$0xff] %vm368, %v682
    %734 = vst.msk [vmem:[%s3 + $0x68] sm:$0xff] %vm368, %v684
    %735 = vst.msk [vmem:[%s3 + $0x70] sm:$0xff] %vm368, %v686
    %736 = vst.msk [vmem:[%s3 + $0x78] sm:$0xff] %vm368, %v688
    %737 = vst.msk [vmem:[%s3 + $0x80] sm:$0xff] %vm368, %v690
    %738 = vst.msk [vmem:[%s3 + $0x88] sm:$0xff] %vm368, %v692
    %739 = vst.msk [vmem:[%s3 + $0x90] sm:$0xff] %vm368, %v694
    %740 = vst.msk [vmem:[%s3 + $0x98] sm:$0xff] %vm368, %v696
    %741 = vst.msk [vmem:[%s3 + $0xa0] sm:$0xff] %vm368, %v698
    %742 = vst.msk [vmem:[%s3 + $0xa8] sm:$0xff] %vm368, %v700
    %743 = vst.msk [vmem:[%s3 + $0xb0] sm:$0xff] %vm368, %v702
    %744 = vst.msk [vmem:[%s3 + $0xb8] sm:$0xff] %vm368, %v704
    %745 = vst.msk [vmem:[%s3 + $0xc0] sm:$0xff] %vm368, %v706
    %746 = vst.msk [vmem:[%s3 + $0xc8] sm:$0xff] %vm368, %v708
    %747 = vst.msk [vmem:[%s3 + $0xd0] sm:$0xff] %vm368, %v710
    %748 = vst.msk [vmem:[%s3 + $0xd8] sm:$0xff] %vm368, %v712
    %749 = vst.msk [vmem:[%s3 + $0xe0] sm:$0xff] %vm368, %v714
    %750 = vst.msk [vmem:[%s3 + $0xe8] sm:$0xff] %vm368, %v716
    %751 = vst.msk [vmem:[%s3 + $0xf0] sm:$0xff] %vm368, %v718
    %752 = vst.msk [vmem:[%s3 + $0xf8] sm:$0xff] %vm368, %v720
    // Predicated region
    $region22: #{moe_layer_forward.2} parent=1 // pred_check
      _
    $region23: #{moe_layer_forward.2} parent=1 // pred_check_branch
      %754 = sbr.rel (0) target = $region25
    $region24: #{moe_layer_forward.2} parent=1 // pred_region
      _
    $region25: #{moe_layer_forward.2} parent=1 // pred_fallthru
      _
    // Predicated region
    $region26: #{moe_layer_forward.2} parent=1 // pred_check
      _
    $region27: #{moe_layer_forward.2} parent=1 // pred_check_branch
      %756 = sbr.rel (0) target = $region29
    $region28: #{moe_layer_forward.2} parent=1 // pred_region
      _
    $region29: #{moe_layer_forward.2} parent=1 // pred_fallthru
      _
    %757 = vsyncpa [#allocation3], 1
    %758 = vsyncpa [#allocation5], 1

// kernel: moe_layer_forward.3
$region0: #{moe_layer_forward.3}
  #allocation0 [shape = 'u32[]', space=smem, size = 0x4, offset = 0x4, fixed_abs, tag = 'smem constant byte address 0x4 - core index']
  #allocation1 [shape = 'u32[144,128]{1,0:T(1,128)}', space=vmem, size = 0x12000, scoped, tag = 'internal scratch']
  #allocation2 [shape = 'f32[128,256]{1,0:T(8,128)}', space=vmem, size = 0x20000, scoped, tag = 'scratch operand']
  %s0 = inlined_call_operand.vmem [shape: bf16[256,256], index: 0, kind: input, shape index: {}]
  %s1 = inlined_call_operand.hbm [shape: bf16[4,256,2048], index: 1, kind: input, shape index: {}]
  %s2 = inlined_call_operand.vmem [shape: bf16[4,1024,256], index: 2, kind: input, shape index: {}]
  %s3 = inlined_call_operand.vmem [shape: f32[4,256,1], index: 3, kind: input, shape index: {}]
  %s4 = inlined_call_operand.hbm [shape: f32[256,256], index: 4, kind: output, shape index: {}]
  %s5 = sld [smem:[#allocation0]]
  $region61: #{moe_layer_forward.3} parent=0
    _
  %s7 = ssub.s32 1, %s5
  %s8 = scalar_select 0, %s7, %s5
  $region1: #{moe_layer_forward.3} parent=0
    #allocation3 [shape = 'u8[2097152]{0}', space=vmem, size = 0x200000, scoped, tag = 'input window, operand 1']
    #allocation4 [shape = 's32[2]{0}', space=sflag, size = 0x8, scoped, tag = 'scoped memory for moe_layer_forward.3']
    #allocation5 [shape = 's32[2]{0}', space=sflag, size = 0x8, scoped, tag = 'scoped memory for moe_layer_forward.3']
    #allocation6 [shape = 'u8[262144]{0}', space=vmem, size = 0x40000, scoped, tag = 'output window, operand 0']
    %9 = vsyncpa [#allocation4], 0
    %s10 = scalar_lea.sflag [#allocation4], 1
    %11 = vsyncpa %s10, 0
    %12 = vsyncpa [#allocation5], 0
    %s13 = scalar_lea.sflag [#allocation5], 1
    %14 = vsyncpa %s13, 0
    loop: start=0, step=1, limit=10
    $region2: #{moe_layer_forward.3} parent=1 // loop_pre_header
      _
    $region3: #{moe_layer_forward.3} parent=1 // loop_header
      %s16 = sphi 0, %s20
      %p17 = scmp.ge.s32.totalorder %s16, 10
      %s23 = sphi 0, %s42
      %s24 = sphi 0, %s38
      %s25 = sphi 0, %s34
      %s26 = sphi 0, %s23
      %s27 = sphi 0, %s24
      %s28 = sphi 0, %s25
      %s29 = sphi 0, %s26
      %s30 = sphi 0, %s27
      %s31 = sphi 0, %s28
      %s45 = sphi 0, %s47
      %s48 = sphi 0, %s45
      %s49 = sphi 0, %s48
      %s65 = sphi 0, %s49
      %s73 = sphi 0, %s75
      %s76 = sphi 0, %s73
      %s77 = sphi 0, %s76
      %s93 = sphi 0, %s77
      %s101 = sphi 0, %s103
      %s104 = sphi 0, %s101
      %s105 = sphi 0, %s104
      %s121 = sphi 0, %s105
      %s129 = sphi 0, %s131
      %s132 = sphi 0, %s129
      %s133 = sphi 0, %s132
      %s149 = sphi 0, %s133
      %s155 = sphi 0, %s157
      %s158 = sphi 0, %s155
      %s159 = sphi 0, %s158
      %s175 = sphi 0, %s159
    $region4: #{moe_layer_forward.3} parent=1 // loop_header_branch
      %19 = sbr.rel (%p17) target = $region8
    $region5: #{moe_layer_forward.3} parent=1 // loop_body
      %s21 = ssub.s32 %s16, 1
      %s22 = ssub.s32 %s16, 2
      %s32 = sadd.s32 1, %s25
      %p33 = scmp.ge.s32.totalorder %s32, 1
      %s34 = scalar_select %p33, 0, %s32
      %s35 = sadd.s32 1, %s24
      %s36 = scalar_select %p33, %s35, %s24
      %p37 = scmp.ge.s32.totalorder %s36, 4
      %s38 = scalar_select %p37, 0, %s36
      %s39 = sadd.s32 1, %s23
      %s40 = scalar_select %p37, %s39, %s23
      %p41 = scmp.ge.s32.totalorder %s40, 2
      %s42 = scalar_select %p41, 0, %s40
      %s43 = ssub.s32 %s23, %s42
      %p44 = scmp.eq.s32.totalorder %s43, 0
      %s46 = sadd.s32 %s45, 1
      %s47 = scalar_select %p44, %s45, %s46
      %p50 = pneg %p44
      %p51 = scmp.eq.s32.totalorder %s16, 7
      %p52 = por %p50, %p51
      %p53 = scmp.ne.s32.totalorder %s45, %s48
      %p54 = scmp.eq.s32.totalorder %s16, 0
      %p55 = por %p53, %p54
      %p56 = scmp.ne.s32.totalorder %s45, %s48
      %p57 = scmp.eq.s32.totalorder %s21, 7
      %p58 = por %p56, %p57
      %p59 = scmp.ne.s32.totalorder %s48, %s49
      %p60 = scmp.eq.s32.totalorder %s21, 0
      %p61 = por %p59, %p60
      %p62 = scmp.ne.s32.totalorder %s48, %s49
      %p63 = scmp.eq.s32.totalorder %s22, 7
      %p64 = por %p62, %p63
      %p66 = scmp.ne.s32.totalorder %s49, %s65
      %p67 = scmp.eq.s32.totalorder %s22, 0
      %p68 = por %p66, %p67
      %s69 = ssub.s32 %s24, %s38
      %s70 = ssub.s32 %s25, %s34
      %s71 = sor.u32 %s69, %s70
      %p72 = scmp.eq.s32.totalorder %s71, 0
      %s74 = sadd.s32 %s73, 1
      %s75 = scalar_select %p72, %s73, %s74
      %p78 = pneg %p72
      %p79 = scmp.eq.s32.totalorder %s16, 7
      %p80 = por %p78, %p79
      %p81 = scmp.ne.s32.totalorder %s73, %s76
      %p82 = scmp.eq.s32.totalorder %s16, 0
      %p83 = por %p81, %p82
      %p84 = scmp.ne.s32.totalorder %s73, %s76
      %p85 = scmp.eq.s32.totalorder %s21, 7
      %p86 = por %p84, %p85
      %p87 = scmp.ne.s32.totalorder %s76, %s77
      %p88 = scmp.eq.s32.totalorder %s21, 0
      %p89 = por %p87, %p88
      %p90 = scmp.ne.s32.totalorder %s76, %s77
      %p91 = scmp.eq.s32.totalorder %s22, 7
      %p92 = por %p90, %p91
      %p94 = scmp.ne.s32.totalorder %s77, %s93
      %p95 = scmp.eq.s32.totalorder %s22, 0
      %p96 = por %p94, %p95
      %s97 = ssub.s32 %s24, %s38
      %s98 = ssub.s32 %s25, %s34
      %s99 = sor.u32 %s97, %s98
      %p100 = scmp.eq.s32.totalorder %s99, 0
      %s102 = sadd.s32 %s101, 1
      %s103 = scalar_select %p100, %s101, %s102
      %p106 = pneg %p100
      %p107 = scmp.eq.s32.totalorder %s16, 7
      %p108 = por %p106, %p107
      %p109 = scmp.ne.s32.totalorder %s101, %s104
      %p110 = scmp.eq.s32.totalorder %s16, 0
      %p111 = por %p109, %p110
      %p112 = scmp.ne.s32.totalorder %s101, %s104
      %p113 = scmp.eq.s32.totalorder %s21, 7
      %p114 = por %p112, %p113
      %p115 = scmp.ne.s32.totalorder %s104, %s105
      %p116 = scmp.eq.s32.totalorder %s21, 0
      %p117 = por %p115, %p116
      %p118 = scmp.ne.s32.totalorder %s104, %s105
      %p119 = scmp.eq.s32.totalorder %s22, 7
      %p120 = por %p118, %p119
      %p122 = scmp.ne.s32.totalorder %s105, %s121
      %p123 = scmp.eq.s32.totalorder %s22, 0
      %p124 = por %p122, %p123
      %s125 = ssub.s32 %s24, %s38
      %s126 = ssub.s32 %s23, %s42
      %s127 = sor.u32 %s125, %s126
      %p128 = scmp.eq.s32.totalorder %s127, 0
      %s130 = sadd.s32 %s129, 1
      %s131 = scalar_select %p128, %s129, %s130
      %p134 = pneg %p128
      %p135 = scmp.eq.s32.totalorder %s16, 7
      %p136 = por %p134, %p135
      %p137 = scmp.ne.s32.totalorder %s129, %s132
      %p138 = scmp.eq.s32.totalorder %s16, 0
      %p139 = por %p137, %p138
      %p140 = scmp.ne.s32.totalorder %s129, %s132
      %p141 = scmp.eq.s32.totalorder %s21, 7
      %p142 = por %p140, %p141
      %p143 = scmp.ne.s32.totalorder %s132, %s133
      %p144 = scmp.eq.s32.totalorder %s21, 0
      %p145 = por %p143, %p144
      %p146 = scmp.ne.s32.totalorder %s132, %s133
      %p147 = scmp.eq.s32.totalorder %s22, 7
      %p148 = por %p146, %p147
      %p150 = scmp.ne.s32.totalorder %s133, %s149
      %p151 = scmp.eq.s32.totalorder %s22, 0
      %p152 = por %p150, %p151
      %s153 = ssub.s32 %s23, %s42
      %p154 = scmp.eq.s32.totalorder %s153, 0
      %s156 = sadd.s32 %s155, 1
      %s157 = scalar_select %p154, %s155, %s156
      %p160 = pneg %p154
      %p161 = scmp.eq.s32.totalorder %s16, 7
      %p162 = por %p160, %p161
      %p163 = scmp.ne.s32.totalorder %s155, %s158
      %p164 = scmp.eq.s32.totalorder %s16, 0
      %p165 = por %p163, %p164
      %p166 = scmp.ne.s32.totalorder %s155, %s158
      %p167 = scmp.eq.s32.totalorder %s21, 7
      %p168 = por %p166, %p167
      %p169 = scmp.ne.s32.totalorder %s158, %s159
      %p170 = scmp.eq.s32.totalorder %s21, 0
      %p171 = por %p169, %p170
      %p172 = scmp.ne.s32.totalorder %s158, %s159
      %p173 = scmp.eq.s32.totalorder %s22, 7
      %p174 = por %p172, %p173
      %p176 = scmp.ne.s32.totalorder %s159, %s175
      %p177 = scmp.eq.s32.totalorder %s22, 0
      %p178 = por %p176, %p177
      %p179 = scmp.le.s32.totalorder 1, %s16
      %p180 = scmp.lt.s32.totalorder %s16, 9
      %p181 = pnand %p179, %p180
      %p182 = pneg %p181
      // Predicated region
      $region9: #{moe_layer_forward.3} parent=5 // pred_check
        _
      $region10: #{moe_layer_forward.3} parent=5 // pred_check_branch
        %184 = sbr.rel (%p181) target = $region12
      $region11: #{moe_layer_forward.3} parent=5 // pred_region
        %s185 = ssub.s32 %s16, 1
      $region12: #{moe_layer_forward.3} parent=5 // pred_fallthru
        _
      %p186 = scmp.lt.s32.totalorder %s16, 8
      // Predicated region
      $region13: #{moe_layer_forward.3} parent=5 // pred_check
        %p187 = pneg %p186
      $region14: #{moe_layer_forward.3} parent=5 // pred_check_branch
        %189 = sbr.rel (%p187) target = $region16
      $region15: #{moe_layer_forward.3} parent=5 // pred_region
        // Predicated region
        $region17: #{moe_layer_forward.3} parent=15 // pred_check
          %p190 = pneg %p55
        $region18: #{moe_layer_forward.3} parent=15 // pred_check_branch
          %192 = sbr.rel (%p190) target = $region20
        $region19: #{moe_layer_forward.3} parent=15 // pred_region
          %s193 = smul.u32 16, %s23
          %p194 = scmp.lt.s32.totalorder %s193, 31
          %s195 = scalar_select %p194, %s193, 31
          %s196 = smul.addr %s195, 2
          %s197 = smul.addr %s196, 4
          %s198 = scalar_lea.vmem %s0, %s197
          %s199 = smul.u32 16, %s23
        $region20: #{moe_layer_forward.3} parent=15 // pred_fallthru
          _
        // Predicated region
        $region21: #{moe_layer_forward.3} parent=15 // pred_check
          %p200 = pneg %p83
        $region22: #{moe_layer_forward.3} parent=15 // pred_check_branch
          %202 = sbr.rel (%p200) target = $region24
        $region23: #{moe_layer_forward.3} parent=15 // pred_region
          %s203 = sand.u32 %s73, 1
          %s204 = scalar_lea.sflag [#allocation4], %s203
          %s205 = sand.u32 %s73, 1
          %s206 = smul.addr %s205, 2048
          %s207 = scalar_lea.vmem [#allocation3], %s206
          %s208 = smul.u32 16, %s25
          %s210 = ssub.s32 32768, 32768
          %211 = vsyncadd %s204, %s210
          %s212 = smul.addr %s24, 512
          %s213 = sadd.s32 %s208, %s212
          %s214 = smul.addr %s213, 64
          %s215 = scalar_lea.hbm %s1, %s214
          %s216 = sshll.u32 %s207, 4
          %s217 = int_to_ptr.vmem [resolvable:$true] %s216
          %222 = dma.hbm_to_vmem [thread:$0]  %s215, 32768, %s217, %s204, 1024, 1024, 64
        $region24: #{moe_layer_forward.3} parent=15 // pred_fallthru
          _
        // Predicated region
        $region25: #{moe_layer_forward.3} parent=15 // pred_check
          %p223 = pneg %p111
        $region26: #{moe_layer_forward.3} parent=15 // pred_check_branch
          %225 = sbr.rel (%p223) target = $region28
        $region27: #{moe_layer_forward.3} parent=15 // pred_region
          %s226 = smul.u32 128, %s25
          %p227 = scmp.lt.s32.totalorder %s24, 3
          %s228 = scalar_select %p227, %s24, 3
          %p229 = scmp.lt.s32.totalorder %s226, 127
          %s230 = scalar_select %p229, %s226, 127
          %s231 = smul.addr %s230, 2
          %s232 = smul.addr %s228, 256
          %s233 = sadd.s32 %s231, %s232
          %s234 = smul.addr %s233, 4
          %s235 = scalar_lea.vmem %s2, %s234
          %s236 = smul.u32 128, %s25
        $region28: #{moe_layer_forward.3} parent=15 // pred_fallthru
          _
        // Predicated region
        $region29: #{moe_layer_forward.3} parent=15 // pred_check
          %p237 = pneg %p139
        $region30: #{moe_layer_forward.3} parent=15 // pred_check_branch
          %239 = sbr.rel (%p237) target = $region32
        $region31: #{moe_layer_forward.3} parent=15 // pred_region
          %s240 = smul.u32 16, %s23
          %p241 = scmp.lt.s32.totalorder %s24, 3
          %s242 = scalar_select %p241, %s24, 3
          %p243 = scmp.lt.s32.totalorder %s240, 31
          %s244 = scalar_select %p243, %s240, 31
          %s245 = smul.addr %s242, 32
          %s246 = sadd.s32 %s244, %s245
          %s247 = smul.addr %s246, 8
          %s248 = scalar_lea.vmem %s3, %s247
          %s249 = smul.u32 16, %s23
        $region32: #{moe_layer_forward.3} parent=15 // pred_fallthru
          _
      $region16: #{moe_layer_forward.3} parent=5 // pred_fallthru
        _
      %p250 = scmp.le.s32.totalorder 1, %s16
      %p251 = scmp.lt.s32.totalorder %s16, 9
      %p252 = pnand %p250, %p251
      %p253 = pneg %p252
      // Predicated region
      $region33: #{moe_layer_forward.3} parent=5 // pred_check
        _
      $region34: #{moe_layer_forward.3} parent=5 // pred_check_branch
        %255 = sbr.rel (%p252) target = $region36
      $region35: #{moe_layer_forward.3} parent=5 // pred_region
        %s256 = ssub.s32 %s16, 1
        %s257 = sand.u32 %s76, 1
        %s258 = scalar_lea.sflag [#allocation4], %s257
        %s259 = sand.u32 %s76, 1
        %s260 = smul.addr %s259, 2048
        %s261 = scalar_lea.vmem [#allocation3], %s260
        // Predicated region
        $region37: #{moe_layer_forward.3} parent=35 // pred_check
          %p262 = pneg %p89
        $region38: #{moe_layer_forward.3} parent=35 // pred_check_branch
          %264 = sbr.rel (%p262) target = $region40
        $region39: #{moe_layer_forward.3} parent=35 // pred_region
          %265 = dma.done %s258, 32768
        $region40: #{moe_layer_forward.3} parent=35 // pred_fallthru
          _
        %s266 = smul.u32 16, %s26
        %p267 = scmp.lt.s32.totalorder %s266, 31
        %s268 = scalar_select %p267, %s266, 31
        %s269 = smul.addr %s268, 2
        %s270 = smul.addr %s269, 4
        %s271 = scalar_lea.vmem %s0, %s270
        %p272 = pneg %p61
        %p273 = pneg %p58
        %s274 = sand.u32 %s76, 1
        %s275 = scalar_lea.sflag [#allocation4], %s274
        %s276 = sand.u32 %s76, 1
        %s277 = smul.addr %s276, 2048
        %s278 = scalar_lea.vmem [#allocation3], %s277
        %p279 = pneg %p89
        %p280 = pneg %p86
        %s281 = smul.u32 128, %s28
        %p282 = scmp.lt.s32.totalorder %s27, 3
        %s283 = scalar_select %p282, %s27, 3
        %p284 = scmp.lt.s32.totalorder %s281, 127
        %s285 = scalar_select %p284, %s281, 127
        %s286 = smul.addr %s285, 2
        %s287 = smul.addr %s283, 256
        %s288 = sadd.s32 %s286, %s287
        %s289 = smul.addr %s288, 4
        %s290 = scalar_lea.vmem %s2, %s289
        %p291 = pneg %p117
        %p292 = pneg %p114
        %s293 = smul.u32 16, %s26
        %p294 = scmp.lt.s32.totalorder %s27, 3
        %s295 = scalar_select %p294, %s27, 3
        %p296 = scmp.lt.s32.totalorder %s293, 31
        %s297 = scalar_select %p296, %s293, 31
        %s298 = smul.addr %s295, 32
        %s299 = sadd.s32 %s297, %s298
        %s300 = smul.addr %s299, 8
        %s301 = scalar_lea.vmem %s3, %s300
        %p302 = pneg %p145
        %p303 = pneg %p142
        %p304 = pneg %p171
        %p305 = pneg %p168
        %s306 = sand.u32 %s158, 1
        %s307 = scalar_lea.sflag [#allocation5], %s306
        %s308 = sand.u32 %s158, 1
        %s309 = smul.addr %s308, 256
        %s310 = scalar_lea.vmem [#allocation6], %s309
        %s311 = smul.u32 16, %s26
        %p312 = scmp.lt.s32.totalorder %s311, 31
        %s313 = scalar_select %p312, %s311, 31
        %s314 = smul.addr %s313, 2
        %s315 = smul.addr %s314, 4
        %s316 = scalar_lea.vmem %s0, %s315
        %s317 = smul.u32 16, %s26
        %s318 = smul.u32 16, %s28
        %s319 = smul.u32 128, %s28
        %p320 = scmp.lt.s32.totalorder %s27, 3
        %s321 = scalar_select %p320, %s27, 3
        %p322 = scmp.lt.s32.totalorder %s319, 127
        %s323 = scalar_select %p322, %s319, 127
        %s324 = smul.addr %s323, 2
        %s325 = smul.addr %s321, 256
        %s326 = sadd.s32 %s324, %s325
        %s327 = smul.addr %s326, 4
        %s328 = scalar_lea.vmem %s2, %s327
        %s329 = smul.u32 128, %s28
        %s330 = smul.u32 16, %s26
        %p331 = scmp.lt.s32.totalorder %s27, 3
        %s332 = scalar_select %p331, %s27, 3
        %p333 = scmp.lt.s32.totalorder %s330, 31
        %s334 = scalar_select %p333, %s330, 31
        %s335 = smul.addr %s332, 32
        %s336 = sadd.s32 %s334, %s335
        %s337 = smul.addr %s336, 8
        %s338 = scalar_lea.vmem %s3, %s337
        %s339 = smul.u32 16, %s26
        %s340 = smul.u32 16, %s26
        %p341 = scmp.eq.s32.totalorder %s27, 0
        %p342 = scmp.eq.s32.totalorder %s28, 0
        %p343 = pnand %p341, %p342
        %p344 = pneg %p343
        // Predicated region
        $region41: #{moe_layer_forward.3} parent=35 // pred_check
          _
        $region42: #{moe_layer_forward.3} parent=35 // pred_check_branch
          %346 = sbr.rel (%p343) target = $region44
        $region43: #{moe_layer_forward.3} parent=35 // pred_region
          %347 = vst [vmem:[#allocation2] sm:$0xff] 0.0
          %348 = vst [vmem:[#allocation2 + $0x8] sm:$0xff] 0.0
          %349 = vst [vmem:[#allocation2 + $0x10] sm:$0xff] 0.0
          %350 = vst [vmem:[#allocation2 + $0x18] sm:$0xff] 0.0
          %351 = vst [vmem:[#allocation2 + $0x20] sm:$0xff] 0.0
          %352 = vst [vmem:[#allocation2 + $0x28] sm:$0xff] 0.0
          %353 = vst [vmem:[#allocation2 + $0x30] sm:$0xff] 0.0
          %354 = vst [vmem:[#allocation2 + $0x38] sm:$0xff] 0.0
          %355 = vst [vmem:[#allocation2 + $0x40] sm:$0xff] 0.0
          %356 = vst [vmem:[#allocation2 + $0x48] sm:$0xff] 0.0
          %357 = vst [vmem:[#allocation2 + $0x50] sm:$0xff] 0.0
          %358 = vst [vmem:[#allocation2 + $0x58] sm:$0xff] 0.0
          %359 = vst [vmem:[#allocation2 + $0x60] sm:$0xff] 0.0
          %360 = vst [vmem:[#allocation2 + $0x68] sm:$0xff] 0.0
          %361 = vst [vmem:[#allocation2 + $0x70] sm:$0xff] 0.0
          %362 = vst [vmem:[#allocation2 + $0x78] sm:$0xff] 0.0
          %363 = vst [vmem:[#allocation2 + $0x80] sm:$0xff] 0.0
          %364 = vst [vmem:[#allocation2 + $0x88] sm:$0xff] 0.0
          %365 = vst [vmem:[#allocation2 + $0x90] sm:$0xff] 0.0
          %366 = vst [vmem:[#allocation2 + $0x98] sm:$0xff] 0.0
          %367 = vst [vmem:[#allocation2 + $0xa0] sm:$0xff] 0.0
          %368 = vst [vmem:[#allocation2 + $0xa8] sm:$0xff] 0.0
          %369 = vst [vmem:[#allocation2 + $0xb0] sm:$0xff] 0.0
          %370 = vst [vmem:[#allocation2 + $0xb8] sm:$0xff] 0.0
          %371 = vst [vmem:[#allocation2 + $0xc0] sm:$0xff] 0.0
          %372 = vst [vmem:[#allocation2 + $0xc8] sm:$0xff] 0.0
          %373 = vst [vmem:[#allocation2 + $0xd0] sm:$0xff] 0.0
          %374 = vst [vmem:[#allocation2 + $0xd8] sm:$0xff] 0.0
          %375 = vst [vmem:[#allocation2 + $0xe0] sm:$0xff] 0.0
          %376 = vst [vmem:[#allocation2 + $0xe8] sm:$0xff] 0.0
          %377 = vst [vmem:[#allocation2 + $0xf0] sm:$0xff] 0.0
          %378 = vst [vmem:[#allocation2 + $0xf8] sm:$0xff] 0.0
        $region44: #{moe_layer_forward.3} parent=35 // pred_fallthru
          _
        %v379 = vld [vmem:[%s316] sm:$0xff]
        %v380 = vld [vmem:[%s316 + $0x8] sm:$0xff]
        %v381 = vld [vmem:[%s316 + $0x10] sm:$0xff]
        %v382 = vld [vmem:[%s316 + $0x18] sm:$0xff]
        %v383 = vld [vmem:[%s316 + $0x20] sm:$0xff]
        %v384 = vld [vmem:[%s316 + $0x28] sm:$0xff]
        %v385 = vld [vmem:[%s316 + $0x30] sm:$0xff]
        %v386 = vld [vmem:[%s316 + $0x38] sm:$0xff]
        %v387 = vld [vmem:[%s316 + $0x40] sm:$0xff]
        %v388 = vld [vmem:[%s316 + $0x48] sm:$0xff]
        %v389 = vld [vmem:[%s316 + $0x50] sm:$0xff]
        %v390 = vld [vmem:[%s316 + $0x58] sm:$0xff]
        %v391 = vld [vmem:[%s316 + $0x60] sm:$0xff]
        %v392 = vld [vmem:[%s316 + $0x68] sm:$0xff]
        %v393 = vld [vmem:[%s316 + $0x70] sm:$0xff]
        %v394 = vld [vmem:[%s316 + $0x78] sm:$0xff]
        %v395 = vld [vmem:[%s261] sm:$0xff]
        %v396 = vld [vmem:[%s261 + $0x8] sm:$0xff]
        %v397 = vld [vmem:[%s261 + $0x10] sm:$0xff]
        %v398 = vld [vmem:[%s261 + $0x18] sm:$0xff]
        %v399 = vld [vmem:[%s261 + $0x20] sm:$0xff]
        %v400 = vld [vmem:[%s261 + $0x28] sm:$0xff]
        %v401 = vld [vmem:[%s261 + $0x30] sm:$0xff]
        %v402 = vld [vmem:[%s261 + $0x38] sm:$0xff]
        %v403 = vld [vmem:[%s261 + $0x40] sm:$0xff]
        %v404 = vld [vmem:[%s261 + $0x48] sm:$0xff]
        %v405 = vld [vmem:[%s261 + $0x50] sm:$0xff]
        %v406 = vld [vmem:[%s261 + $0x58] sm:$0xff]
        %v407 = vld [vmem:[%s261 + $0x60] sm:$0xff]
        %v408 = vld [vmem:[%s261 + $0x68] sm:$0xff]
        %v409 = vld [vmem:[%s261 + $0x70] sm:$0xff]
        %v410 = vld [vmem:[%s261 + $0x78] sm:$0xff]
        %v411 = vld [vmem:[%s261 + $0x80] sm:$0xff]
        %v412 = vld [vmem:[%s261 + $0x88] sm:$0xff]
        %v413 = vld [vmem:[%s261 + $0x90] sm:$0xff]
        %v414 = vld [vmem:[%s261 + $0x98] sm:$0xff]
        %v415 = vld [vmem:[%s261 + $0xa0] sm:$0xff]
        %v416 = vld [vmem:[%s261 + $0xa8] sm:$0xff]
        %v417 = vld [vmem:[%s261 + $0xb0] sm:$0xff]
        %v418 = vld [vmem:[%s261 + $0xb8] sm:$0xff]
        %v419 = vld [vmem:[%s261 + $0xc0] sm:$0xff]
        %v420 = vld [vmem:[%s261 + $0xc8] sm:$0xff]
        %v421 = vld [vmem:[%s261 + $0xd0] sm:$0xff]
        %v422 = vld [vmem:[%s261 + $0xd8] sm:$0xff]
        %v423 = vld [vmem:[%s261 + $0xe0] sm:$0xff]
        %v424 = vld [vmem:[%s261 + $0xe8] sm:$0xff]
        %v425 = vld [vmem:[%s261 + $0xf0] sm:$0xff]
        %v426 = vld [vmem:[%s261 + $0xf8] sm:$0xff]
        %v427 = vld [vmem:[%s261 + $0x100] sm:$0xff]
        %v428 = vld [vmem:[%s261 + $0x108] sm:$0xff]
        %v429 = vld [vmem:[%s261 + $0x110] sm:$0xff]
        %v430 = vld [vmem:[%s261 + $0x118] sm:$0xff]
        %v431 = vld [vmem:[%s261 + $0x120] sm:$0xff]
        %v432 = vld [vmem:[%s261 + $0x128] sm:$0xff]
        %v433 = vld [vmem:[%s261 + $0x130] sm:$0xff]
        %v434 = vld [vmem:[%s261 + $0x138] sm:$0xff]
        %v435 = vld [vmem:[%s261 + $0x140] sm:$0xff]
        %v436 = vld [vmem:[%s261 + $0x148] sm:$0xff]
        %v437 = vld [vmem:[%s261 + $0x150] sm:$0xff]
        %v438 = vld [vmem:[%s261 + $0x158] sm:$0xff]
        %v439 = vld [vmem:[%s261 + $0x160] sm:$0xff]
        %v440 = vld [vmem:[%s261 + $0x168] sm:$0xff]
        %v441 = vld [vmem:[%s261 + $0x170] sm:$0xff]
        %v442 = vld [vmem:[%s261 + $0x178] sm:$0xff]
        %v443 = vld [vmem:[%s261 + $0x180] sm:$0xff]
        %v444 = vld [vmem:[%s261 + $0x188] sm:$0xff]
        %v445 = vld [vmem:[%s261 + $0x190] sm:$0xff]
        %v446 = vld [vmem:[%s261 + $0x198] sm:$0xff]
        %v447 = vld [vmem:[%s261 + $0x1a0] sm:$0xff]
        %v448 = vld [vmem:[%s261 + $0x1a8] sm:$0xff]
        %v449 = vld [vmem:[%s261 + $0x1b0] sm:$0xff]
        %v450 = vld [vmem:[%s261 + $0x1b8] sm:$0xff]
        %v451 = vld [vmem:[%s261 + $0x1c0] sm:$0xff]
        %v452 = vld [vmem:[%s261 + $0x1c8] sm:$0xff]
        %v453 = vld [vmem:[%s261 + $0x1d0] sm:$0xff]
        %v454 = vld [vmem:[%s261 + $0x1d8] sm:$0xff]
        %v455 = vld [vmem:[%s261 + $0x1e0] sm:$0xff]
        %v456 = vld [vmem:[%s261 + $0x1e8] sm:$0xff]
        %v457 = vld [vmem:[%s261 + $0x1f0] sm:$0xff]
        %v458 = vld [vmem:[%s261 + $0x1f8] sm:$0xff]
        %v459 = vld [vmem:[%s261 + $0x200] sm:$0xff]
        %v460 = vld [vmem:[%s261 + $0x208] sm:$0xff]
        %v461 = vld [vmem:[%s261 + $0x210] sm:$0xff]
        %v462 = vld [vmem:[%s261 + $0x218] sm:$0xff]
        %v463 = vld [vmem:[%s261 + $0x220] sm:$0xff]
        %v464 = vld [vmem:[%s261 + $0x228] sm:$0xff]
        %v465 = vld [vmem:[%s261 + $0x230] sm:$0xff]
        %v466 = vld [vmem:[%s261 + $0x238] sm:$0xff]
        %v467 = vld [vmem:[%s261 + $0x240] sm:$0xff]
        %v468 = vld [vmem:[%s261 + $0x248] sm:$0xff]
        %v469 = vld [vmem:[%s261 + $0x250] sm:$0xff]
        %v470 = vld [vmem:[%s261 + $0x258] sm:$0xff]
        %v471 = vld [vmem:[%s261 + $0x260] sm:$0xff]
        %v472 = vld [vmem:[%s261 + $0x268] sm:$0xff]
        %v473 = vld [vmem:[%s261 + $0x270] sm:$0xff]
        %v474 = vld [vmem:[%s261 + $0x278] sm:$0xff]
        %v475 = vld [vmem:[%s261 + $0x280] sm:$0xff]
        %v476 = vld [vmem:[%s261 + $0x288] sm:$0xff]
        %v477 = vld [vmem:[%s261 + $0x290] sm:$0xff]
        %v478 = vld [vmem:[%s261 + $0x298] sm:$0xff]
        %v479 = vld [vmem:[%s261 + $0x2a0] sm:$0xff]
        %v480 = vld [vmem:[%s261 + $0x2a8] sm:$0xff]
        %v481 = vld [vmem:[%s261 + $0x2b0] sm:$0xff]
        %v482 = vld [vmem:[%s261 + $0x2b8] sm:$0xff]
        %v483 = vld [vmem:[%s261 + $0x2c0] sm:$0xff]
        %v484 = vld [vmem:[%s261 + $0x2c8] sm:$0xff]
        %v485 = vld [vmem:[%s261 + $0x2d0] sm:$0xff]
        %v486 = vld [vmem:[%s261 + $0x2d8] sm:$0xff]
        %v487 = vld [vmem:[%s261 + $0x2e0] sm:$0xff]
        %v488 = vld [vmem:[%s261 + $0x2e8] sm:$0xff]
        %v489 = vld [vmem:[%s261 + $0x2f0] sm:$0xff]
        %v490 = vld [vmem:[%s261 + $0x2f8] sm:$0xff]
        %v491 = vld [vmem:[%s261 + $0x300] sm:$0xff]
        %v492 = vld [vmem:[%s261 + $0x308] sm:$0xff]
        %v493 = vld [vmem:[%s261 + $0x310] sm:$0xff]
        %v494 = vld [vmem:[%s261 + $0x318] sm:$0xff]
        %v495 = vld [vmem:[%s261 + $0x320] sm:$0xff]
        %v496 = vld [vmem:[%s261 + $0x328] sm:$0xff]
        %v497 = vld [vmem:[%s261 + $0x330] sm:$0xff]
        %v498 = vld [vmem:[%s261 + $0x338] sm:$0xff]
        %v499 = vld [vmem:[%s261 + $0x340] sm:$0xff]
        %v500 = vld [vmem:[%s261 + $0x348] sm:$0xff]
        %v501 = vld [vmem:[%s261 + $0x350] sm:$0xff]
        %v502 = vld [vmem:[%s261 + $0x358] sm:$0xff]
        %v503 = vld [vmem:[%s261 + $0x360] sm:$0xff]
        %v504 = vld [vmem:[%s261 + $0x368] sm:$0xff]
        %v505 = vld [vmem:[%s261 + $0x370] sm:$0xff]
        %v506 = vld [vmem:[%s261 + $0x378] sm:$0xff]
        %v507 = vld [vmem:[%s261 + $0x380] sm:$0xff]
        %v508 = vld [vmem:[%s261 + $0x388] sm:$0xff]
        %v509 = vld [vmem:[%s261 + $0x390] sm:$0xff]
        %v510 = vld [vmem:[%s261 + $0x398] sm:$0xff]
        %v511 = vld [vmem:[%s261 + $0x3a0] sm:$0xff]
        %v512 = vld [vmem:[%s261 + $0x3a8] sm:$0xff]
        %v513 = vld [vmem:[%s261 + $0x3b0] sm:$0xff]
        %v514 = vld [vmem:[%s261 + $0x3b8] sm:$0xff]
        %v515 = vld [vmem:[%s261 + $0x3c0] sm:$0xff]
        %v516 = vld [vmem:[%s261 + $0x3c8] sm:$0xff]
        %v517 = vld [vmem:[%s261 + $0x3d0] sm:$0xff]
        %v518 = vld [vmem:[%s261 + $0x3d8] sm:$0xff]
        %v519 = vld [vmem:[%s261 + $0x3e0] sm:$0xff]
        %v520 = vld [vmem:[%s261 + $0x3e8] sm:$0xff]
        %v521 = vld [vmem:[%s261 + $0x3f0] sm:$0xff]
        %v522 = vld [vmem:[%s261 + $0x3f8] sm:$0xff]
        %v523 = vld [vmem:[%s261 + $0x400] sm:$0xff]
        %v524 = vld [vmem:[%s261 + $0x408] sm:$0xff]
        %v525 = vld [vmem:[%s261 + $0x410] sm:$0xff]
        %v526 = vld [vmem:[%s261 + $0x418] sm:$0xff]
        %v527 = vld [vmem:[%s261 + $0x420] sm:$0xff]
        %v528 = vld [vmem:[%s261 + $0x428] sm:$0xff]
        %v529 = vld [vmem:[%s261 + $0x430] sm:$0xff]
        %v530 = vld [vmem:[%s261 + $0x438] sm:$0xff]
        %v531 = vld [vmem:[%s261 + $0x440] sm:$0xff]
        %v532 = vld [vmem:[%s261 + $0x448] sm:$0xff]
        %v533 = vld [vmem:[%s261 + $0x450] sm:$0xff]
        %v534 = vld [vmem:[%s261 + $0x458] sm:$0xff]
        %v535 = vld [vmem:[%s261 + $0x460] sm:$0xff]
        %v536 = vld [vmem:[%s261 + $0x468] sm:$0xff]
        %v537 = vld [vmem:[%s261 + $0x470] sm:$0xff]
        %v538 = vld [vmem:[%s261 + $0x478] sm:$0xff]
        %v539 = vld [vmem:[%s261 + $0x480] sm:$0xff]
        %v540 = vld [vmem:[%s261 + $0x488] sm:$0xff]
        %v541 = vld [vmem:[%s261 + $0x490] sm:$0xff]
        %v542 = vld [vmem:[%s261 + $0x498] sm:$0xff]
        %v543 = vld [vmem:[%s261 + $0x4a0] sm:$0xff]
        %v544 = vld [vmem:[%s261 + $0x4a8] sm:$0xff]
        %v545 = vld [vmem:[%s261 + $0x4b0] sm:$0xff]
        %v546 = vld [vmem:[%s261 + $0x4b8] sm:$0xff]
        %v547 = vld [vmem:[%s261 + $0x4c0] sm:$0xff]
        %v548 = vld [vmem:[%s261 + $0x4c8] sm:$0xff]
        %v549 = vld [vmem:[%s261 + $0x4d0] sm:$0xff]
        %v550 = vld [vmem:[%s261 + $0x4d8] sm:$0xff]
        %v551 = vld [vmem:[%s261 + $0x4e0] sm:$0xff]
        %v552 = vld [vmem:[%s261 + $0x4e8] sm:$0xff]
        %v553 = vld [vmem:[%s261 + $0x4f0] sm:$0xff]
        %v554 = vld [vmem:[%s261 + $0x4f8] sm:$0xff]
        %v555 = vld [vmem:[%s261 + $0x500] sm:$0xff]
        %v556 = vld [vmem:[%s261 + $0x508] sm:$0xff]
        %v557 = vld [vmem:[%s261 + $0x510] sm:$0xff]
        %v558 = vld [vmem:[%s261 + $0x518] sm:$0xff]
        %v559 = vld [vmem:[%s261 + $0x520] sm:$0xff]
        %v560 = vld [vmem:[%s261 + $0x528] sm:$0xff]
        %v561 = vld [vmem:[%s261 + $0x530] sm:$0xff]
        %v562 = vld [vmem:[%s261 + $0x538] sm:$0xff]
        %v563 = vld [vmem:[%s261 + $0x540] sm:$0xff]
        %v564 = vld [vmem:[%s261 + $0x548] sm:$0xff]
        %v565 = vld [vmem:[%s261 + $0x550] sm:$0xff]
        %v566 = vld [vmem:[%s261 + $0x558] sm:$0xff]
        %v567 = vld [vmem:[%s261 + $0x560] sm:$0xff]
        %v568 = vld [vmem:[%s261 + $0x568] sm:$0xff]
        %v569 = vld [vmem:[%s261 + $0x570] sm:$0xff]
        %v570 = vld [vmem:[%s261 + $0x578] sm:$0xff]
        %v571 = vld [vmem:[%s261 + $0x580] sm:$0xff]
        %v572 = vld [vmem:[%s261 + $0x588] sm:$0xff]
        %v573 = vld [vmem:[%s261 + $0x590] sm:$0xff]
        %v574 = vld [vmem:[%s261 + $0x598] sm:$0xff]
        %v575 = vld [vmem:[%s261 + $0x5a0] sm:$0xff]
        %v576 = vld [vmem:[%s261 + $0x5a8] sm:$0xff]
        %v577 = vld [vmem:[%s261 + $0x5b0] sm:$0xff]
        %v578 = vld [vmem:[%s261 + $0x5b8] sm:$0xff]
        %v579 = vld [vmem:[%s261 + $0x5c0] sm:$0xff]
        %v580 = vld [vmem:[%s261 + $0x5c8] sm:$0xff]
        %v581 = vld [vmem:[%s261 + $0x5d0] sm:$0xff]
        %v582 = vld [vmem:[%s261 + $0x5d8] sm:$0xff]
        %v583 = vld [vmem:[%s261 + $0x5e0] sm:$0xff]
        %v584 = vld [vmem:[%s261 + $0x5e8] sm:$0xff]
        %v585 = vld [vmem:[%s261 + $0x5f0] sm:$0xff]
        %v586 = vld [vmem:[%s261 + $0x5f8] sm:$0xff]
        %v587 = vld [vmem:[%s261 + $0x600] sm:$0xff]
        %v588 = vld [vmem:[%s261 + $0x608] sm:$0xff]
        %v589 = vld [vmem:[%s261 + $0x610] sm:$0xff]
        %v590 = vld [vmem:[%s261 + $0x618] sm:$0xff]
        %v591 = vld [vmem:[%s261 + $0x620] sm:$0xff]
        %v592 = vld [vmem:[%s261 + $0x628] sm:$0xff]
        %v593 = vld [vmem:[%s261 + $0x630] sm:$0xff]
        %v594 = vld [vmem:[%s261 + $0x638] sm:$0xff]
        %v595 = vld [vmem:[%s261 + $0x640] sm:$0xff]
        %v596 = vld [vmem:[%s261 + $0x648] sm:$0xff]
        %v597 = vld [vmem:[%s261 + $0x650] sm:$0xff]
        %v598 = vld [vmem:[%s261 + $0x658] sm:$0xff]
        %v599 = vld [vmem:[%s261 + $0x660] sm:$0xff]
        %v600 = vld [vmem:[%s261 + $0x668] sm:$0xff]
        %v601 = vld [vmem:[%s261 + $0x670] sm:$0xff]
        %v602 = vld [vmem:[%s261 + $0x678] sm:$0xff]
        %v603 = vld [vmem:[%s261 + $0x680] sm:$0xff]
        %v604 = vld [vmem:[%s261 + $0x688] sm:$0xff]
        %v605 = vld [vmem:[%s261 + $0x690] sm:$0xff]
        %v606 = vld [vmem:[%s261 + $0x698] sm:$0xff]
        %v607 = vld [vmem:[%s261 + $0x6a0] sm:$0xff]
        %v608 = vld [vmem:[%s261 + $0x6a8] sm:$0xff]
        %v609 = vld [vmem:[%s261 + $0x6b0] sm:$0xff]
        %v610 = vld [vmem:[%s261 + $0x6b8] sm:$0xff]
        %v611 = vld [vmem:[%s261 + $0x6c0] sm:$0xff]
        %v612 = vld [vmem:[%s261 + $0x6c8] sm:$0xff]
        %v613 = vld [vmem:[%s261 + $0x6d0] sm:$0xff]
        %v614 = vld [vmem:[%s261 + $0x6d8] sm:$0xff]
        %v615 = vld [vmem:[%s261 + $0x6e0] sm:$0xff]
        %v616 = vld [vmem:[%s261 + $0x6e8] sm:$0xff]
        %v617 = vld [vmem:[%s261 + $0x6f0] sm:$0xff]
        %v618 = vld [vmem:[%s261 + $0x6f8] sm:$0xff]
        %v619 = vld [vmem:[%s261 + $0x700] sm:$0xff]
        %v620 = vld [vmem:[%s261 + $0x708] sm:$0xff]
        %v621 = vld [vmem:[%s261 + $0x710] sm:$0xff]
        %v622 = vld [vmem:[%s261 + $0x718] sm:$0xff]
        %v623 = vld [vmem:[%s261 + $0x720] sm:$0xff]
        %v624 = vld [vmem:[%s261 + $0x728] sm:$0xff]
        %v625 = vld [vmem:[%s261 + $0x730] sm:$0xff]
        %v626 = vld [vmem:[%s261 + $0x738] sm:$0xff]
        %v627 = vld [vmem:[%s261 + $0x740] sm:$0xff]
        %v628 = vld [vmem:[%s261 + $0x748] sm:$0xff]
        %v629 = vld [vmem:[%s261 + $0x750] sm:$0xff]
        %v630 = vld [vmem:[%s261 + $0x758] sm:$0xff]
        %v631 = vld [vmem:[%s261 + $0x760] sm:$0xff]
        %v632 = vld [vmem:[%s261 + $0x768] sm:$0xff]
        %v633 = vld [vmem:[%s261 + $0x770] sm:$0xff]
        %v634 = vld [vmem:[%s261 + $0x778] sm:$0xff]
        %v635 = vld [vmem:[%s261 + $0x780] sm:$0xff]
        %v636 = vld [vmem:[%s261 + $0x788] sm:$0xff]
        %v637 = vld [vmem:[%s261 + $0x790] sm:$0xff]
        %v638 = vld [vmem:[%s261 + $0x798] sm:$0xff]
        %v639 = vld [vmem:[%s261 + $0x7a0] sm:$0xff]
        %v640 = vld [vmem:[%s261 + $0x7a8] sm:$0xff]
        %v641 = vld [vmem:[%s261 + $0x7b0] sm:$0xff]
        %v642 = vld [vmem:[%s261 + $0x7b8] sm:$0xff]
        %v643 = vld [vmem:[%s261 + $0x7c0] sm:$0xff]
        %v644 = vld [vmem:[%s261 + $0x7c8] sm:$0xff]
        %v645 = vld [vmem:[%s261 + $0x7d0] sm:$0xff]
        %v646 = vld [vmem:[%s261 + $0x7d8] sm:$0xff]
        %v647 = vld [vmem:[%s261 + $0x7e0] sm:$0xff]
        %v648 = vld [vmem:[%s261 + $0x7e8] sm:$0xff]
        %v649 = vld [vmem:[%s261 + $0x7f0] sm:$0xff]
        %v650 = vld [vmem:[%s261 + $0x7f8] sm:$0xff]
        %v667 = vunpack.c.l.b16 %v379
        %v668 = vunpack.c.h.b16 %v379
        %v669 = vunpack.c.l.b16 %v380
        %v670 = vunpack.c.h.b16 %v380
        %v671 = vunpack.c.l.b16 %v381
        %v672 = vunpack.c.h.b16 %v381
        %v673 = vunpack.c.l.b16 %v382
        %v674 = vunpack.c.h.b16 %v382
        %v675 = vunpack.c.l.b16 %v383
        %v676 = vunpack.c.h.b16 %v383
        %v677 = vunpack.c.l.b16 %v384
        %v678 = vunpack.c.h.b16 %v384
        %v679 = vunpack.c.l.b16 %v385
        %v680 = vunpack.c.h.b16 %v385
        %v681 = vunpack.c.l.b16 %v386
        %v682 = vunpack.c.h.b16 %v386
        %v683 = vunpack.c.l.b16 %v387
        %v684 = vunpack.c.h.b16 %v387
        %v685 = vunpack.c.l.b16 %v388
        %v686 = vunpack.c.h.b16 %v388
        %v687 = vunpack.c.l.b16 %v389
        %v688 = vunpack.c.h.b16 %v389
        %v689 = vunpack.c.l.b16 %v390
        %v690 = vunpack.c.h.b16 %v390
        %v691 = vunpack.c.l.b16 %v391
        %v692 = vunpack.c.h.b16 %v391
        %v693 = vunpack.c.l.b16 %v392
        %v694 = vunpack.c.h.b16 %v392
        %v695 = vunpack.c.l.b16 %v393
        %v696 = vunpack.c.h.b16 %v393
        %v697 = vunpack.c.l.b16 %v394
        %v698 = vunpack.c.h.b16 %v394
        %v699 = vpack.c.b16 %v669, %v667
        %v700 = vpack.c.b16 %v670, %v668
        %v701 = vpack.c.b16 %v673, %v671
        %v702 = vpack.c.b16 %v674, %v672
        %v703 = vpack.c.b16 %v677, %v675
        %v704 = vpack.c.b16 %v678, %v676
        %v705 = vpack.c.b16 %v681, %v679
        %v706 = vpack.c.b16 %v682, %v680
        %v707 = vpack.c.b16 %v685, %v683
        %v708 = vpack.c.b16 %v686, %v684
        %v709 = vpack.c.b16 %v689, %v687
        %v710 = vpack.c.b16 %v690, %v688
        %v711 = vpack.c.b16 %v693, %v691
        %v712 = vpack.c.b16 %v694, %v692
        %v713 = vpack.c.b16 %v697, %v695
        %v714 = vpack.c.b16 %v698, %v696
        %v987 = vunpack.c.l.b16 %v395
        %v988 = vunpack.c.h.b16 %v395
        %v989 = vunpack.c.l.b16 %v396
        %v990 = vunpack.c.h.b16 %v396
        %v991 = vunpack.c.l.b16 %v397
        %v992 = vunpack.c.h.b16 %v397
        %v993 = vunpack.c.l.b16 %v398
        %v994 = vunpack.c.h.b16 %v398
        %v995 = vunpack.c.l.b16 %v399
        %v996 = vunpack.c.h.b16 %v399
        %v997 = vunpack.c.l.b16 %v400
        %v998 = vunpack.c.h.b16 %v400
        %v999 = vunpack.c.l.b16 %v401
        %v1000 = vunpack.c.h.b16 %v401
        %v1001 = vunpack.c.l.b16 %v402
        %v1002 = vunpack.c.h.b16 %v402
        %v1003 = vunpack.c.l.b16 %v403
        %v1004 = vunpack.c.h.b16 %v403
        %v1005 = vunpack.c.l.b16 %v404
        %v1006 = vunpack.c.h.b16 %v404
        %v1007 = vunpack.c.l.b16 %v405
        %v1008 = vunpack.c.h.b16 %v405
        %v1009 = vunpack.c.l.b16 %v406
        %v1010 = vunpack.c.h.b16 %v406
        %v1011 = vunpack.c.l.b16 %v407
        %v1012 = vunpack.c.h.b16 %v407
        %v1013 = vunpack.c.l.b16 %v408
        %v1014 = vunpack.c.h.b16 %v408
        %v1015 = vunpack.c.l.b16 %v409
        %v1016 = vunpack.c.h.b16 %v409
        %v1017 = vunpack.c.l.b16 %v410
        %v1018 = vunpack.c.h.b16 %v410
        %v1019 = vunpack.c.l.b16 %v411
        %v1020 = vunpack.c.h.b16 %v411
        %v1021 = vunpack.c.l.b16 %v412
        %v1022 = vunpack.c.h.b16 %v412
        %v1023 = vunpack.c.l.b16 %v413
        %v1024 = vunpack.c.h.b16 %v413
        %v1025 = vunpack.c.l.b16 %v414
        %v1026 = vunpack.c.h.b16 %v414
        %v1027 = vunpack.c.l.b16 %v415
        %v1028 = vunpack.c.h.b16 %v415
        %v1029 = vunpack.c.l.b16 %v416
        %v1030 = vunpack.c.h.b16 %v416
        %v1031 = vunpack.c.l.b16 %v417
        %v1032 = vunpack.c.h.b16 %v417
        %v1033 = vunpack.c.l.b16 %v418
        %v1034 = vunpack.c.h.b16 %v418
        %v1035 = vunpack.c.l.b16 %v419
        %v1036 = vunpack.c.h.b16 %v419
        %v1037 = vunpack.c.l.b16 %v420
        %v1038 = vunpack.c.h.b16 %v420
        %v1039 = vunpack.c.l.b16 %v421
        %v1040 = vunpack.c.h.b16 %v421
        %v1041 = vunpack.c.l.b16 %v422
        %v1042 = vunpack.c.h.b16 %v422
        %v1043 = vunpack.c.l.b16 %v423
        %v1044 = vunpack.c.h.b16 %v423
        %v1045 = vunpack.c.l.b16 %v424
        %v1046 = vunpack.c.h.b16 %v424
        %v1047 = vunpack.c.l.b16 %v425
        %v1048 = vunpack.c.h.b16 %v425
        %v1049 = vunpack.c.l.b16 %v426
        %v1050 = vunpack.c.h.b16 %v426
        %v1051 = vunpack.c.l.b16 %v427
        %v1052 = vunpack.c.h.b16 %v427
        %v1053 = vunpack.c.l.b16 %v428
        %v1054 = vunpack.c.h.b16 %v428
        %v1055 = vunpack.c.l.b16 %v429
        %v1056 = vunpack.c.h.b16 %v429
        %v1057 = vunpack.c.l.b16 %v430
        %v1058 = vunpack.c.h.b16 %v430
        %v1059 = vunpack.c.l.b16 %v431
        %v1060 = vunpack.c.h.b16 %v431
        %v1061 = vunpack.c.l.b16 %v432
        %v1062 = vunpack.c.h.b16 %v432
        %v1063 = vunpack.c.l.b16 %v433
        %v1064 = vunpack.c.h.b16 %v433
        %v1065 = vunpack.c.l.b16 %v434
        %v1066 = vunpack.c.h.b16 %v434
        %v1067 = vunpack.c.l.b16 %v435
        %v1068 = vunpack.c.h.b16 %v435
        %v1069 = vunpack.c.l.b16 %v436
        %v1070 = vunpack.c.h.b16 %v436
        %v1071 = vunpack.c.l.b16 %v437
        %v1072 = vunpack.c.h.b16 %v437
        %v1073 = vunpack.c.l.b16 %v438
        %v1074 = vunpack.c.h.b16 %v438
        %v1075 = vunpack.c.l.b16 %v439
        %v1076 = vunpack.c.h.b16 %v439
        %v1077 = vunpack.c.l.b16 %v440
        %v1078 = vunpack.c.h.b16 %v440
        %v1079 = vunpack.c.l.b16 %v441
        %v1080 = vunpack.c.h.b16 %v441
        %v1081 = vunpack.c.l.b16 %v442
        %v1082 = vunpack.c.h.b16 %v442
        %v1083 = vunpack.c.l.b16 %v443
        %v1084 = vunpack.c.h.b16 %v443
        %v1085 = vunpack.c.l.b16 %v444
        %v1086 = vunpack.c.h.b16 %v444
        %v1087 = vunpack.c.l.b16 %v445
        %v1088 = vunpack.c.h.b16 %v445
        %v1089 = vunpack.c.l.b16 %v446
        %v1090 = vunpack.c.h.b16 %v446
        %v1091 = vunpack.c.l.b16 %v447
        %v1092 = vunpack.c.h.b16 %v447
        %v1093 = vunpack.c.l.b16 %v448
        %v1094 = vunpack.c.h.b16 %v448
        %v1095 = vunpack.c.l.b16 %v449
        %v1096 = vunpack.c.h.b16 %v449
        %v1097 = vunpack.c.l.b16 %v450
        %v1098 = vunpack.c.h.b16 %v450
        %v1099 = vunpack.c.l.b16 %v451
        %v1100 = vunpack.c.h.b16 %v451
        %v1101 = vunpack.c.l.b16 %v452
        %v1102 = vunpack.c.h.b16 %v452
        %v1103 = vunpack.c.l.b16 %v453
        %v1104 = vunpack.c.h.b16 %v453
        %v1105 = vunpack.c.l.b16 %v454
        %v1106 = vunpack.c.h.b16 %v454
        %v1107 = vunpack.c.l.b16 %v455
        %v1108 = vunpack.c.h.b16 %v455
        %v1109 = vunpack.c.l.b16 %v456
        %v1110 = vunpack.c.h.b16 %v456
        %v1111 = vunpack.c.l.b16 %v457
        %v1112 = vunpack.c.h.b16 %v457
        %v1113 = vunpack.c.l.b16 %v458
        %v1114 = vunpack.c.h.b16 %v458
        %v1115 = vunpack.c.l.b16 %v459
        %v1116 = vunpack.c.h.b16 %v459
        %v1117 = vunpack.c.l.b16 %v460
        %v1118 = vunpack.c.h.b16 %v460
        %v1119 = vunpack.c.l.b16 %v461
        %v1120 = vunpack.c.h.b16 %v461
        %v1121 = vunpack.c.l.b16 %v462
        %v1122 = vunpack.c.h.b16 %v462
        %v1123 = vunpack.c.l.b16 %v463
        %v1124 = vunpack.c.h.b16 %v463
        %v1125 = vunpack.c.l.b16 %v464
        %v1126 = vunpack.c.h.b16 %v464
        %v1127 = vunpack.c.l.b16 %v465
        %v1128 = vunpack.c.h.b16 %v465
        %v1129 = vunpack.c.l.b16 %v466
        %v1130 = vunpack.c.h.b16 %v466
        %v1131 = vunpack.c.l.b16 %v467
        %v1132 = vunpack.c.h.b16 %v467
        %v1133 = vunpack.c.l.b16 %v468
        %v1134 = vunpack.c.h.b16 %v468
        %v1135 = vunpack.c.l.b16 %v469
        %v1136 = vunpack.c.h.b16 %v469
        %v1137 = vunpack.c.l.b16 %v470
        %v1138 = vunpack.c.h.b16 %v470
        %v1139 = vunpack.c.l.b16 %v471
        %v1140 = vunpack.c.h.b16 %v471
        %v1141 = vunpack.c.l.b16 %v472
        %v1142 = vunpack.c.h.b16 %v472
        %v1143 = vunpack.c.l.b16 %v473
        %v1144 = vunpack.c.h.b16 %v473
        %v1145 = vunpack.c.l.b16 %v474
        %v1146 = vunpack.c.h.b16 %v474
        %v1147 = vunpack.c.l.b16 %v475
        %v1148 = vunpack.c.h.b16 %v475
        %v1149 = vunpack.c.l.b16 %v476
        %v1150 = vunpack.c.h.b16 %v476
        %v1151 = vunpack.c.l.b16 %v477
        %v1152 = vunpack.c.h.b16 %v477
        %v1153 = vunpack.c.l.b16 %v478
        %v1154 = vunpack.c.h.b16 %v478
        %v1155 = vunpack.c.l.b16 %v479
        %v1156 = vunpack.c.h.b16 %v479
        %v1157 = vunpack.c.l.b16 %v480
        %v1158 = vunpack.c.h.b16 %v480
        %v1159 = vunpack.c.l.b16 %v481
        %v1160 = vunpack.c.h.b16 %v481
        %v1161 = vunpack.c.l.b16 %v482
        %v1162 = vunpack.c.h.b16 %v482
        %v1163 = vunpack.c.l.b16 %v483
        %v1164 = vunpack.c.h.b16 %v483
        %v1165 = vunpack.c.l.b16 %v484
        %v1166 = vunpack.c.h.b16 %v484
        %v1167 = vunpack.c.l.b16 %v485
        %v1168 = vunpack.c.h.b16 %v485
        %v1169 = vunpack.c.l.b16 %v486
        %v1170 = vunpack.c.h.b16 %v486
        %v1171 = vunpack.c.l.b16 %v487
        %v1172 = vunpack.c.h.b16 %v487
        %v1173 = vunpack.c.l.b16 %v488
        %v1174 = vunpack.c.h.b16 %v488
        %v1175 = vunpack.c.l.b16 %v489
        %v1176 = vunpack.c.h.b16 %v489
        %v1177 = vunpack.c.l.b16 %v490
        %v1178 = vunpack.c.h.b16 %v490
        %v1179 = vunpack.c.l.b16 %v491
        %v1180 = vunpack.c.h.b16 %v491
        %v1181 = vunpack.c.l.b16 %v492
        %v1182 = vunpack.c.h.b16 %v492
        %v1183 = vunpack.c.l.b16 %v493
        %v1184 = vunpack.c.h.b16 %v493
        %v1185 = vunpack.c.l.b16 %v494
        %v1186 = vunpack.c.h.b16 %v494
        %v1187 = vunpack.c.l.b16 %v495
        %v1188 = vunpack.c.h.b16 %v495
        %v1189 = vunpack.c.l.b16 %v496
        %v1190 = vunpack.c.h.b16 %v496
        %v1191 = vunpack.c.l.b16 %v497
        %v1192 = vunpack.c.h.b16 %v497
        %v1193 = vunpack.c.l.b16 %v498
        %v1194 = vunpack.c.h.b16 %v498
        %v1195 = vunpack.c.l.b16 %v499
        %v1196 = vunpack.c.h.b16 %v499
        %v1197 = vunpack.c.l.b16 %v500
        %v1198 = vunpack.c.h.b16 %v500
        %v1199 = vunpack.c.l.b16 %v501
        %v1200 = vunpack.c.h.b16 %v501
        %v1201 = vunpack.c.l.b16 %v502
        %v1202 = vunpack.c.h.b16 %v502
        %v1203 = vunpack.c.l.b16 %v503
        %v1204 = vunpack.c.h.b16 %v503
        %v1205 = vunpack.c.l.b16 %v504
        %v1206 = vunpack.c.h.b16 %v504
        %v1207 = vunpack.c.l.b16 %v505
        %v1208 = vunpack.c.h.b16 %v505
        %v1209 = vunpack.c.l.b16 %v506
        %v1210 = vunpack.c.h.b16 %v506
        %v1211 = vunpack.c.l.b16 %v507
        %v1212 = vunpack.c.h.b16 %v507
        %v1213 = vunpack.c.l.b16 %v508
        %v1214 = vunpack.c.h.b16 %v508
        %v1215 = vunpack.c.l.b16 %v509
        %v1216 = vunpack.c.h.b16 %v509
        %v1217 = vunpack.c.l.b16 %v510
        %v1218 = vunpack.c.h.b16 %v510
        %v1219 = vunpack.c.l.b16 %v511
        %v1220 = vunpack.c.h.b16 %v511
        %v1221 = vunpack.c.l.b16 %v512
        %v1222 = vunpack.c.h.b16 %v512
        %v1223 = vunpack.c.l.b16 %v513
        %v1224 = vunpack.c.h.b16 %v513
        %v1225 = vunpack.c.l.b16 %v514
        %v1226 = vunpack.c.h.b16 %v514
        %v1227 = vunpack.c.l.b16 %v515
        %v1228 = vunpack.c.h.b16 %v515
        %v1229 = vunpack.c.l.b16 %v516
        %v1230 = vunpack.c.h.b16 %v516
        %v1231 = vunpack.c.l.b16 %v517
        %v1232 = vunpack.c.h.b16 %v517
        %v1233 = vunpack.c.l.b16 %v518
        %v1234 = vunpack.c.h.b16 %v518
        %v1235 = vunpack.c.l.b16 %v519
        %v1236 = vunpack.c.h.b16 %v519
        %v1237 = vunpack.c.l.b16 %v520
        %v1238 = vunpack.c.h.b16 %v520
        %v1239 = vunpack.c.l.b16 %v521
        %v1240 = vunpack.c.h.b16 %v521
        %v1241 = vunpack.c.l.b16 %v522
        %v1242 = vunpack.c.h.b16 %v522
        %v1243 = vunpack.c.l.b16 %v523
        %v1244 = vunpack.c.h.b16 %v523
        %v1245 = vunpack.c.l.b16 %v524
        %v1246 = vunpack.c.h.b16 %v524
        %v1247 = vunpack.c.l.b16 %v525
        %v1248 = vunpack.c.h.b16 %v525
        %v1249 = vunpack.c.l.b16 %v526
        %v1250 = vunpack.c.h.b16 %v526
        %v1251 = vunpack.c.l.b16 %v527
        %v1252 = vunpack.c.h.b16 %v527
        %v1253 = vunpack.c.l.b16 %v528
        %v1254 = vunpack.c.h.b16 %v528
        %v1255 = vunpack.c.l.b16 %v529
        %v1256 = vunpack.c.h.b16 %v529
        %v1257 = vunpack.c.l.b16 %v530
        %v1258 = vunpack.c.h.b16 %v530
        %v1259 = vunpack.c.l.b16 %v531
        %v1260 = vunpack.c.h.b16 %v531
        %v1261 = vunpack.c.l.b16 %v532
        %v1262 = vunpack.c.h.b16 %v532
        %v1263 = vunpack.c.l.b16 %v533
        %v1264 = vunpack.c.h.b16 %v533
        %v1265 = vunpack.c.l.b16 %v534
        %v1266 = vunpack.c.h.b16 %v534
        %v1267 = vunpack.c.l.b16 %v535
        %v1268 = vunpack.c.h.b16 %v535
        %v1269 = vunpack.c.l.b16 %v536
        %v1270 = vunpack.c.h.b16 %v536
        %v1271 = vunpack.c.l.b16 %v537
        %v1272 = vunpack.c.h.b16 %v537
        %v1273 = vunpack.c.l.b16 %v538
        %v1274 = vunpack.c.h.b16 %v538
        %v1275 = vunpack.c.l.b16 %v539
        %v1276 = vunpack.c.h.b16 %v539
        %v1277 = vunpack.c.l.b16 %v540
        %v1278 = vunpack.c.h.b16 %v540
        %v1279 = vunpack.c.l.b16 %v541
        %v1280 = vunpack.c.h.b16 %v541
        %v1281 = vunpack.c.l.b16 %v542
        %v1282 = vunpack.c.h.b16 %v542
        %v1283 = vunpack.c.l.b16 %v543
        %v1284 = vunpack.c.h.b16 %v543
        %v1285 = vunpack.c.l.b16 %v544
        %v1286 = vunpack.c.h.b16 %v544
        %v1287 = vunpack.c.l.b16 %v545
        %v1288 = vunpack.c.h.b16 %v545
        %v1289 = vunpack.c.l.b16 %v546
        %v1290 = vunpack.c.h.b16 %v546
        %v1291 = vunpack.c.l.b16 %v547
        %v1292 = vunpack.c.h.b16 %v547
        %v1293 = vunpack.c.l.b16 %v548
        %v1294 = vunpack.c.h.b16 %v548
        %v1295 = vunpack.c.l.b16 %v549
        %v1296 = vunpack.c.h.b16 %v549
        %v1297 = vunpack.c.l.b16 %v550
        %v1298 = vunpack.c.h.b16 %v550
        %v1299 = vunpack.c.l.b16 %v551
        %v1300 = vunpack.c.h.b16 %v551
        %v1301 = vunpack.c.l.b16 %v552
        %v1302 = vunpack.c.h.b16 %v552
        %v1303 = vunpack.c.l.b16 %v553
        %v1304 = vunpack.c.h.b16 %v553
        %v1305 = vunpack.c.l.b16 %v554
        %v1306 = vunpack.c.h.b16 %v554
        %v1307 = vunpack.c.l.b16 %v555
        %v1308 = vunpack.c.h.b16 %v555
        %v1309 = vunpack.c.l.b16 %v556
        %v1310 = vunpack.c.h.b16 %v556
        %v1311 = vunpack.c.l.b16 %v557
        %v1312 = vunpack.c.h.b16 %v557
        %v1313 = vunpack.c.l.b16 %v558
        %v1314 = vunpack.c.h.b16 %v558
        %v1315 = vunpack.c.l.b16 %v559
        %v1316 = vunpack.c.h.b16 %v559
        %v1317 = vunpack.c.l.b16 %v560
        %v1318 = vunpack.c.h.b16 %v560
        %v1319 = vunpack.c.l.b16 %v561
        %v1320 = vunpack.c.h.b16 %v561
        %v1321 = vunpack.c.l.b16 %v562
        %v1322 = vunpack.c.h.b16 %v562
        %v1323 = vunpack.c.l.b16 %v563
        %v1324 = vunpack.c.h.b16 %v563
        %v1325 = vunpack.c.l.b16 %v564
        %v1326 = vunpack.c.h.b16 %v564
        %v1327 = vunpack.c.l.b16 %v565
        %v1328 = vunpack.c.h.b16 %v565
        %v1329 = vunpack.c.l.b16 %v566
        %v1330 = vunpack.c.h.b16 %v566
        %v1331 = vunpack.c.l.b16 %v567
        %v1332 = vunpack.c.h.b16 %v567
        %v1333 = vunpack.c.l.b16 %v568
        %v1334 = vunpack.c.h.b16 %v568
        %v1335 = vunpack.c.l.b16 %v569
        %v1336 = vunpack.c.h.b16 %v569
        %v1337 = vunpack.c.l.b16 %v570
        %v1338 = vunpack.c.h.b16 %v570
        %v1339 = vunpack.c.l.b16 %v571
        %v1340 = vunpack.c.h.b16 %v571
        %v1341 = vunpack.c.l.b16 %v572
        %v1342 = vunpack.c.h.b16 %v572
        %v1343 = vunpack.c.l.b16 %v573
        %v1344 = vunpack.c.h.b16 %v573
        %v1345 = vunpack.c.l.b16 %v574
        %v1346 = vunpack.c.h.b16 %v574
        %v1347 = vunpack.c.l.b16 %v575
        %v1348 = vunpack.c.h.b16 %v575
        %v1349 = vunpack.c.l.b16 %v576
        %v1350 = vunpack.c.h.b16 %v576
        %v1351 = vunpack.c.l.b16 %v577
        %v1352 = vunpack.c.h.b16 %v577
        %v1353 = vunpack.c.l.b16 %v578
        %v1354 = vunpack.c.h.b16 %v578
        %v1355 = vunpack.c.l.b16 %v579
        %v1356 = vunpack.c.h.b16 %v579
        %v1357 = vunpack.c.l.b16 %v580
        %v1358 = vunpack.c.h.b16 %v580
        %v1359 = vunpack.c.l.b16 %v581
        %v1360 = vunpack.c.h.b16 %v581
        %v1361 = vunpack.c.l.b16 %v582
        %v1362 = vunpack.c.h.b16 %v582
        %v1363 = vunpack.c.l.b16 %v583
        %v1364 = vunpack.c.h.b16 %v583
        %v1365 = vunpack.c.l.b16 %v584
        %v1366 = vunpack.c.h.b16 %v584
        %v1367 = vunpack.c.l.b16 %v585
        %v1368 = vunpack.c.h.b16 %v585
        %v1369 = vunpack.c.l.b16 %v586
        %v1370 = vunpack.c.h.b16 %v586
        %v1371 = vunpack.c.l.b16 %v587
        %v1372 = vunpack.c.h.b16 %v587
        %v1373 = vunpack.c.l.b16 %v588
        %v1374 = vunpack.c.h.b16 %v588
        %v1375 = vunpack.c.l.b16 %v589
        %v1376 = vunpack.c.h.b16 %v589
        %v1377 = vunpack.c.l.b16 %v590
        %v1378 = vunpack.c.h.b16 %v590
        %v1379 = vunpack.c.l.b16 %v591
        %v1380 = vunpack.c.h.b16 %v591
        %v1381 = vunpack.c.l.b16 %v592
        %v1382 = vunpack.c.h.b16 %v592
        %v1383 = vunpack.c.l.b16 %v593
        %v1384 = vunpack.c.h.b16 %v593
        %v1385 = vunpack.c.l.b16 %v594
        %v1386 = vunpack.c.h.b16 %v594
        %v1387 = vunpack.c.l.b16 %v595
        %v1388 = vunpack.c.h.b16 %v595
        %v1389 = vunpack.c.l.b16 %v596
        %v1390 = vunpack.c.h.b16 %v596
        %v1391 = vunpack.c.l.b16 %v597
        %v1392 = vunpack.c.h.b16 %v597
        %v1393 = vunpack.c.l.b16 %v598
        %v1394 = vunpack.c.h.b16 %v598
        %v1395 = vunpack.c.l.b16 %v599
        %v1396 = vunpack.c.h.b16 %v599
        %v1397 = vunpack.c.l.b16 %v600
        %v1398 = vunpack.c.h.b16 %v600
        %v1399 = vunpack.c.l.b16 %v601
        %v1400 = vunpack.c.h.b16 %v601
        %v1401 = vunpack.c.l.b16 %v602
        %v1402 = vunpack.c.h.b16 %v602
        %v1403 = vunpack.c.l.b16 %v603
        %v1404 = vunpack.c.h.b16 %v603
        %v1405 = vunpack.c.l.b16 %v604
        %v1406 = vunpack.c.h.b16 %v604
        %v1407 = vunpack.c.l.b16 %v605
        %v1408 = vunpack.c.h.b16 %v605
        %v1409 = vunpack.c.l.b16 %v606
        %v1410 = vunpack.c.h.b16 %v606
        %v1411 = vunpack.c.l.b16 %v607
        %v1412 = vunpack.c.h.b16 %v607
        %v1413 = vunpack.c.l.b16 %v608
        %v1414 = vunpack.c.h.b16 %v608
        %v1415 = vunpack.c.l.b16 %v609
        %v1416 = vunpack.c.h.b16 %v609
        %v1417 = vunpack.c.l.b16 %v610
        %v1418 = vunpack.c.h.b16 %v610
        %v1419 = vunpack.c.l.b16 %v611
        %v1420 = vunpack.c.h.b16 %v611
        %v1421 = vunpack.c.l.b16 %v612
        %v1422 = vunpack.c.h.b16 %v612
        %v1423 = vunpack.c.l.b16 %v613
        %v1424 = vunpack.c.h.b16 %v613
        %v1425 = vunpack.c.l.b16 %v614
        %v1426 = vunpack.c.h.b16 %v614
        %v1427 = vunpack.c.l.b16 %v615
        %v1428 = vunpack.c.h.b16 %v615
        %v1429 = vunpack.c.l.b16 %v616
        %v1430 = vunpack.c.h.b16 %v616
        %v1431 = vunpack.c.l.b16 %v617
        %v1432 = vunpack.c.h.b16 %v617
        %v1433 = vunpack.c.l.b16 %v618
        %v1434 = vunpack.c.h.b16 %v618
        %v1435 = vunpack.c.l.b16 %v619
        %v1436 = vunpack.c.h.b16 %v619
        %v1437 = vunpack.c.l.b16 %v620
        %v1438 = vunpack.c.h.b16 %v620
        %v1439 = vunpack.c.l.b16 %v621
        %v1440 = vunpack.c.h.b16 %v621
        %v1441 = vunpack.c.l.b16 %v622
        %v1442 = vunpack.c.h.b16 %v622
        %v1443 = vunpack.c.l.b16 %v623
        %v1444 = vunpack.c.h.b16 %v623
        %v1445 = vunpack.c.l.b16 %v624
        %v1446 = vunpack.c.h.b16 %v624
        %v1447 = vunpack.c.l.b16 %v625
        %v1448 = vunpack.c.h.b16 %v625
        %v1449 = vunpack.c.l.b16 %v626
        %v1450 = vunpack.c.h.b16 %v626
        %v1451 = vunpack.c.l.b16 %v627
        %v1452 = vunpack.c.h.b16 %v627
        %v1453 = vunpack.c.l.b16 %v628
        %v1454 = vunpack.c.h.b16 %v628
        %v1455 = vunpack.c.l.b16 %v629
        %v1456 = vunpack.c.h.b16 %v629
        %v1457 = vunpack.c.l.b16 %v630
        %v1458 = vunpack.c.h.b16 %v630
        %v1459 = vunpack.c.l.b16 %v631
        %v1460 = vunpack.c.h.b16 %v631
        %v1461 = vunpack.c.l.b16 %v632
        %v1462 = vunpack.c.h.b16 %v632
        %v1463 = vunpack.c.l.b16 %v633
        %v1464 = vunpack.c.h.b16 %v633
        %v1465 = vunpack.c.l.b16 %v634
        %v1466 = vunpack.c.h.b16 %v634
        %v1467 = vunpack.c.l.b16 %v635
        %v1468 = vunpack.c.h.b16 %v635
        %v1469 = vunpack.c.l.b16 %v636
        %v1470 = vunpack.c.h.b16 %v636
        %v1471 = vunpack.c.l.b16 %v637
        %v1472 = vunpack.c.h.b16 %v637
        %v1473 = vunpack.c.l.b16 %v638
        %v1474 = vunpack.c.h.b16 %v638
        %v1475 = vunpack.c.l.b16 %v639
        %v1476 = vunpack.c.h.b16 %v639
        %v1477 = vunpack.c.l.b16 %v640
        %v1478 = vunpack.c.h.b16 %v640
        %v1479 = vunpack.c.l.b16 %v641
        %v1480 = vunpack.c.h.b16 %v641
        %v1481 = vunpack.c.l.b16 %v642
        %v1482 = vunpack.c.h.b16 %v642
        %v1483 = vunpack.c.l.b16 %v643
        %v1484 = vunpack.c.h.b16 %v643
        %v1485 = vunpack.c.l.b16 %v644
        %v1486 = vunpack.c.h.b16 %v644
        %v1487 = vunpack.c.l.b16 %v645
        %v1488 = vunpack.c.h.b16 %v645
        %v1489 = vunpack.c.l.b16 %v646
        %v1490 = vunpack.c.h.b16 %v646
        %v1491 = vunpack.c.l.b16 %v647
        %v1492 = vunpack.c.h.b16 %v647
        %v1493 = vunpack.c.l.b16 %v648
        %v1494 = vunpack.c.h.b16 %v648
        %v1495 = vunpack.c.l.b16 %v649
        %v1496 = vunpack.c.h.b16 %v649
        %v1497 = vunpack.c.l.b16 %v650
        %v1498 = vunpack.c.h.b16 %v650
        %v1499 = vpack.c.b16 %v1003, %v987
        %v1500 = vpack.c.b16 %v1004, %v988
        %v1501 = vpack.c.b16 %v1005, %v989
        %v1502 = vpack.c.b16 %v1006, %v990
        %v1503 = vpack.c.b16 %v1007, %v991
        %v1504 = vpack.c.b16 %v1008, %v992
        %v1505 = vpack.c.b16 %v1009, %v993
        %v1506 = vpack.c.b16 %v1010, %v994
        %v1507 = vpack.c.b16 %v1011, %v995
        %v1508 = vpack.c.b16 %v1012, %v996
        %v1509 = vpack.c.b16 %v1013, %v997
        %v1510 = vpack.c.b16 %v1014, %v998
        %v1511 = vpack.c.b16 %v1015, %v999
        %v1512 = vpack.c.b16 %v1016, %v1000
        %v1513 = vpack.c.b16 %v1017, %v1001
        %v1514 = vpack.c.b16 %v1018, %v1002
        %v1515 = vpack.c.b16 %v1035, %v1019
        %v1516 = vpack.c.b16 %v1036, %v1020
        %v1517 = vpack.c.b16 %v1037, %v1021
        %v1518 = vpack.c.b16 %v1038, %v1022
        %v1519 = vpack.c.b16 %v1039, %v1023
        %v1520 = vpack.c.b16 %v1040, %v1024
        %v1521 = vpack.c.b16 %v1041, %v1025
        %v1522 = vpack.c.b16 %v1042, %v1026
        %v1523 = vpack.c.b16 %v1043, %v1027
        %v1524 = vpack.c.b16 %v1044, %v1028
        %v1525 = vpack.c.b16 %v1045, %v1029
        %v1526 = vpack.c.b16 %v1046, %v1030
        %v1527 = vpack.c.b16 %v1047, %v1031
        %v1528 = vpack.c.b16 %v1048, %v1032
        %v1529 = vpack.c.b16 %v1049, %v1033
        %v1530 = vpack.c.b16 %v1050, %v1034
        %v1531 = vpack.c.b16 %v1067, %v1051
        %v1532 = vpack.c.b16 %v1068, %v1052
        %v1533 = vpack.c.b16 %v1069, %v1053
        %v1534 = vpack.c.b16 %v1070, %v1054
        %v1535 = vpack.c.b16 %v1071, %v1055
        %v1536 = vpack.c.b16 %v1072, %v1056
        %v1537 = vpack.c.b16 %v1073, %v1057
        %v1538 = vpack.c.b16 %v1074, %v1058
        %v1539 = vpack.c.b16 %v1075, %v1059
        %v1540 = vpack.c.b16 %v1076, %v1060
        %v1541 = vpack.c.b16 %v1077, %v1061
        %v1542 = vpack.c.b16 %v1078, %v1062
        %v1543 = vpack.c.b16 %v1079, %v1063
        %v1544 = vpack.c.b16 %v1080, %v1064
        %v1545 = vpack.c.b16 %v1081, %v1065
        %v1546 = vpack.c.b16 %v1082, %v1066
        %v1547 = vpack.c.b16 %v1099, %v1083
        %v1548 = vpack.c.b16 %v1100, %v1084
        %v1549 = vpack.c.b16 %v1101, %v1085
        %v1550 = vpack.c.b16 %v1102, %v1086
        %v1551 = vpack.c.b16 %v1103, %v1087
        %v1552 = vpack.c.b16 %v1104, %v1088
        %v1553 = vpack.c.b16 %v1105, %v1089
        %v1554 = vpack.c.b16 %v1106, %v1090
        %v1555 = vpack.c.b16 %v1107, %v1091
        %v1556 = vpack.c.b16 %v1108, %v1092
        %v1557 = vpack.c.b16 %v1109, %v1093
        %v1558 = vpack.c.b16 %v1110, %v1094
        %v1559 = vpack.c.b16 %v1111, %v1095
        %v1560 = vpack.c.b16 %v1112, %v1096
        %v1561 = vpack.c.b16 %v1113, %v1097
        %v1562 = vpack.c.b16 %v1114, %v1098
        %v1563 = vpack.c.b16 %v1131, %v1115
        %v1564 = vpack.c.b16 %v1132, %v1116
        %v1565 = vpack.c.b16 %v1133, %v1117
        %v1566 = vpack.c.b16 %v1134, %v1118
        %v1567 = vpack.c.b16 %v1135, %v1119
        %v1568 = vpack.c.b16 %v1136, %v1120
        %v1569 = vpack.c.b16 %v1137, %v1121
        %v1570 = vpack.c.b16 %v1138, %v1122
        %v1571 = vpack.c.b16 %v1139, %v1123
        %v1572 = vpack.c.b16 %v1140, %v1124
        %v1573 = vpack.c.b16 %v1141, %v1125
        %v1574 = vpack.c.b16 %v1142, %v1126
        %v1575 = vpack.c.b16 %v1143, %v1127
        %v1576 = vpack.c.b16 %v1144, %v1128
        %v1577 = vpack.c.b16 %v1145, %v1129
        %v1578 = vpack.c.b16 %v1146, %v1130
        %v1579 = vpack.c.b16 %v1163, %v1147
        %v1580 = vpack.c.b16 %v1164, %v1148
        %v1581 = vpack.c.b16 %v1165, %v1149
        %v1582 = vpack.c.b16 %v1166, %v1150
        %v1583 = vpack.c.b16 %v1167, %v1151
        %v1584 = vpack.c.b16 %v1168, %v1152
        %v1585 = vpack.c.b16 %v1169, %v1153
        %v1586 = vpack.c.b16 %v1170, %v1154
        %v1587 = vpack.c.b16 %v1171, %v1155
        %v1588 = vpack.c.b16 %v1172, %v1156
        %v1589 = vpack.c.b16 %v1173, %v1157
        %v1590 = vpack.c.b16 %v1174, %v1158
        %v1591 = vpack.c.b16 %v1175, %v1159
        %v1592 = vpack.c.b16 %v1176, %v1160
        %v1593 = vpack.c.b16 %v1177, %v1161
        %v1594 = vpack.c.b16 %v1178, %v1162
        %v1595 = vpack.c.b16 %v1195, %v1179
        %v1596 = vpack.c.b16 %v1196, %v1180
        %v1597 = vpack.c.b16 %v1197, %v1181
        %v1598 = vpack.c.b16 %v1198, %v1182
        %v1599 = vpack.c.b16 %v1199, %v1183
        %v1600 = vpack.c.b16 %v1200, %v1184
        %v1601 = vpack.c.b16 %v1201, %v1185
        %v1602 = vpack.c.b16 %v1202, %v1186
        %v1603 = vpack.c.b16 %v1203, %v1187
        %v1604 = vpack.c.b16 %v1204, %v1188
        %v1605 = vpack.c.b16 %v1205, %v1189
        %v1606 = vpack.c.b16 %v1206, %v1190
        %v1607 = vpack.c.b16 %v1207, %v1191
        %v1608 = vpack.c.b16 %v1208, %v1192
        %v1609 = vpack.c.b16 %v1209, %v1193
        %v1610 = vpack.c.b16 %v1210, %v1194
        %v1611 = vpack.c.b16 %v1227, %v1211
        %v1612 = vpack.c.b16 %v1228, %v1212
        %v1613 = vpack.c.b16 %v1229, %v1213
        %v1614 = vpack.c.b16 %v1230, %v1214
        %v1615 = vpack.c.b16 %v1231, %v1215
        %v1616 = vpack.c.b16 %v1232, %v1216
        %v1617 = vpack.c.b16 %v1233, %v1217
        %v1618 = vpack.c.b16 %v1234, %v1218
        %v1619 = vpack.c.b16 %v1235, %v1219
        %v1620 = vpack.c.b16 %v1236, %v1220
        %v1621 = vpack.c.b16 %v1237, %v1221
        %v1622 = vpack.c.b16 %v1238, %v1222
        %v1623 = vpack.c.b16 %v1239, %v1223
        %v1624 = vpack.c.b16 %v1240, %v1224
        %v1625 = vpack.c.b16 %v1241, %v1225
        %v1626 = vpack.c.b16 %v1242, %v1226
        %v1627 = vpack.c.b16 %v1259, %v1243
        %v1628 = vpack.c.b16 %v1260, %v1244
        %v1629 = vpack.c.b16 %v1261, %v1245
        %v1630 = vpack.c.b16 %v1262, %v1246
        %v1631 = vpack.c.b16 %v1263, %v1247
        %v1632 = vpack.c.b16 %v1264, %v1248
        %v1633 = vpack.c.b16 %v1265, %v1249
        %v1634 = vpack.c.b16 %v1266, %v1250
        %v1635 = vpack.c.b16 %v1267, %v1251
        %v1636 = vpack.c.b16 %v1268, %v1252
        %v1637 = vpack.c.b16 %v1269, %v1253
        %v1638 = vpack.c.b16 %v1270, %v1254
        %v1639 = vpack.c.b16 %v1271, %v1255
        %v1640 = vpack.c.b16 %v1272, %v1256
        %v1641 = vpack.c.b16 %v1273, %v1257
        %v1642 = vpack.c.b16 %v1274, %v1258
        %v1643 = vpack.c.b16 %v1291, %v1275
        %v1644 = vpack.c.b16 %v1292, %v1276
        %v1645 = vpack.c.b16 %v1293, %v1277
        %v1646 = vpack.c.b16 %v1294, %v1278
        %v1647 = vpack.c.b16 %v1295, %v1279
        %v1648 = vpack.c.b16 %v1296, %v1280
        %v1649 = vpack.c.b16 %v1297, %v1281
        %v1650 = vpack.c.b16 %v1298, %v1282
        %v1651 = vpack.c.b16 %v1299, %v1283
        %v1652 = vpack.c.b16 %v1300, %v1284
        %v1653 = vpack.c.b16 %v1301, %v1285
        %v1654 = vpack.c.b16 %v1302, %v1286
        %v1655 = vpack.c.b16 %v1303, %v1287
        %v1656 = vpack.c.b16 %v1304, %v1288
        %v1657 = vpack.c.b16 %v1305, %v1289
        %v1658 = vpack.c.b16 %v1306, %v1290
        %v1659 = vpack.c.b16 %v1323, %v1307
        %v1660 = vpack.c.b16 %v1324, %v1308
        %v1661 = vpack.c.b16 %v1325, %v1309
        %v1662 = vpack.c.b16 %v1326, %v1310
        %v1663 = vpack.c.b16 %v1327, %v1311
        %v1664 = vpack.c.b16 %v1328, %v1312
        %v1665 = vpack.c.b16 %v1329, %v1313
        %v1666 = vpack.c.b16 %v1330, %v1314
        %v1667 = vpack.c.b16 %v1331, %v1315
        %v1668 = vpack.c.b16 %v1332, %v1316
        %v1669 = vpack.c.b16 %v1333, %v1317
        %v1670 = vpack.c.b16 %v1334, %v1318
        %v1671 = vpack.c.b16 %v1335, %v1319
        %v1672 = vpack.c.b16 %v1336, %v1320
        %v1673 = vpack.c.b16 %v1337, %v1321
        %v1674 = vpack.c.b16 %v1338, %v1322
        %v1675 = vpack.c.b16 %v1355, %v1339
        %v1676 = vpack.c.b16 %v1356, %v1340
        %v1677 = vpack.c.b16 %v1357, %v1341
        %v1678 = vpack.c.b16 %v1358, %v1342
        %v1679 = vpack.c.b16 %v1359, %v1343
        %v1680 = vpack.c.b16 %v1360, %v1344
        %v1681 = vpack.c.b16 %v1361, %v1345
        %v1682 = vpack.c.b16 %v1362, %v1346
        %v1683 = vpack.c.b16 %v1363, %v1347
        %v1684 = vpack.c.b16 %v1364, %v1348
        %v1685 = vpack.c.b16 %v1365, %v1349
        %v1686 = vpack.c.b16 %v1366, %v1350
        %v1687 = vpack.c.b16 %v1367, %v1351
        %v1688 = vpack.c.b16 %v1368, %v1352
        %v1689 = vpack.c.b16 %v1369, %v1353
        %v1690 = vpack.c.b16 %v1370, %v1354
        %v1691 = vpack.c.b16 %v1387, %v1371
        %v1692 = vpack.c.b16 %v1388, %v1372
        %v1693 = vpack.c.b16 %v1389, %v1373
        %v1694 = vpack.c.b16 %v1390, %v1374
        %v1695 = vpack.c.b16 %v1391, %v1375
        %v1696 = vpack.c.b16 %v1392, %v1376
        %v1697 = vpack.c.b16 %v1393, %v1377
        %v1698 = vpack.c.b16 %v1394, %v1378
        %v1699 = vpack.c.b16 %v1395, %v1379
        %v1700 = vpack.c.b16 %v1396, %v1380
        %v1701 = vpack.c.b16 %v1397, %v1381
        %v1702 = vpack.c.b16 %v1398, %v1382
        %v1703 = vpack.c.b16 %v1399, %v1383
        %v1704 = vpack.c.b16 %v1400, %v1384
        %v1705 = vpack.c.b16 %v1401, %v1385
        %v1706 = vpack.c.b16 %v1402, %v1386
        %v1707 = vpack.c.b16 %v1419, %v1403
        %v1708 = vpack.c.b16 %v1420, %v1404
        %v1709 = vpack.c.b16 %v1421, %v1405
        %v1710 = vpack.c.b16 %v1422, %v1406
        %v1711 = vpack.c.b16 %v1423, %v1407
        %v1712 = vpack.c.b16 %v1424, %v1408
        %v1713 = vpack.c.b16 %v1425, %v1409
        %v1714 = vpack.c.b16 %v1426, %v1410
        %v1715 = vpack.c.b16 %v1427, %v1411
        %v1716 = vpack.c.b16 %v1428, %v1412
        %v1717 = vpack.c.b16 %v1429, %v1413
        %v1718 = vpack.c.b16 %v1430, %v1414
        %v1719 = vpack.c.b16 %v1431, %v1415
        %v1720 = vpack.c.b16 %v1432, %v1416
        %v1721 = vpack.c.b16 %v1433, %v1417
        %v1722 = vpack.c.b16 %v1434, %v1418
        %v1723 = vpack.c.b16 %v1451, %v1435
        %v1724 = vpack.c.b16 %v1452, %v1436
        %v1725 = vpack.c.b16 %v1453, %v1437
        %v1726 = vpack.c.b16 %v1454, %v1438
        %v1727 = vpack.c.b16 %v1455, %v1439
        %v1728 = vpack.c.b16 %v1456, %v1440
        %v1729 = vpack.c.b16 %v1457, %v1441
        %v1730 = vpack.c.b16 %v1458, %v1442
        %v1731 = vpack.c.b16 %v1459, %v1443
        %v1732 = vpack.c.b16 %v1460, %v1444
        %v1733 = vpack.c.b16 %v1461, %v1445
        %v1734 = vpack.c.b16 %v1462, %v1446
        %v1735 = vpack.c.b16 %v1463, %v1447
        %v1736 = vpack.c.b16 %v1464, %v1448
        %v1737 = vpack.c.b16 %v1465, %v1449
        %v1738 = vpack.c.b16 %v1466, %v1450
        %v1739 = vpack.c.b16 %v1483, %v1467
        %v1740 = vpack.c.b16 %v1484, %v1468
        %v1741 = vpack.c.b16 %v1485, %v1469
        %v1742 = vpack.c.b16 %v1486, %v1470
        %v1743 = vpack.c.b16 %v1487, %v1471
        %v1744 = vpack.c.b16 %v1488, %v1472
        %v1745 = vpack.c.b16 %v1489, %v1473
        %v1746 = vpack.c.b16 %v1490, %v1474
        %v1747 = vpack.c.b16 %v1491, %v1475
        %v1748 = vpack.c.b16 %v1492, %v1476
        %v1749 = vpack.c.b16 %v1493, %v1477
        %v1750 = vpack.c.b16 %v1494, %v1478
        %v1751 = vpack.c.b16 %v1495, %v1479
        %v1752 = vpack.c.b16 %v1496, %v1480
        %v1753 = vpack.c.b16 %v1497, %v1481
        %v1754 = vpack.c.b16 %v1498, %v1482
        %2011 = vmatprep.subr.bf16.mxu0 %v1612
        %2012 = vmatpush1.bf16.msra.mxu0 %v1611
        %2013 = vmatprep.subr.bf16.mxu0 %v1596
        %2014 = vmatpush1.bf16.msra.mxu0 %v1595
        %2015 = vmatprep.subr.bf16.mxu0 %v1580
        %2016 = vmatpush1.bf16.msra.mxu0 %v1579
        %2017 = vmatprep.subr.bf16.mxu0 %v1564
        %2018 = vmatpush1.bf16.msra.mxu0 %v1563
        %2019 = vmatprep.subr.bf16.mxu0 %v1548
        %2020 = vmatpush1.bf16.msra.mxu0 %v1547
        %2021 = vmatprep.subr.bf16.mxu0 %v1532
        %2022 = vmatpush1.bf16.msra.mxu0 %v1531
        %2023 = vmatprep.subr.bf16.mxu0 %v1516
        %2024 = vmatpush1.bf16.msra.mxu0 %v1515
        %2025 = vmatprep.subr.bf16.mxu0 %v1500
        %2026 = vmatpush1.bf16.msra.mxu0 %v1499
        %2027 = vmatprep.subr.bf16.mxu0 %v1740
        %2028 = vmatpush2.bf16.msra.mxu0 %v1739
        %2029 = vmatprep.subr.bf16.mxu0 %v1724
        %2030 = vmatpush2.bf16.msra.mxu0 %v1723
        %2031 = vmatprep.subr.bf16.mxu0 %v1708
        %2032 = vmatpush2.bf16.msra.mxu0 %v1707
        %2033 = vmatprep.subr.bf16.mxu0 %v1692
        %2034 = vmatpush2.bf16.msra.mxu0 %v1691
        %2035 = vmatprep.subr.bf16.mxu0 %v1676
        %2036 = vmatpush2.bf16.msra.mxu0 %v1675
        %2037 = vmatprep.subr.bf16.mxu0 %v1660
        %2038 = vmatpush2.bf16.msra.mxu0 %v1659
        %2039 = vmatprep.subr.bf16.mxu0 %v1644
        %2040 = vmatpush2.bf16.msra.mxu0 %v1643
        %2041 = vmatprep.subr.bf16.mxu0 %v1628
        %2042 = vmatpush2.bf16.msra.mxu0 %v1627
        %2043 = vmatprep.mubr.bf16.mxu0 %v700
        %2044 = vmatmul.mubr.bf16.gmra.mxu0 %v699
        %v2045 = vpop.f32.mrf.mxu0
        %v2046 = vadd.f32 0.0, %v2045
        %v2047 = vpop.f32.mrf.mxu0
        %v2048 = vadd.f32 0.0, %v2047
        %v2049 = vpop.f32.mrf.mxu0
        %v2050 = vadd.f32 0.0, %v2049
        %v2051 = vpop.f32.mrf.mxu0
        %v2052 = vadd.f32 0.0, %v2051
        %2053 = vmatprep.mubr.bf16.mxu0 %v702
        %2054 = vmatmul.mubr.bf16.gmra.mxu0 %v701
        %v2055 = vpop.f32.mrf.mxu0
        %v2056 = vadd.f32 0.0, %v2055
        %v2057 = vpop.f32.mrf.mxu0
        %v2058 = vadd.f32 0.0, %v2057
        %v2059 = vpop.f32.mrf.mxu0
        %v2060 = vadd.f32 0.0, %v2059
        %v2061 = vpop.f32.mrf.mxu0
        %v2062 = vadd.f32 0.0, %v2061
        %2063 = vmatprep.mubr.bf16.mxu0 %v704
        %2064 = vmatmul.mubr.bf16.gmra.mxu0 %v703
        %v2065 = vpop.f32.mrf.mxu0
        %v2066 = vadd.f32 0.0, %v2065
        %v2067 = vpop.f32.mrf.mxu0
        %v2068 = vadd.f32 0.0, %v2067
        %v2069 = vpop.f32.mrf.mxu0
        %v2070 = vadd.f32 0.0, %v2069
        %v2071 = vpop.f32.mrf.mxu0
        %v2072 = vadd.f32 0.0, %v2071
        %2073 = vmatprep.mubr.bf16.mxu0 %v706
        %2074 = vmatmul.mubr.bf16.gmra.mxu0 %v705
        %v2075 = vpop.f32.mrf.mxu0
        %v2076 = vadd.f32 0.0, %v2075
        %v2077 = vpop.f32.mrf.mxu0
        %v2078 = vadd.f32 0.0, %v2077
        %v2079 = vpop.f32.mrf.mxu0
        %v2080 = vadd.f32 0.0, %v2079
        %v2081 = vpop.f32.mrf.mxu0
        %v2082 = vadd.f32 0.0, %v2081
        %2083 = vmatprep.mubr.bf16.mxu0 %v708
        %2084 = vmatmul.mubr.bf16.gmra.mxu0 %v707
        %v2085 = vpop.f32.mrf.mxu0
        %v2086 = vadd.f32 0.0, %v2085
        %v2087 = vpop.f32.mrf.mxu0
        %v2088 = vadd.f32 0.0, %v2087
        %v2089 = vpop.f32.mrf.mxu0
        %v2090 = vadd.f32 0.0, %v2089
        %v2091 = vpop.f32.mrf.mxu0
        %v2092 = vadd.f32 0.0, %v2091
        %2093 = vmatprep.mubr.bf16.mxu0 %v710
        %2094 = vmatmul.mubr.bf16.gmra.mxu0 %v709
        %v2095 = vpop.f32.mrf.mxu0
        %v2096 = vadd.f32 0.0, %v2095
        %v2097 = vpop.f32.mrf.mxu0
        %v2098 = vadd.f32 0.0, %v2097
        %v2099 = vpop.f32.mrf.mxu0
        %v2100 = vadd.f32 0.0, %v2099
        %v2101 = vpop.f32.mrf.mxu0
        %v2102 = vadd.f32 0.0, %v2101
        %2103 = vmatprep.mubr.bf16.mxu0 %v712
        %2104 = vmatmul.mubr.bf16.gmra.mxu0 %v711
        %v2105 = vpop.f32.mrf.mxu0
        %v2106 = vadd.f32 0.0, %v2105
        %v2107 = vpop.f32.mrf.mxu0
        %v2108 = vadd.f32 0.0, %v2107
        %v2109 = vpop.f32.mrf.mxu0
        %v2110 = vadd.f32 0.0, %v2109
        %v2111 = vpop.f32.mrf.mxu0
        %v2112 = vadd.f32 0.0, %v2111
        %2113 = vmatprep.mubr.bf16.mxu0 %v714
        %2114 = vmatmul.mubr.bf16.gmra.mxu0 %v713
        %v2115 = vpop.f32.mrf.mxu0
        %v2116 = vadd.f32 0.0, %v2115
        %v2117 = vpop.f32.mrf.mxu0
        %v2118 = vadd.f32 0.0, %v2117
        %v2119 = vpop.f32.mrf.mxu0
        %v2120 = vadd.f32 0.0, %v2119
        %v2121 = vpop.f32.mrf.mxu0
        %v2122 = vadd.f32 0.0, %v2121
        %2123 = vdwg.mxu0
        %2124 = vmatprep.subr.bf16.mxu0 %v1614
        %2125 = vmatpush1.bf16.msra.mxu0 %v1613
        %2126 = vmatprep.subr.bf16.mxu0 %v1598
        %2127 = vmatpush1.bf16.msra.mxu0 %v1597
        %2128 = vmatprep.subr.bf16.mxu0 %v1582
        %2129 = vmatpush1.bf16.msra.mxu0 %v1581
        %2130 = vmatprep.subr.bf16.mxu0 %v1566
        %2131 = vmatpush1.bf16.msra.mxu0 %v1565
        %2132 = vmatprep.subr.bf16.mxu0 %v1550
        %2133 = vmatpush1.bf16.msra.mxu0 %v1549
        %2134 = vmatprep.subr.bf16.mxu0 %v1534
        %2135 = vmatpush1.bf16.msra.mxu0 %v1533
        %2136 = vmatprep.subr.bf16.mxu0 %v1518
        %2137 = vmatpush1.bf16.msra.mxu0 %v1517
        %2138 = vmatprep.subr.bf16.mxu0 %v1502
        %2139 = vmatpush1.bf16.msra.mxu0 %v1501
        %2140 = vmatprep.subr.bf16.mxu0 %v1742
        %2141 = vmatpush2.bf16.msra.mxu0 %v1741
        %2142 = vmatprep.subr.bf16.mxu0 %v1726
        %2143 = vmatpush2.bf16.msra.mxu0 %v1725
        %2144 = vmatprep.subr.bf16.mxu0 %v1710
        %2145 = vmatpush2.bf16.msra.mxu0 %v1709
        %2146 = vmatprep.subr.bf16.mxu0 %v1694
        %2147 = vmatpush2.bf16.msra.mxu0 %v1693
        %2148 = vmatprep.subr.bf16.mxu0 %v1678
        %2149 = vmatpush2.bf16.msra.mxu0 %v1677
        %2150 = vmatprep.subr.bf16.mxu0 %v1662
        %2151 = vmatpush2.bf16.msra.mxu0 %v1661
        %2152 = vmatprep.subr.bf16.mxu0 %v1646
        %2153 = vmatpush2.bf16.msra.mxu0 %v1645
        %2154 = vmatprep.subr.bf16.mxu0 %v1630
        %2155 = vmatpush2.bf16.msra.mxu0 %v1629
        %2156 = vmatprep.mubr.bf16.mxu0 %v700
        %2157 = vmatmul.mubr.bf16.gmra.mxu0 %v699
        %v2158 = vpop.f32.mrf.mxu0
        %v2159 = vadd.f32 0.0, %v2158
        %v2160 = vpop.f32.mrf.mxu0
        %v2161 = vadd.f32 0.0, %v2160
        %v2162 = vpop.f32.mrf.mxu0
        %v2163 = vadd.f32 0.0, %v2162
        %v2164 = vpop.f32.mrf.mxu0
        %v2165 = vadd.f32 0.0, %v2164
        %2166 = vmatprep.mubr.bf16.mxu0 %v702
        %2167 = vmatmul.mubr.bf16.gmra.mxu0 %v701
        %v2168 = vpop.f32.mrf.mxu0
        %v2169 = vadd.f32 0.0, %v2168
        %v2170 = vpop.f32.mrf.mxu0
        %v2171 = vadd.f32 0.0, %v2170
        %v2172 = vpop.f32.mrf.mxu0
        %v2173 = vadd.f32 0.0, %v2172
        %v2174 = vpop.f32.mrf.mxu0
        %v2175 = vadd.f32 0.0, %v2174
        %2176 = vmatprep.mubr.bf16.mxu0 %v704
        %2177 = vmatmul.mubr.bf16.gmra.mxu0 %v703
        %v2178 = vpop.f32.mrf.mxu0
        %v2179 = vadd.f32 0.0, %v2178
        %v2180 = vpop.f32.mrf.mxu0
        %v2181 = vadd.f32 0.0, %v2180
        %v2182 = vpop.f32.mrf.mxu0
        %v2183 = vadd.f32 0.0, %v2182
        %v2184 = vpop.f32.mrf.mxu0
        %v2185 = vadd.f32 0.0, %v2184
        %2186 = vmatprep.mubr.bf16.mxu0 %v706
        %2187 = vmatmul.mubr.bf16.gmra.mxu0 %v705
        %v2188 = vpop.f32.mrf.mxu0
        %v2189 = vadd.f32 0.0, %v2188
        %v2190 = vpop.f32.mrf.mxu0
        %v2191 = vadd.f32 0.0, %v2190
        %v2192 = vpop.f32.mrf.mxu0
        %v2193 = vadd.f32 0.0, %v2192
        %v2194 = vpop.f32.mrf.mxu0
        %v2195 = vadd.f32 0.0, %v2194
        %2196 = vmatprep.mubr.bf16.mxu0 %v708
        %2197 = vmatmul.mubr.bf16.gmra.mxu0 %v707
        %v2198 = vpop.f32.mrf.mxu0
        %v2199 = vadd.f32 0.0, %v2198
        %v2200 = vpop.f32.mrf.mxu0
        %v2201 = vadd.f32 0.0, %v2200
        %v2202 = vpop.f32.mrf.mxu0
        %v2203 = vadd.f32 0.0, %v2202
        %v2204 = vpop.f32.mrf.mxu0
        %v2205 = vadd.f32 0.0, %v2204
        %2206 = vmatprep.mubr.bf16.mxu0 %v710
        %2207 = vmatmul.mubr.bf16.gmra.mxu0 %v709
        %v2208 = vpop.f32.mrf.mxu0
        %v2209 = vadd.f32 0.0, %v2208
        %v2210 = vpop.f32.mrf.mxu0
        %v2211 = vadd.f32 0.0, %v2210
        %v2212 = vpop.f32.mrf.mxu0
        %v2213 = vadd.f32 0.0, %v2212
        %v2214 = vpop.f32.mrf.mxu0
        %v2215 = vadd.f32 0.0, %v2214
        %2216 = vmatprep.mubr.bf16.mxu0 %v712
        %2217 = vmatmul.mubr.bf16.gmra.mxu0 %v711
        %v2218 = vpop.f32.mrf.mxu0
        %v2219 = vadd.f32 0.0, %v2218
        %v2220 = vpop.f32.mrf.mxu0
        %v2221 = vadd.f32 0.0, %v2220
        %v2222 = vpop.f32.mrf.mxu0
        %v2223 = vadd.f32 0.0, %v2222
        %v2224 = vpop.f32.mrf.mxu0
        %v2225 = vadd.f32 0.0, %v2224
        %2226 = vmatprep.mubr.bf16.mxu0 %v714
        %2227 = vmatmul.mubr.bf16.gmra.mxu0 %v713
        %v2228 = vpop.f32.mrf.mxu0
        %v2229 = vadd.f32 0.0, %v2228
        %v2230 = vpop.f32.mrf.mxu0
        %v2231 = vadd.f32 0.0, %v2230
        %v2232 = vpop.f32.mrf.mxu0
        %v2233 = vadd.f32 0.0, %v2232
        %v2234 = vpop.f32.mrf.mxu0
        %v2235 = vadd.f32 0.0, %v2234
        %2236 = vdwg.mxu0
        %2237 = vmatprep.subr.bf16.mxu0 %v1616
        %2238 = vmatpush1.bf16.msra.mxu0 %v1615
        %2239 = vmatprep.subr.bf16.mxu0 %v1600
        %2240 = vmatpush1.bf16.msra.mxu0 %v1599
        %2241 = vmatprep.subr.bf16.mxu0 %v1584
        %2242 = vmatpush1.bf16.msra.mxu0 %v1583
        %2243 = vmatprep.subr.bf16.mxu0 %v1568
        %2244 = vmatpush1.bf16.msra.mxu0 %v1567
        %2245 = vmatprep.subr.bf16.mxu0 %v1552
        %2246 = vmatpush1.bf16.msra.mxu0 %v1551
        %2247 = vmatprep.subr.bf16.mxu0 %v1536
        %2248 = vmatpush1.bf16.msra.mxu0 %v1535
        %2249 = vmatprep.subr.bf16.mxu0 %v1520
        %2250 = vmatpush1.bf16.msra.mxu0 %v1519
        %2251 = vmatprep.subr.bf16.mxu0 %v1504
        %2252 = vmatpush1.bf16.msra.mxu0 %v1503
        %2253 = vmatprep.subr.bf16.mxu0 %v1744
        %2254 = vmatpush2.bf16.msra.mxu0 %v1743
        %2255 = vmatprep.subr.bf16.mxu0 %v1728
        %2256 = vmatpush2.bf16.msra.mxu0 %v1727
        %2257 = vmatprep.subr.bf16.mxu0 %v1712
        %2258 = vmatpush2.bf16.msra.mxu0 %v1711
        %2259 = vmatprep.subr.bf16.mxu0 %v1696
        %2260 = vmatpush2.bf16.msra.mxu0 %v1695
        %2261 = vmatprep.subr.bf16.mxu0 %v1680
        %2262 = vmatpush2.bf16.msra.mxu0 %v1679
        %2263 = vmatprep.subr.bf16.mxu0 %v1664
        %2264 = vmatpush2.bf16.msra.mxu0 %v1663
        %2265 = vmatprep.subr.bf16.mxu0 %v1648
        %2266 = vmatpush2.bf16.msra.mxu0 %v1647
        %2267 = vmatprep.subr.bf16.mxu0 %v1632
        %2268 = vmatpush2.bf16.msra.mxu0 %v1631
        %2269 = vmatprep.mubr.bf16.mxu0 %v700
        %2270 = vmatmul.mubr.bf16.gmra.mxu0 %v699
        %v2271 = vpop.f32.mrf.mxu0
        %v2272 = vadd.f32 0.0, %v2271
        %v2273 = vpop.f32.mrf.mxu0
        %v2274 = vadd.f32 0.0, %v2273
        %v2275 = vpop.f32.mrf.mxu0
        %v2276 = vadd.f32 0.0, %v2275
        %v2277 = vpop.f32.mrf.mxu0
        %v2278 = vadd.f32 0.0, %v2277
        %2279 = vmatprep.mubr.bf16.mxu0 %v702
        %2280 = vmatmul.mubr.bf16.gmra.mxu0 %v701
        %v2281 = vpop.f32.mrf.mxu0
        %v2282 = vadd.f32 0.0, %v2281
        %v2283 = vpop.f32.mrf.mxu0
        %v2284 = vadd.f32 0.0, %v2283
        %v2285 = vpop.f32.mrf.mxu0
        %v2286 = vadd.f32 0.0, %v2285
        %v2287 = vpop.f32.mrf.mxu0
        %v2288 = vadd.f32 0.0, %v2287
        %2289 = vmatprep.mubr.bf16.mxu0 %v704
        %2290 = vmatmul.mubr.bf16.gmra.mxu0 %v703
        %v2291 = vpop.f32.mrf.mxu0
        %v2292 = vadd.f32 0.0, %v2291
        %v2293 = vpop.f32.mrf.mxu0
        %v2294 = vadd.f32 0.0, %v2293
        %v2295 = vpop.f32.mrf.mxu0
        %v2296 = vadd.f32 0.0, %v2295
        %v2297 = vpop.f32.mrf.mxu0
        %v2298 = vadd.f32 0.0, %v2297
        %2299 = vmatprep.mubr.bf16.mxu0 %v706
        %2300 = vmatmul.mubr.bf16.gmra.mxu0 %v705
        %v2301 = vpop.f32.mrf.mxu0
        %v2302 = vadd.f32 0.0, %v2301
        %v2303 = vpop.f32.mrf.mxu0
        %v2304 = vadd.f32 0.0, %v2303
        %v2305 = vpop.f32.mrf.mxu0
        %v2306 = vadd.f32 0.0, %v2305
        %v2307 = vpop.f32.mrf.mxu0
        %v2308 = vadd.f32 0.0, %v2307
        %2309 = vmatprep.mubr.bf16.mxu0 %v708
        %2310 = vmatmul.mubr.bf16.gmra.mxu0 %v707
        %v2311 = vpop.f32.mrf.mxu0
        %v2312 = vadd.f32 0.0, %v2311
        %v2313 = vpop.f32.mrf.mxu0
        %v2314 = vadd.f32 0.0, %v2313
        %v2315 = vpop.f32.mrf.mxu0
        %v2316 = vadd.f32 0.0, %v2315
        %v2317 = vpop.f32.mrf.mxu0
        %v2318 = vadd.f32 0.0, %v2317
        %2319 = vmatprep.mubr.bf16.mxu0 %v710
        %2320 = vmatmul.mubr.bf16.gmra.mxu0 %v709
        %v2321 = vpop.f32.mrf.mxu0
        %v2322 = vadd.f32 0.0, %v2321
        %v2323 = vpop.f32.mrf.mxu0
        %v2324 = vadd.f32 0.0, %v2323
        %v2325 = vpop.f32.mrf.mxu0
        %v2326 = vadd.f32 0.0, %v2325
        %v2327 = vpop.f32.mrf.mxu0
        %v2328 = vadd.f32 0.0, %v2327
        %2329 = vmatprep.mubr.bf16.mxu0 %v712
        %2330 = vmatmul.mubr.bf16.gmra.mxu0 %v711
        %v2331 = vpop.f32.mrf.mxu0
        %v2332 = vadd.f32 0.0, %v2331
        %v2333 = vpop.f32.mrf.mxu0
        %v2334 = vadd.f32 0.0, %v2333
        %v2335 = vpop.f32.mrf.mxu0
        %v2336 = vadd.f32 0.0, %v2335
        %v2337 = vpop.f32.mrf.mxu0
        %v2338 = vadd.f32 0.0, %v2337
        %2339 = vmatprep.mubr.bf16.mxu0 %v714
        %2340 = vmatmul.mubr.bf16.gmra.mxu0 %v713
        %v2341 = vpop.f32.mrf.mxu0
        %v2342 = vadd.f32 0.0, %v2341
        %v2343 = vpop.f32.mrf.mxu0
        %v2344 = vadd.f32 0.0, %v2343
        %v2345 = vpop.f32.mrf.mxu0
        %v2346 = vadd.f32 0.0, %v2345
        %v2347 = vpop.f32.mrf.mxu0
        %v2348 = vadd.f32 0.0, %v2347
        %2349 = vdwg.mxu0
        %2350 = vmatprep.subr.bf16.mxu0 %v1618
        %2351 = vmatpush1.bf16.msra.mxu0 %v1617
        %2352 = vmatprep.subr.bf16.mxu0 %v1602
        %2353 = vmatpush1.bf16.msra.mxu0 %v1601
        %2354 = vmatprep.subr.bf16.mxu0 %v1586
        %2355 = vmatpush1.bf16.msra.mxu0 %v1585
        %2356 = vmatprep.subr.bf16.mxu0 %v1570
        %2357 = vmatpush1.bf16.msra.mxu0 %v1569
        %2358 = vmatprep.subr.bf16.mxu0 %v1554
        %2359 = vmatpush1.bf16.msra.mxu0 %v1553
        %2360 = vmatprep.subr.bf16.mxu0 %v1538
        %2361 = vmatpush1.bf16.msra.mxu0 %v1537
        %2362 = vmatprep.subr.bf16.mxu0 %v1522
        %2363 = vmatpush1.bf16.msra.mxu0 %v1521
        %2364 = vmatprep.subr.bf16.mxu0 %v1506
        %2365 = vmatpush1.bf16.msra.mxu0 %v1505
        %2366 = vmatprep.subr.bf16.mxu0 %v1746
        %2367 = vmatpush2.bf16.msra.mxu0 %v1745
        %2368 = vmatprep.subr.bf16.mxu0 %v1730
        %2369 = vmatpush2.bf16.msra.mxu0 %v1729
        %2370 = vmatprep.subr.bf16.mxu0 %v1714
        %2371 = vmatpush2.bf16.msra.mxu0 %v1713
        %2372 = vmatprep.subr.bf16.mxu0 %v1698
        %2373 = vmatpush2.bf16.msra.mxu0 %v1697
        %2374 = vmatprep.subr.bf16.mxu0 %v1682
        %2375 = vmatpush2.bf16.msra.mxu0 %v1681
        %2376 = vmatprep.subr.bf16.mxu0 %v1666
        %2377 = vmatpush2.bf16.msra.mxu0 %v1665
        %2378 = vmatprep.subr.bf16.mxu0 %v1650
        %2379 = vmatpush2.bf16.msra.mxu0 %v1649
        %2380 = vmatprep.subr.bf16.mxu0 %v1634
        %2381 = vmatpush2.bf16.msra.mxu0 %v1633
        %2382 = vmatprep.mubr.bf16.mxu0 %v700
        %2383 = vmatmul.mubr.bf16.gmra.mxu0 %v699
        %v2384 = vpop.f32.mrf.mxu0
        %v2385 = vadd.f32 0.0, %v2384
        %v2386 = vpop.f32.mrf.mxu0
        %v2387 = vadd.f32 0.0, %v2386
        %v2388 = vpop.f32.mrf.mxu0
        %v2389 = vadd.f32 0.0, %v2388
        %v2390 = vpop.f32.mrf.mxu0
        %v2391 = vadd.f32 0.0, %v2390
        %2392 = vmatprep.mubr.bf16.mxu0 %v702
        %2393 = vmatmul.mubr.bf16.gmra.mxu0 %v701
        %v2394 = vpop.f32.mrf.mxu0
        %v2395 = vadd.f32 0.0, %v2394
        %v2396 = vpop.f32.mrf.mxu0
        %v2397 = vadd.f32 0.0, %v2396
        %v2398 = vpop.f32.mrf.mxu0
        %v2399 = vadd.f32 0.0, %v2398
        %v2400 = vpop.f32.mrf.mxu0
        %v2401 = vadd.f32 0.0, %v2400
        %2402 = vmatprep.mubr.bf16.mxu0 %v704
        %2403 = vmatmul.mubr.bf16.gmra.mxu0 %v703
        %v2404 = vpop.f32.mrf.mxu0
        %v2405 = vadd.f32 0.0, %v2404
        %v2406 = vpop.f32.mrf.mxu0
        %v2407 = vadd.f32 0.0, %v2406
        %v2408 = vpop.f32.mrf.mxu0
        %v2409 = vadd.f32 0.0, %v2408
        %v2410 = vpop.f32.mrf.mxu0
        %v2411 = vadd.f32 0.0, %v2410
        %2412 = vmatprep.mubr.bf16.mxu0 %v706
        %2413 = vmatmul.mubr.bf16.gmra.mxu0 %v705
        %v2414 = vpop.f32.mrf.mxu0
        %v2415 = vadd.f32 0.0, %v2414
        %v2416 = vpop.f32.mrf.mxu0
        %v2417 = vadd.f32 0.0, %v2416
        %v2418 = vpop.f32.mrf.mxu0
        %v2419 = vadd.f32 0.0, %v2418
        %v2420 = vpop.f32.mrf.mxu0
        %v2421 = vadd.f32 0.0, %v2420
        %2422 = vmatprep.mubr.bf16.mxu0 %v708
        %2423 = vmatmul.mubr.bf16.gmra.mxu0 %v707
        %v2424 = vpop.f32.mrf.mxu0
        %v2425 = vadd.f32 0.0, %v2424
        %v2426 = vpop.f32.mrf.mxu0
        %v2427 = vadd.f32 0.0, %v2426
        %v2428 = vpop.f32.mrf.mxu0
        %v2429 = vadd.f32 0.0, %v2428
        %v2430 = vpop.f32.mrf.mxu0
        %v2431 = vadd.f32 0.0, %v2430
        %2432 = vmatprep.mubr.bf16.mxu0 %v710
        %2433 = vmatmul.mubr.bf16.gmra.mxu0 %v709
        %v2434 = vpop.f32.mrf.mxu0
        %v2435 = vadd.f32 0.0, %v2434
        %v2436 = vpop.f32.mrf.mxu0
        %v2437 = vadd.f32 0.0, %v2436
        %v2438 = vpop.f32.mrf.mxu0
        %v2439 = vadd.f32 0.0, %v2438
        %v2440 = vpop.f32.mrf.mxu0
        %v2441 = vadd.f32 0.0, %v2440
        %2442 = vmatprep.mubr.bf16.mxu0 %v712
        %2443 = vmatmul.mubr.bf16.gmra.mxu0 %v711
        %v2444 = vpop.f32.mrf.mxu0
        %v2445 = vadd.f32 0.0, %v2444
        %v2446 = vpop.f32.mrf.mxu0
        %v2447 = vadd.f32 0.0, %v2446
        %v2448 = vpop.f32.mrf.mxu0
        %v2449 = vadd.f32 0.0, %v2448
        %v2450 = vpop.f32.mrf.mxu0
        %v2451 = vadd.f32 0.0, %v2450
        %2452 = vmatprep.mubr.bf16.mxu0 %v714
        %2453 = vmatmul.mubr.bf16.gmra.mxu0 %v713
        %v2454 = vpop.f32.mrf.mxu0
        %v2455 = vadd.f32 0.0, %v2454
        %v2456 = vpop.f32.mrf.mxu0
        %v2457 = vadd.f32 0.0, %v2456
        %v2458 = vpop.f32.mrf.mxu0
        %v2459 = vadd.f32 0.0, %v2458
        %v2460 = vpop.f32.mrf.mxu0
        %v2461 = vadd.f32 0.0, %v2460
        %2462 = vdwg.mxu0
        %2463 = vmatprep.subr.bf16.mxu0 %v1620
        %2464 = vmatpush1.bf16.msra.mxu0 %v1619
        %2465 = vmatprep.subr.bf16.mxu0 %v1604
        %2466 = vmatpush1.bf16.msra.mxu0 %v1603
        %2467 = vmatprep.subr.bf16.mxu0 %v1588
        %2468 = vmatpush1.bf16.msra.mxu0 %v1587
        %2469 = vmatprep.subr.bf16.mxu0 %v1572
        %2470 = vmatpush1.bf16.msra.mxu0 %v1571
        %2471 = vmatprep.subr.bf16.mxu0 %v1556
        %2472 = vmatpush1.bf16.msra.mxu0 %v1555
        %2473 = vmatprep.subr.bf16.mxu0 %v1540
        %2474 = vmatpush1.bf16.msra.mxu0 %v1539
        %2475 = vmatprep.subr.bf16.mxu0 %v1524
        %2476 = vmatpush1.bf16.msra.mxu0 %v1523
        %2477 = vmatprep.subr.bf16.mxu0 %v1508
        %2478 = vmatpush1.bf16.msra.mxu0 %v1507
        %2479 = vmatprep.subr.bf16.mxu0 %v1748
        %2480 = vmatpush2.bf16.msra.mxu0 %v1747
        %2481 = vmatprep.subr.bf16.mxu0 %v1732
        %2482 = vmatpush2.bf16.msra.mxu0 %v1731
        %2483 = vmatprep.subr.bf16.mxu0 %v1716
        %2484 = vmatpush2.bf16.msra.mxu0 %v1715
        %2485 = vmatprep.subr.bf16.mxu0 %v1700
        %2486 = vmatpush2.bf16.msra.mxu0 %v1699
        %2487 = vmatprep.subr.bf16.mxu0 %v1684
        %2488 = vmatpush2.bf16.msra.mxu0 %v1683
        %2489 = vmatprep.subr.bf16.mxu0 %v1668
        %2490 = vmatpush2.bf16.msra.mxu0 %v1667
        %2491 = vmatprep.subr.bf16.mxu0 %v1652
        %2492 = vmatpush2.bf16.msra.mxu0 %v1651
        %2493 = vmatprep.subr.bf16.mxu0 %v1636
        %2494 = vmatpush2.bf16.msra.mxu0 %v1635
        %2495 = vmatprep.mubr.bf16.mxu0 %v700
        %2496 = vmatmul.mubr.bf16.gmra.mxu0 %v699
        %v2497 = vpop.f32.mrf.mxu0
        %v2498 = vadd.f32 0.0, %v2497
        %v2499 = vpop.f32.mrf.mxu0
        %v2500 = vadd.f32 0.0, %v2499
        %v2501 = vpop.f32.mrf.mxu0
        %v2502 = vadd.f32 0.0, %v2501
        %v2503 = vpop.f32.mrf.mxu0
        %v2504 = vadd.f32 0.0, %v2503
        %2505 = vmatprep.mubr.bf16.mxu0 %v702
        %2506 = vmatmul.mubr.bf16.gmra.mxu0 %v701
        %v2507 = vpop.f32.mrf.mxu0
        %v2508 = vadd.f32 0.0, %v2507
        %v2509 = vpop.f32.mrf.mxu0
        %v2510 = vadd.f32 0.0, %v2509
        %v2511 = vpop.f32.mrf.mxu0
        %v2512 = vadd.f32 0.0, %v2511
        %v2513 = vpop.f32.mrf.mxu0
        %v2514 = vadd.f32 0.0, %v2513
        %2515 = vmatprep.mubr.bf16.mxu0 %v704
        %2516 = vmatmul.mubr.bf16.gmra.mxu0 %v703
        %v2517 = vpop.f32.mrf.mxu0
        %v2518 = vadd.f32 0.0, %v2517
        %v2519 = vpop.f32.mrf.mxu0
        %v2520 = vadd.f32 0.0, %v2519
        %v2521 = vpop.f32.mrf.mxu0
        %v2522 = vadd.f32 0.0, %v2521
        %v2523 = vpop.f32.mrf.mxu0
        %v2524 = vadd.f32 0.0, %v2523
        %2525 = vmatprep.mubr.bf16.mxu0 %v706
        %2526 = vmatmul.mubr.bf16.gmra.mxu0 %v705
        %v2527 = vpop.f32.mrf.mxu0
        %v2528 = vadd.f32 0.0, %v2527
        %v2529 = vpop.f32.mrf.mxu0
        %v2530 = vadd.f32 0.0, %v2529
        %v2531 = vpop.f32.mrf.mxu0
        %v2532 = vadd.f32 0.0, %v2531
        %v2533 = vpop.f32.mrf.mxu0
        %v2534 = vadd.f32 0.0, %v2533
        %2535 = vmatprep.mubr.bf16.mxu0 %v708
        %2536 = vmatmul.mubr.bf16.gmra.mxu0 %v707
        %v2537 = vpop.f32.mrf.mxu0
        %v2538 = vadd.f32 0.0, %v2537
        %v2539 = vpop.f32.mrf.mxu0
        %v2540 = vadd.f32 0.0, %v2539
        %v2541 = vpop.f32.mrf.mxu0
        %v2542 = vadd.f32 0.0, %v2541
        %v2543 = vpop.f32.mrf.mxu0
        %v2544 = vadd.f32 0.0, %v2543
        %2545 = vmatprep.mubr.bf16.mxu0 %v710
        %2546 = vmatmul.mubr.bf16.gmra.mxu0 %v709
        %v2547 = vpop.f32.mrf.mxu0
        %v2548 = vadd.f32 0.0, %v2547
        %v2549 = vpop.f32.mrf.mxu0
        %v2550 = vadd.f32 0.0, %v2549
        %v2551 = vpop.f32.mrf.mxu0
        %v2552 = vadd.f32 0.0, %v2551
        %v2553 = vpop.f32.mrf.mxu0
        %v2554 = vadd.f32 0.0, %v2553
        %2555 = vmatprep.mubr.bf16.mxu0 %v712
        %2556 = vmatmul.mubr.bf16.gmra.mxu0 %v711
        %v2557 = vpop.f32.mrf.mxu0
        %v2558 = vadd.f32 0.0, %v2557
        %v2559 = vpop.f32.mrf.mxu0
        %v2560 = vadd.f32 0.0, %v2559
        %v2561 = vpop.f32.mrf.mxu0
        %v2562 = vadd.f32 0.0, %v2561
        %v2563 = vpop.f32.mrf.mxu0
        %v2564 = vadd.f32 0.0, %v2563
        %2565 = vmatprep.mubr.bf16.mxu0 %v714
        %2566 = vmatmul.mubr.bf16.gmra.mxu0 %v713
        %v2567 = vpop.f32.mrf.mxu0
        %v2568 = vadd.f32 0.0, %v2567
        %v2569 = vpop.f32.mrf.mxu0
        %v2570 = vadd.f32 0.0, %v2569
        %v2571 = vpop.f32.mrf.mxu0
        %v2572 = vadd.f32 0.0, %v2571
        %v2573 = vpop.f32.mrf.mxu0
        %v2574 = vadd.f32 0.0, %v2573
        %2575 = vdwg.mxu0
        %2576 = vmatprep.subr.bf16.mxu0 %v1622
        %2577 = vmatpush1.bf16.msra.mxu0 %v1621
        %2578 = vmatprep.subr.bf16.mxu0 %v1606
        %2579 = vmatpush1.bf16.msra.mxu0 %v1605
        %2580 = vmatprep.subr.bf16.mxu0 %v1590
        %2581 = vmatpush1.bf16.msra.mxu0 %v1589
        %2582 = vmatprep.subr.bf16.mxu0 %v1574
        %2583 = vmatpush1.bf16.msra.mxu0 %v1573
        %2584 = vmatprep.subr.bf16.mxu0 %v1558
        %2585 = vmatpush1.bf16.msra.mxu0 %v1557
        %2586 = vmatprep.subr.bf16.mxu0 %v1542
        %2587 = vmatpush1.bf16.msra.mxu0 %v1541
        %2588 = vmatprep.subr.bf16.mxu0 %v1526
        %2589 = vmatpush1.bf16.msra.mxu0 %v1525
        %2590 = vmatprep.subr.bf16.mxu0 %v1510
        %2591 = vmatpush1.bf16.msra.mxu0 %v1509
        %2592 = vmatprep.subr.bf16.mxu0 %v1750
        %2593 = vmatpush2.bf16.msra.mxu0 %v1749
        %2594 = vmatprep.subr.bf16.mxu0 %v1734
        %2595 = vmatpush2.bf16.msra.mxu0 %v1733
        %2596 = vmatprep.subr.bf16.mxu0 %v1718
        %2597 = vmatpush2.bf16.msra.mxu0 %v1717
        %2598 = vmatprep.subr.bf16.mxu0 %v1702
        %2599 = vmatpush2.bf16.msra.mxu0 %v1701
        %2600 = vmatprep.subr.bf16.mxu0 %v1686
        %2601 = vmatpush2.bf16.msra.mxu0 %v1685
        %2602 = vmatprep.subr.bf16.mxu0 %v1670
        %2603 = vmatpush2.bf16.msra.mxu0 %v1669
        %2604 = vmatprep.subr.bf16.mxu0 %v1654
        %2605 = vmatpush2.bf16.msra.mxu0 %v1653
        %2606 = vmatprep.subr.bf16.mxu0 %v1638
        %2607 = vmatpush2.bf16.msra.mxu0 %v1637
        %2608 = vmatprep.mubr.bf16.mxu0 %v700
        %2609 = vmatmul.mubr.bf16.gmra.mxu0 %v699
        %v2610 = vpop.f32.mrf.mxu0
        %v2611 = vadd.f32 0.0, %v2610
        %v2612 = vpop.f32.mrf.mxu0
        %v2613 = vadd.f32 0.0, %v2612
        %v2614 = vpop.f32.mrf.mxu0
        %v2615 = vadd.f32 0.0, %v2614
        %v2616 = vpop.f32.mrf.mxu0
        %v2617 = vadd.f32 0.0, %v2616
        %2618 = vmatprep.mubr.bf16.mxu0 %v702
        %2619 = vmatmul.mubr.bf16.gmra.mxu0 %v701
        %v2620 = vpop.f32.mrf.mxu0
        %v2621 = vadd.f32 0.0, %v2620
        %v2622 = vpop.f32.mrf.mxu0
        %v2623 = vadd.f32 0.0, %v2622
        %v2624 = vpop.f32.mrf.mxu0
        %v2625 = vadd.f32 0.0, %v2624
        %v2626 = vpop.f32.mrf.mxu0
        %v2627 = vadd.f32 0.0, %v2626
        %2628 = vmatprep.mubr.bf16.mxu0 %v704
        %2629 = vmatmul.mubr.bf16.gmra.mxu0 %v703
        %v2630 = vpop.f32.mrf.mxu0
        %v2631 = vadd.f32 0.0, %v2630
        %v2632 = vpop.f32.mrf.mxu0
        %v2633 = vadd.f32 0.0, %v2632
        %v2634 = vpop.f32.mrf.mxu0
        %v2635 = vadd.f32 0.0, %v2634
        %v2636 = vpop.f32.mrf.mxu0
        %v2637 = vadd.f32 0.0, %v2636
        %2638 = vmatprep.mubr.bf16.mxu0 %v706
        %2639 = vmatmul.mubr.bf16.gmra.mxu0 %v705
        %v2640 = vpop.f32.mrf.mxu0
        %v2641 = vadd.f32 0.0, %v2640
        %v2642 = vpop.f32.mrf.mxu0
        %v2643 = vadd.f32 0.0, %v2642
        %v2644 = vpop.f32.mrf.mxu0
        %v2645 = vadd.f32 0.0, %v2644
        %v2646 = vpop.f32.mrf.mxu0
        %v2647 = vadd.f32 0.0, %v2646
        %2648 = vmatprep.mubr.bf16.mxu0 %v708
        %2649 = vmatmul.mubr.bf16.gmra.mxu0 %v707
        %v2650 = vpop.f32.mrf.mxu0
        %v2651 = vadd.f32 0.0, %v2650
        %v2652 = vpop.f32.mrf.mxu0
        %v2653 = vadd.f32 0.0, %v2652
        %v2654 = vpop.f32.mrf.mxu0
        %v2655 = vadd.f32 0.0, %v2654
        %v2656 = vpop.f32.mrf.mxu0
        %v2657 = vadd.f32 0.0, %v2656
        %2658 = vmatprep.mubr.bf16.mxu0 %v710
        %2659 = vmatmul.mubr.bf16.gmra.mxu0 %v709
        %v2660 = vpop.f32.mrf.mxu0
        %v2661 = vadd.f32 0.0, %v2660
        %v2662 = vpop.f32.mrf.mxu0
        %v2663 = vadd.f32 0.0, %v2662
        %v2664 = vpop.f32.mrf.mxu0
        %v2665 = vadd.f32 0.0, %v2664
        %v2666 = vpop.f32.mrf.mxu0
        %v2667 = vadd.f32 0.0, %v2666
        %2668 = vmatprep.mubr.bf16.mxu0 %v712
        %2669 = vmatmul.mubr.bf16.gmra.mxu0 %v711
        %v2670 = vpop.f32.mrf.mxu0
        %v2671 = vadd.f32 0.0, %v2670
        %v2672 = vpop.f32.mrf.mxu0
        %v2673 = vadd.f32 0.0, %v2672
        %v2674 = vpop.f32.mrf.mxu0
        %v2675 = vadd.f32 0.0, %v2674
        %v2676 = vpop.f32.mrf.mxu0
        %v2677 = vadd.f32 0.0, %v2676
        %2678 = vmatprep.mubr.bf16.mxu0 %v714
        %2679 = vmatmul.mubr.bf16.gmra.mxu0 %v713
        %v2680 = vpop.f32.mrf.mxu0
        %v2681 = vadd.f32 0.0, %v2680
        %v2682 = vpop.f32.mrf.mxu0
        %v2683 = vadd.f32 0.0, %v2682
        %v2684 = vpop.f32.mrf.mxu0
        %v2685 = vadd.f32 0.0, %v2684
        %v2686 = vpop.f32.mrf.mxu0
        %v2687 = vadd.f32 0.0, %v2686
        %2688 = vdwg.mxu0
        %2689 = vmatprep.subr.bf16.mxu0 %v1624
        %2690 = vmatpush1.bf16.msra.mxu0 %v1623
        %2691 = vmatprep.subr.bf16.mxu0 %v1608
        %2692 = vmatpush1.bf16.msra.mxu0 %v1607
        %2693 = vmatprep.subr.bf16.mxu0 %v1592
        %2694 = vmatpush1.bf16.msra.mxu0 %v1591
        %2695 = vmatprep.subr.bf16.mxu0 %v1576
        %2696 = vmatpush1.bf16.msra.mxu0 %v1575
        %2697 = vmatprep.subr.bf16.mxu0 %v1560
        %2698 = vmatpush1.bf16.msra.mxu0 %v1559
        %2699 = vmatprep.subr.bf16.mxu0 %v1544
        %2700 = vmatpush1.bf16.msra.mxu0 %v1543
        %2701 = vmatprep.subr.bf16.mxu0 %v1528
        %2702 = vmatpush1.bf16.msra.mxu0 %v1527
        %2703 = vmatprep.subr.bf16.mxu0 %v1512
        %2704 = vmatpush1.bf16.msra.mxu0 %v1511
        %2705 = vmatprep.subr.bf16.mxu0 %v1752
        %2706 = vmatpush2.bf16.msra.mxu0 %v1751
        %2707 = vmatprep.subr.bf16.mxu0 %v1736
        %2708 = vmatpush2.bf16.msra.mxu0 %v1735
        %2709 = vmatprep.subr.bf16.mxu0 %v1720
        %2710 = vmatpush2.bf16.msra.mxu0 %v1719
        %2711 = vmatprep.subr.bf16.mxu0 %v1704
        %2712 = vmatpush2.bf16.msra.mxu0 %v1703
        %2713 = vmatprep.subr.bf16.mxu0 %v1688
        %2714 = vmatpush2.bf16.msra.mxu0 %v1687
        %2715 = vmatprep.subr.bf16.mxu0 %v1672
        %2716 = vmatpush2.bf16.msra.mxu0 %v1671
        %2717 = vmatprep.subr.bf16.mxu0 %v1656
        %2718 = vmatpush2.bf16.msra.mxu0 %v1655
        %2719 = vmatprep.subr.bf16.mxu0 %v1640
        %2720 = vmatpush2.bf16.msra.mxu0 %v1639
        %2721 = vmatprep.mubr.bf16.mxu0 %v700
        %2722 = vmatmul.mubr.bf16.gmra.mxu0 %v699
        %v2723 = vpop.f32.mrf.mxu0
        %v2724 = vadd.f32 0.0, %v2723
        %v2725 = vpop.f32.mrf.mxu0
        %v2726 = vadd.f32 0.0, %v2725
        %v2727 = vpop.f32.mrf.mxu0
        %v2728 = vadd.f32 0.0, %v2727
        %v2729 = vpop.f32.mrf.mxu0
        %v2730 = vadd.f32 0.0, %v2729
        %2731 = vmatprep.mubr.bf16.mxu0 %v702
        %2732 = vmatmul.mubr.bf16.gmra.mxu0 %v701
        %v2733 = vpop.f32.mrf.mxu0
        %v2734 = vadd.f32 0.0, %v2733
        %v2735 = vpop.f32.mrf.mxu0
        %v2736 = vadd.f32 0.0, %v2735
        %v2737 = vpop.f32.mrf.mxu0
        %v2738 = vadd.f32 0.0, %v2737
        %v2739 = vpop.f32.mrf.mxu0
        %v2740 = vadd.f32 0.0, %v2739
        %2741 = vmatprep.mubr.bf16.mxu0 %v704
        %2742 = vmatmul.mubr.bf16.gmra.mxu0 %v703
        %v2743 = vpop.f32.mrf.mxu0
        %v2744 = vadd.f32 0.0, %v2743
        %v2745 = vpop.f32.mrf.mxu0
        %v2746 = vadd.f32 0.0, %v2745
        %v2747 = vpop.f32.mrf.mxu0
        %v2748 = vadd.f32 0.0, %v2747
        %v2749 = vpop.f32.mrf.mxu0
        %v2750 = vadd.f32 0.0, %v2749
        %2751 = vmatprep.mubr.bf16.mxu0 %v706
        %2752 = vmatmul.mubr.bf16.gmra.mxu0 %v705
        %v2753 = vpop.f32.mrf.mxu0
        %v2754 = vadd.f32 0.0, %v2753
        %v2755 = vpop.f32.mrf.mxu0
        %v2756 = vadd.f32 0.0, %v2755
        %v2757 = vpop.f32.mrf.mxu0
        %v2758 = vadd.f32 0.0, %v2757
        %v2759 = vpop.f32.mrf.mxu0
        %v2760 = vadd.f32 0.0, %v2759
        %2761 = vmatprep.mubr.bf16.mxu0 %v708
        %2762 = vmatmul.mubr.bf16.gmra.mxu0 %v707
        %v2763 = vpop.f32.mrf.mxu0
        %v2764 = vadd.f32 0.0, %v2763
        %v2765 = vpop.f32.mrf.mxu0
        %v2766 = vadd.f32 0.0, %v2765
        %v2767 = vpop.f32.mrf.mxu0
        %v2768 = vadd.f32 0.0, %v2767
        %v2769 = vpop.f32.mrf.mxu0
        %v2770 = vadd.f32 0.0, %v2769
        %2771 = vmatprep.mubr.bf16.mxu0 %v710
        %2772 = vmatmul.mubr.bf16.gmra.mxu0 %v709
        %v2773 = vpop.f32.mrf.mxu0
        %v2774 = vadd.f32 0.0, %v2773
        %v2775 = vpop.f32.mrf.mxu0
        %v2776 = vadd.f32 0.0, %v2775
        %v2777 = vpop.f32.mrf.mxu0
        %v2778 = vadd.f32 0.0, %v2777
        %v2779 = vpop.f32.mrf.mxu0
        %v2780 = vadd.f32 0.0, %v2779
        %2781 = vmatprep.mubr.bf16.mxu0 %v712
        %2782 = vmatmul.mubr.bf16.gmra.mxu0 %v711
        %v2783 = vpop.f32.mrf.mxu0
        %v2784 = vadd.f32 0.0, %v2783
        %v2785 = vpop.f32.mrf.mxu0
        %v2786 = vadd.f32 0.0, %v2785
        %v2787 = vpop.f32.mrf.mxu0
        %v2788 = vadd.f32 0.0, %v2787
        %v2789 = vpop.f32.mrf.mxu0
        %v2790 = vadd.f32 0.0, %v2789
        %2791 = vmatprep.mubr.bf16.mxu0 %v714
        %2792 = vmatmul.mubr.bf16.gmra.mxu0 %v713
        %v2793 = vpop.f32.mrf.mxu0
        %v2794 = vadd.f32 0.0, %v2793
        %v2795 = vpop.f32.mrf.mxu0
        %v2796 = vadd.f32 0.0, %v2795
        %v2797 = vpop.f32.mrf.mxu0
        %v2798 = vadd.f32 0.0, %v2797
        %v2799 = vpop.f32.mrf.mxu0
        %v2800 = vadd.f32 0.0, %v2799
        %2801 = vdwg.mxu0
        %2802 = vmatprep.subr.bf16.mxu0 %v1626
        %2803 = vmatpush1.bf16.msra.mxu0 %v1625
        %2804 = vmatprep.subr.bf16.mxu0 %v1610
        %2805 = vmatpush1.bf16.msra.mxu0 %v1609
        %2806 = vmatprep.subr.bf16.mxu0 %v1594
        %2807 = vmatpush1.bf16.msra.mxu0 %v1593
        %2808 = vmatprep.subr.bf16.mxu0 %v1578
        %2809 = vmatpush1.bf16.msra.mxu0 %v1577
        %2810 = vmatprep.subr.bf16.mxu0 %v1562
        %2811 = vmatpush1.bf16.msra.mxu0 %v1561
        %2812 = vmatprep.subr.bf16.mxu0 %v1546
        %2813 = vmatpush1.bf16.msra.mxu0 %v1545
        %2814 = vmatprep.subr.bf16.mxu0 %v1530
        %2815 = vmatpush1.bf16.msra.mxu0 %v1529
        %2816 = vmatprep.subr.bf16.mxu0 %v1514
        %2817 = vmatpush1.bf16.msra.mxu0 %v1513
        %2818 = vmatprep.subr.bf16.mxu0 %v1754
        %2819 = vmatpush2.bf16.msra.mxu0 %v1753
        %2820 = vmatprep.subr.bf16.mxu0 %v1738
        %2821 = vmatpush2.bf16.msra.mxu0 %v1737
        %2822 = vmatprep.subr.bf16.mxu0 %v1722
        %2823 = vmatpush2.bf16.msra.mxu0 %v1721
        %2824 = vmatprep.subr.bf16.mxu0 %v1706
        %2825 = vmatpush2.bf16.msra.mxu0 %v1705
        %2826 = vmatprep.subr.bf16.mxu0 %v1690
        %2827 = vmatpush2.bf16.msra.mxu0 %v1689
        %2828 = vmatprep.subr.bf16.mxu0 %v1674
        %2829 = vmatpush2.bf16.msra.mxu0 %v1673
        %2830 = vmatprep.subr.bf16.mxu0 %v1658
        %2831 = vmatpush2.bf16.msra.mxu0 %v1657
        %2832 = vmatprep.subr.bf16.mxu0 %v1642
        %2833 = vmatpush2.bf16.msra.mxu0 %v1641
        %2834 = vmatprep.mubr.bf16.mxu0 %v700
        %2835 = vmatmul.mubr.bf16.gmra.mxu0 %v699
        %v2836 = vpop.f32.mrf.mxu0
        %v2837 = vadd.f32 0.0, %v2836
        %v2838 = vpop.f32.mrf.mxu0
        %v2839 = vadd.f32 0.0, %v2838
        %v2840 = vpop.f32.mrf.mxu0
        %v2841 = vadd.f32 0.0, %v2840
        %v2842 = vpop.f32.mrf.mxu0
        %v2843 = vadd.f32 0.0, %v2842
        %2844 = vmatprep.mubr.bf16.mxu0 %v702
        %2845 = vmatmul.mubr.bf16.gmra.mxu0 %v701
        %v2846 = vpop.f32.mrf.mxu0
        %v2847 = vadd.f32 0.0, %v2846
        %v2848 = vpop.f32.mrf.mxu0
        %v2849 = vadd.f32 0.0, %v2848
        %v2850 = vpop.f32.mrf.mxu0
        %v2851 = vadd.f32 0.0, %v2850
        %v2852 = vpop.f32.mrf.mxu0
        %v2853 = vadd.f32 0.0, %v2852
        %2854 = vmatprep.mubr.bf16.mxu0 %v704
        %2855 = vmatmul.mubr.bf16.gmra.mxu0 %v703
        %v2856 = vpop.f32.mrf.mxu0
        %v2857 = vadd.f32 0.0, %v2856
        %v2858 = vpop.f32.mrf.mxu0
        %v2859 = vadd.f32 0.0, %v2858
        %v2860 = vpop.f32.mrf.mxu0
        %v2861 = vadd.f32 0.0, %v2860
        %v2862 = vpop.f32.mrf.mxu0
        %v2863 = vadd.f32 0.0, %v2862
        %2864 = vmatprep.mubr.bf16.mxu0 %v706
        %2865 = vmatmul.mubr.bf16.gmra.mxu0 %v705
        %v2866 = vpop.f32.mrf.mxu0
        %v2867 = vadd.f32 0.0, %v2866
        %v2868 = vpop.f32.mrf.mxu0
        %v2869 = vadd.f32 0.0, %v2868
        %v2870 = vpop.f32.mrf.mxu0
        %v2871 = vadd.f32 0.0, %v2870
        %v2872 = vpop.f32.mrf.mxu0
        %v2873 = vadd.f32 0.0, %v2872
        %2874 = vmatprep.mubr.bf16.mxu0 %v708
        %2875 = vmatmul.mubr.bf16.gmra.mxu0 %v707
        %v2876 = vpop.f32.mrf.mxu0
        %v2877 = vadd.f32 0.0, %v2876
        %v2878 = vpop.f32.mrf.mxu0
        %v2879 = vadd.f32 0.0, %v2878
        %v2880 = vpop.f32.mrf.mxu0
        %v2881 = vadd.f32 0.0, %v2880
        %v2882 = vpop.f32.mrf.mxu0
        %v2883 = vadd.f32 0.0, %v2882
        %2884 = vmatprep.mubr.bf16.mxu0 %v710
        %2885 = vmatmul.mubr.bf16.gmra.mxu0 %v709
        %v2886 = vpop.f32.mrf.mxu0
        %v2887 = vadd.f32 0.0, %v2886
        %v2888 = vpop.f32.mrf.mxu0
        %v2889 = vadd.f32 0.0, %v2888
        %v2890 = vpop.f32.mrf.mxu0
        %v2891 = vadd.f32 0.0, %v2890
        %v2892 = vpop.f32.mrf.mxu0
        %v2893 = vadd.f32 0.0, %v2892
        %2894 = vmatprep.mubr.bf16.mxu0 %v712
        %2895 = vmatmul.mubr.bf16.gmra.mxu0 %v711
        %v2896 = vpop.f32.mrf.mxu0
        %v2897 = vadd.f32 0.0, %v2896
        %v2898 = vpop.f32.mrf.mxu0
        %v2899 = vadd.f32 0.0, %v2898
        %v2900 = vpop.f32.mrf.mxu0
        %v2901 = vadd.f32 0.0, %v2900
        %v2902 = vpop.f32.mrf.mxu0
        %v2903 = vadd.f32 0.0, %v2902
        %2904 = vmatprep.mubr.bf16.mxu0 %v714
        %2905 = vmatmul.mubr.bf16.gmra.mxu0 %v713
        %v2906 = vpop.f32.mrf.mxu0
        %v2907 = vadd.f32 0.0, %v2906
        %v2908 = vpop.f32.mrf.mxu0
        %v2909 = vadd.f32 0.0, %v2908
        %v2910 = vpop.f32.mrf.mxu0
        %v2911 = vadd.f32 0.0, %v2910
        %v2912 = vpop.f32.mrf.mxu0
        %v2913 = vadd.f32 0.0, %v2912
        %2914 = vdwg.mxu0
        %v2915 = vxor.u32 %v2046, 2147483648
        %v2916 = vxor.u32 %v2048, 2147483648
        %v2917 = vxor.u32 %v2159, 2147483648
        %v2918 = vxor.u32 %v2161, 2147483648
        %v2919 = vxor.u32 %v2272, 2147483648
        %v2920 = vxor.u32 %v2274, 2147483648
        %v2921 = vxor.u32 %v2385, 2147483648
        %v2922 = vxor.u32 %v2387, 2147483648
        %v2923 = vxor.u32 %v2050, 2147483648
        %v2924 = vxor.u32 %v2052, 2147483648
        %v2925 = vxor.u32 %v2163, 2147483648
        %v2926 = vxor.u32 %v2165, 2147483648
        %v2927 = vxor.u32 %v2276, 2147483648
        %v2928 = vxor.u32 %v2278, 2147483648
        %v2929 = vxor.u32 %v2389, 2147483648
        %v2930 = vxor.u32 %v2391, 2147483648
        %v2931 = vxor.u32 %v2056, 2147483648
        %v2932 = vxor.u32 %v2058, 2147483648
        %v2933 = vxor.u32 %v2169, 2147483648
        %v2934 = vxor.u32 %v2171, 2147483648
        %v2935 = vxor.u32 %v2282, 2147483648
        %v2936 = vxor.u32 %v2284, 2147483648
        %v2937 = vxor.u32 %v2395, 2147483648
        %v2938 = vxor.u32 %v2397, 2147483648
        %v2939 = vxor.u32 %v2060, 2147483648
        %v2940 = vxor.u32 %v2062, 2147483648
        %v2941 = vxor.u32 %v2173, 2147483648
        %v2942 = vxor.u32 %v2175, 2147483648
        %v2943 = vxor.u32 %v2286, 2147483648
        %v2944 = vxor.u32 %v2288, 2147483648
        %v2945 = vxor.u32 %v2399, 2147483648
        %v2946 = vxor.u32 %v2401, 2147483648
        %v2947 = vxor.u32 %v2066, 2147483648
        %v2948 = vxor.u32 %v2068, 2147483648
        %v2949 = vxor.u32 %v2179, 2147483648
        %v2950 = vxor.u32 %v2181, 2147483648
        %v2951 = vxor.u32 %v2292, 2147483648
        %v2952 = vxor.u32 %v2294, 2147483648
        %v2953 = vxor.u32 %v2405, 2147483648
        %v2954 = vxor.u32 %v2407, 2147483648
        %v2955 = vxor.u32 %v2070, 2147483648
        %v2956 = vxor.u32 %v2072, 2147483648
        %v2957 = vxor.u32 %v2183, 2147483648
        %v2958 = vxor.u32 %v2185, 2147483648
        %v2959 = vxor.u32 %v2296, 2147483648
        %v2960 = vxor.u32 %v2298, 2147483648
        %v2961 = vxor.u32 %v2409, 2147483648
        %v2962 = vxor.u32 %v2411, 2147483648
        %v2963 = vxor.u32 %v2076, 2147483648
        %v2964 = vxor.u32 %v2078, 2147483648
        %v2965 = vxor.u32 %v2189, 2147483648
        %v2966 = vxor.u32 %v2191, 2147483648
        %v2967 = vxor.u32 %v2302, 2147483648
        %v2968 = vxor.u32 %v2304, 2147483648
        %v2969 = vxor.u32 %v2415, 2147483648
        %v2970 = vxor.u32 %v2417, 2147483648
        %v2971 = vxor.u32 %v2080, 2147483648
        %v2972 = vxor.u32 %v2082, 2147483648
        %v2973 = vxor.u32 %v2193, 2147483648
        %v2974 = vxor.u32 %v2195, 2147483648
        %v2975 = vxor.u32 %v2306, 2147483648
        %v2976 = vxor.u32 %v2308, 2147483648
        %v2977 = vxor.u32 %v2419, 2147483648
        %v2978 = vxor.u32 %v2421, 2147483648
        %v2979 = vxor.u32 %v2086, 2147483648
        %v2980 = vxor.u32 %v2088, 2147483648
        %v2981 = vxor.u32 %v2199, 2147483648
        %v2982 = vxor.u32 %v2201, 2147483648
        %v2983 = vxor.u32 %v2312, 2147483648
        %v2984 = vxor.u32 %v2314, 2147483648
        %v2985 = vxor.u32 %v2425, 2147483648
        %v2986 = vxor.u32 %v2427, 2147483648
        %v2987 = vxor.u32 %v2090, 2147483648
        %v2988 = vxor.u32 %v2092, 2147483648
        %v2989 = vxor.u32 %v2203, 2147483648
        %v2990 = vxor.u32 %v2205, 2147483648
        %v2991 = vxor.u32 %v2316, 2147483648
        %v2992 = vxor.u32 %v2318, 2147483648
        %v2993 = vxor.u32 %v2429, 2147483648
        %v2994 = vxor.u32 %v2431, 2147483648
        %v2995 = vxor.u32 %v2096, 2147483648
        %v2996 = vxor.u32 %v2098, 2147483648
        %v2997 = vxor.u32 %v2209, 2147483648
        %v2998 = vxor.u32 %v2211, 2147483648
        %v2999 = vxor.u32 %v2322, 2147483648
        %v3000 = vxor.u32 %v2324, 2147483648
        %v3001 = vxor.u32 %v2435, 2147483648
        %v3002 = vxor.u32 %v2437, 2147483648
        %v3003 = vxor.u32 %v2100, 2147483648
        %v3004 = vxor.u32 %v2102, 2147483648
        %v3005 = vxor.u32 %v2213, 2147483648
        %v3006 = vxor.u32 %v2215, 2147483648
        %v3007 = vxor.u32 %v2326, 2147483648
        %v3008 = vxor.u32 %v2328, 2147483648
        %v3009 = vxor.u32 %v2439, 2147483648
        %v3010 = vxor.u32 %v2441, 2147483648
        %v3011 = vxor.u32 %v2106, 2147483648
        %v3012 = vxor.u32 %v2108, 2147483648
        %v3013 = vxor.u32 %v2219, 2147483648
        %v3014 = vxor.u32 %v2221, 2147483648
        %v3015 = vxor.u32 %v2332, 2147483648
        %v3016 = vxor.u32 %v2334, 2147483648
        %v3017 = vxor.u32 %v2445, 2147483648
        %v3018 = vxor.u32 %v2447, 2147483648
        %v3019 = vxor.u32 %v2110, 2147483648
        %v3020 = vxor.u32 %v2112, 2147483648
        %v3021 = vxor.u32 %v2223, 2147483648
        %v3022 = vxor.u32 %v2225, 2147483648
        %v3023 = vxor.u32 %v2336, 2147483648
        %v3024 = vxor.u32 %v2338, 2147483648
        %v3025 = vxor.u32 %v2449, 2147483648
        %v3026 = vxor.u32 %v2451, 2147483648
        %v3027 = vxor.u32 %v2116, 2147483648
        %v3028 = vxor.u32 %v2118, 2147483648
        %v3029 = vxor.u32 %v2229, 2147483648
        %v3030 = vxor.u32 %v2231, 2147483648
        %v3031 = vxor.u32 %v2342, 2147483648
        %v3032 = vxor.u32 %v2344, 2147483648
        %v3033 = vxor.u32 %v2455, 2147483648
        %v3034 = vxor.u32 %v2457, 2147483648
        %v3035 = vxor.u32 %v2120, 2147483648
        %v3036 = vxor.u32 %v2122, 2147483648
        %v3037 = vxor.u32 %v2233, 2147483648
        %v3038 = vxor.u32 %v2235, 2147483648
        %v3039 = vxor.u32 %v2346, 2147483648
        %v3040 = vxor.u32 %v2348, 2147483648
        %v3041 = vxor.u32 %v2459, 2147483648
        %v3042 = vxor.u32 %v2461, 2147483648
        %v3043 = vmul.f32 %v2915, 1.442695
        %v3044 = vpow.pop %v3043
        %v3045 = vmul.f32 %v2916, 1.442695
        %v3046 = vpow.pop %v3045
        %v3047 = vmul.f32 %v2917, 1.442695
        %v3048 = vpow.pop %v3047
        %v3049 = vmul.f32 %v2918, 1.442695
        %v3050 = vpow.pop %v3049
        %v3051 = vmul.f32 %v2919, 1.442695
        %v3052 = vpow.pop %v3051
        %v3053 = vmul.f32 %v2920, 1.442695
        %v3054 = vpow.pop %v3053
        %v3055 = vmul.f32 %v2921, 1.442695
        %v3056 = vpow.pop %v3055
        %v3057 = vmul.f32 %v2922, 1.442695
        %v3058 = vpow.pop %v3057
        %v3059 = vmul.f32 %v2923, 1.442695
        %v3060 = vpow.pop %v3059
        %v3061 = vmul.f32 %v2924, 1.442695
        %v3062 = vpow.pop %v3061
        %v3063 = vmul.f32 %v2925, 1.442695
        %v3064 = vpow.pop %v3063
        %v3065 = vmul.f32 %v2926, 1.442695
        %v3066 = vpow.pop %v3065
        %v3067 = vmul.f32 %v2927, 1.442695
        %v3068 = vpow.pop %v3067
        %v3069 = vmul.f32 %v2928, 1.442695
        %v3070 = vpow.pop %v3069
        %v3071 = vmul.f32 %v2929, 1.442695
        %v3072 = vpow.pop %v3071
        %v3073 = vmul.f32 %v2930, 1.442695
        %v3074 = vpow.pop %v3073
        %v3075 = vmul.f32 %v2931, 1.442695
        %v3076 = vpow.pop %v3075
        %v3077 = vmul.f32 %v2932, 1.442695
        %v3078 = vpow.pop %v3077
        %v3079 = vmul.f32 %v2933, 1.442695
        %v3080 = vpow.pop %v3079
        %v3081 = vmul.f32 %v2934, 1.442695
        %v3082 = vpow.pop %v3081
        %v3083 = vmul.f32 %v2935, 1.442695
        %v3084 = vpow.pop %v3083
        %v3085 = vmul.f32 %v2936, 1.442695
        %v3086 = vpow.pop %v3085
        %v3087 = vmul.f32 %v2937, 1.442695
        %v3088 = vpow.pop %v3087
        %v3089 = vmul.f32 %v2938, 1.442695
        %v3090 = vpow.pop %v3089
        %v3091 = vmul.f32 %v2939, 1.442695
        %v3092 = vpow.pop %v3091
        %v3093 = vmul.f32 %v2940, 1.442695
        %v3094 = vpow.pop %v3093
        %v3095 = vmul.f32 %v2941, 1.442695
        %v3096 = vpow.pop %v3095
        %v3097 = vmul.f32 %v2942, 1.442695
        %v3098 = vpow.pop %v3097
        %v3099 = vmul.f32 %v2943, 1.442695
        %v3100 = vpow.pop %v3099
        %v3101 = vmul.f32 %v2944, 1.442695
        %v3102 = vpow.pop %v3101
        %v3103 = vmul.f32 %v2945, 1.442695
        %v3104 = vpow.pop %v3103
        %v3105 = vmul.f32 %v2946, 1.442695
        %v3106 = vpow.pop %v3105
        %v3107 = vmul.f32 %v2947, 1.442695
        %v3108 = vpow.pop %v3107
        %v3109 = vmul.f32 %v2948, 1.442695
        %v3110 = vpow.pop %v3109
        %v3111 = vmul.f32 %v2949, 1.442695
        %v3112 = vpow.pop %v3111
        %v3113 = vmul.f32 %v2950, 1.442695
        %v3114 = vpow.pop %v3113
        %v3115 = vmul.f32 %v2951, 1.442695
        %v3116 = vpow.pop %v3115
        %v3117 = vmul.f32 %v2952, 1.442695
        %v3118 = vpow.pop %v3117
        %v3119 = vmul.f32 %v2953, 1.442695
        %v3120 = vpow.pop %v3119
        %v3121 = vmul.f32 %v2954, 1.442695
        %v3122 = vpow.pop %v3121
        %v3123 = vmul.f32 %v2955, 1.442695
        %v3124 = vpow.pop %v3123
        %v3125 = vmul.f32 %v2956, 1.442695
        %v3126 = vpow.pop %v3125
        %v3127 = vmul.f32 %v2957, 1.442695
        %v3128 = vpow.pop %v3127
        %v3129 = vmul.f32 %v2958, 1.442695
        %v3130 = vpow.pop %v3129
        %v3131 = vmul.f32 %v2959, 1.442695
        %v3132 = vpow.pop %v3131
        %v3133 = vmul.f32 %v2960, 1.442695
        %v3134 = vpow.pop %v3133
        %v3135 = vmul.f32 %v2961, 1.442695
        %v3136 = vpow.pop %v3135
        %v3137 = vmul.f32 %v2962, 1.442695
        %v3138 = vpow.pop %v3137
        %v3139 = vmul.f32 %v2963, 1.442695
        %v3140 = vpow.pop %v3139
        %v3141 = vmul.f32 %v2964, 1.442695
        %v3142 = vpow.pop %v3141
        %v3143 = vmul.f32 %v2965, 1.442695
        %v3144 = vpow.pop %v3143
        %v3145 = vmul.f32 %v2966, 1.442695
        %v3146 = vpow.pop %v3145
        %v3147 = vmul.f32 %v2967, 1.442695
        %v3148 = vpow.pop %v3147
        %v3149 = vmul.f32 %v2968, 1.442695
        %v3150 = vpow.pop %v3149
        %v3151 = vmul.f32 %v2969, 1.442695
        %v3152 = vpow.pop %v3151
        %v3153 = vmul.f32 %v2970, 1.442695
        %v3154 = vpow.pop %v3153
        %v3155 = vmul.f32 %v2971, 1.442695
        %v3156 = vpow.pop %v3155
        %v3157 = vmul.f32 %v2972, 1.442695
        %v3158 = vpow.pop %v3157
        %v3159 = vmul.f32 %v2973, 1.442695
        %v3160 = vpow.pop %v3159
        %v3161 = vmul.f32 %v2974, 1.442695
        %v3162 = vpow.pop %v3161
        %v3163 = vmul.f32 %v2975, 1.442695
        %v3164 = vpow.pop %v3163
        %v3165 = vmul.f32 %v2976, 1.442695
        %v3166 = vpow.pop %v3165
        %v3167 = vmul.f32 %v2977, 1.442695
        %v3168 = vpow.pop %v3167
        %v3169 = vmul.f32 %v2978, 1.442695
        %v3170 = vpow.pop %v3169
        %v3171 = vmul.f32 %v2979, 1.442695
        %v3172 = vpow.pop %v3171
        %v3173 = vmul.f32 %v2980, 1.442695
        %v3174 = vpow.pop %v3173
        %v3175 = vmul.f32 %v2981, 1.442695
        %v3176 = vpow.pop %v3175
        %v3177 = vmul.f32 %v2982, 1.442695
        %v3178 = vpow.pop %v3177
        %v3179 = vmul.f32 %v2983, 1.442695
        %v3180 = vpow.pop %v3179
        %v3181 = vmul.f32 %v2984, 1.442695
        %v3182 = vpow.pop %v3181
        %v3183 = vmul.f32 %v2985, 1.442695
        %v3184 = vpow.pop %v3183
        %v3185 = vmul.f32 %v2986, 1.442695
        %v3186 = vpow.pop %v3185
        %v3187 = vmul.f32 %v2987, 1.442695
        %v3188 = vpow.pop %v3187
        %v3189 = vmul.f32 %v2988, 1.442695
        %v3190 = vpow.pop %v3189
        %v3191 = vmul.f32 %v2989, 1.442695
        %v3192 = vpow.pop %v3191
        %v3193 = vmul.f32 %v2990, 1.442695
        %v3194 = vpow.pop %v3193
        %v3195 = vmul.f32 %v2991, 1.442695
        %v3196 = vpow.pop %v3195
        %v3197 = vmul.f32 %v2992, 1.442695
        %v3198 = vpow.pop %v3197
        %v3199 = vmul.f32 %v2993, 1.442695
        %v3200 = vpow.pop %v3199
        %v3201 = vmul.f32 %v2994, 1.442695
        %v3202 = vpow.pop %v3201
        %v3203 = vmul.f32 %v2995, 1.442695
        %v3204 = vpow.pop %v3203
        %v3205 = vmul.f32 %v2996, 1.442695
        %v3206 = vpow.pop %v3205
        %v3207 = vmul.f32 %v2997, 1.442695
        %v3208 = vpow.pop %v3207
        %v3209 = vmul.f32 %v2998, 1.442695
        %v3210 = vpow.pop %v3209
        %v3211 = vmul.f32 %v2999, 1.442695
        %v3212 = vpow.pop %v3211
        %v3213 = vmul.f32 %v3000, 1.442695
        %v3214 = vpow.pop %v3213
        %v3215 = vmul.f32 %v3001, 1.442695
        %v3216 = vpow.pop %v3215
        %v3217 = vmul.f32 %v3002, 1.442695
        %v3218 = vpow.pop %v3217
        %v3219 = vmul.f32 %v3003, 1.442695
        %v3220 = vpow.pop %v3219
        %v3221 = vmul.f32 %v3004, 1.442695
        %v3222 = vpow.pop %v3221
        %v3223 = vmul.f32 %v3005, 1.442695
        %v3224 = vpow.pop %v3223
        %v3225 = vmul.f32 %v3006, 1.442695
        %v3226 = vpow.pop %v3225
        %v3227 = vmul.f32 %v3007, 1.442695
        %v3228 = vpow.pop %v3227
        %v3229 = vmul.f32 %v3008, 1.442695
        %v3230 = vpow.pop %v3229
        %v3231 = vmul.f32 %v3009, 1.442695
        %v3232 = vpow.pop %v3231
        %v3233 = vmul.f32 %v3010, 1.442695
        %v3234 = vpow.pop %v3233
        %v3235 = vmul.f32 %v3011, 1.442695
        %v3236 = vpow.pop %v3235
        %v3237 = vmul.f32 %v3012, 1.442695
        %v3238 = vpow.pop %v3237
        %v3239 = vmul.f32 %v3013, 1.442695
        %v3240 = vpow.pop %v3239
        %v3241 = vmul.f32 %v3014, 1.442695
        %v3242 = vpow.pop %v3241
        %v3243 = vmul.f32 %v3015, 1.442695
        %v3244 = vpow.pop %v3243
        %v3245 = vmul.f32 %v3016, 1.442695
        %v3246 = vpow.pop %v3245
        %v3247 = vmul.f32 %v3017, 1.442695
        %v3248 = vpow.pop %v3247
        %v3249 = vmul.f32 %v3018, 1.442695
        %v3250 = vpow.pop %v3249
        %v3251 = vmul.f32 %v3019, 1.442695
        %v3252 = vpow.pop %v3251
        %v3253 = vmul.f32 %v3020, 1.442695
        %v3254 = vpow.pop %v3253
        %v3255 = vmul.f32 %v3021, 1.442695
        %v3256 = vpow.pop %v3255
        %v3257 = vmul.f32 %v3022, 1.442695
        %v3258 = vpow.pop %v3257
        %v3259 = vmul.f32 %v3023, 1.442695
        %v3260 = vpow.pop %v3259
        %v3261 = vmul.f32 %v3024, 1.442695
        %v3262 = vpow.pop %v3261
        %v3263 = vmul.f32 %v3025, 1.442695
        %v3264 = vpow.pop %v3263
        %v3265 = vmul.f32 %v3026, 1.442695
        %v3266 = vpow.pop %v3265
        %v3267 = vmul.f32 %v3027, 1.442695
        %v3268 = vpow.pop %v3267
        %v3269 = vmul.f32 %v3028, 1.442695
        %v3270 = vpow.pop %v3269
        %v3271 = vmul.f32 %v3029, 1.442695
        %v3272 = vpow.pop %v3271
        %v3273 = vmul.f32 %v3030, 1.442695
        %v3274 = vpow.pop %v3273
        %v3275 = vmul.f32 %v3031, 1.442695
        %v3276 = vpow.pop %v3275
        %v3277 = vmul.f32 %v3032, 1.442695
        %v3278 = vpow.pop %v3277
        %v3279 = vmul.f32 %v3033, 1.442695
        %v3280 = vpow.pop %v3279
        %v3281 = vmul.f32 %v3034, 1.442695
        %v3282 = vpow.pop %v3281
        %v3283 = vmul.f32 %v3035, 1.442695
        %v3284 = vpow.pop %v3283
        %v3285 = vmul.f32 %v3036, 1.442695
        %v3286 = vpow.pop %v3285
        %v3287 = vmul.f32 %v3037, 1.442695
        %v3288 = vpow.pop %v3287
        %v3289 = vmul.f32 %v3038, 1.442695
        %v3290 = vpow.pop %v3289
        %v3291 = vmul.f32 %v3039, 1.442695
        %v3292 = vpow.pop %v3291
        %v3293 = vmul.f32 %v3040, 1.442695
        %v3294 = vpow.pop %v3293
        %v3295 = vmul.f32 %v3041, 1.442695
        %v3296 = vpow.pop %v3295
        %v3297 = vmul.f32 %v3042, 1.442695
        %v3298 = vpow.pop %v3297
        %v3299 = vadd.f32 %v3044, 1.0
        %v3300 = vadd.f32 %v3046, 1.0
        %v3301 = vadd.f32 %v3048, 1.0
        %v3302 = vadd.f32 %v3050, 1.0
        %v3303 = vadd.f32 %v3052, 1.0
        %v3304 = vadd.f32 %v3054, 1.0
        %v3305 = vadd.f32 %v3056, 1.0
        %v3306 = vadd.f32 %v3058, 1.0
        %v3307 = vadd.f32 %v3060, 1.0
        %v3308 = vadd.f32 %v3062, 1.0
        %v3309 = vadd.f32 %v3064, 1.0
        %v3310 = vadd.f32 %v3066, 1.0
        %v3311 = vadd.f32 %v3068, 1.0
        %v3312 = vadd.f32 %v3070, 1.0
        %v3313 = vadd.f32 %v3072, 1.0
        %v3314 = vadd.f32 %v3074, 1.0
        %v3315 = vadd.f32 %v3076, 1.0
        %v3316 = vadd.f32 %v3078, 1.0
        %v3317 = vadd.f32 %v3080, 1.0
        %v3318 = vadd.f32 %v3082, 1.0
        %v3319 = vadd.f32 %v3084, 1.0
        %v3320 = vadd.f32 %v3086, 1.0
        %v3321 = vadd.f32 %v3088, 1.0
        %v3322 = vadd.f32 %v3090, 1.0
        %v3323 = vadd.f32 %v3092, 1.0
        %v3324 = vadd.f32 %v3094, 1.0
        %v3325 = vadd.f32 %v3096, 1.0
        %v3326 = vadd.f32 %v3098, 1.0
        %v3327 = vadd.f32 %v3100, 1.0
        %v3328 = vadd.f32 %v3102, 1.0
        %v3329 = vadd.f32 %v3104, 1.0
        %v3330 = vadd.f32 %v3106, 1.0
        %v3331 = vadd.f32 %v3108, 1.0
        %v3332 = vadd.f32 %v3110, 1.0
        %v3333 = vadd.f32 %v3112, 1.0
        %v3334 = vadd.f32 %v3114, 1.0
        %v3335 = vadd.f32 %v3116, 1.0
        %v3336 = vadd.f32 %v3118, 1.0
        %v3337 = vadd.f32 %v3120, 1.0
        %v3338 = vadd.f32 %v3122, 1.0
        %v3339 = vadd.f32 %v3124, 1.0
        %v3340 = vadd.f32 %v3126, 1.0
        %v3341 = vadd.f32 %v3128, 1.0
        %v3342 = vadd.f32 %v3130, 1.0
        %v3343 = vadd.f32 %v3132, 1.0
        %v3344 = vadd.f32 %v3134, 1.0
        %v3345 = vadd.f32 %v3136, 1.0
        %v3346 = vadd.f32 %v3138, 1.0
        %v3347 = vadd.f32 %v3140, 1.0
        %v3348 = vadd.f32 %v3142, 1.0
        %v3349 = vadd.f32 %v3144, 1.0
        %v3350 = vadd.f32 %v3146, 1.0
        %v3351 = vadd.f32 %v3148, 1.0
        %v3352 = vadd.f32 %v3150, 1.0
        %v3353 = vadd.f32 %v3152, 1.0
        %v3354 = vadd.f32 %v3154, 1.0
        %v3355 = vadd.f32 %v3156, 1.0
        %v3356 = vadd.f32 %v3158, 1.0
        %v3357 = vadd.f32 %v3160, 1.0
        %v3358 = vadd.f32 %v3162, 1.0
        %v3359 = vadd.f32 %v3164, 1.0
        %v3360 = vadd.f32 %v3166, 1.0
        %v3361 = vadd.f32 %v3168, 1.0
        %v3362 = vadd.f32 %v3170, 1.0
        %v3363 = vadd.f32 %v3172, 1.0
        %v3364 = vadd.f32 %v3174, 1.0
        %v3365 = vadd.f32 %v3176, 1.0
        %v3366 = vadd.f32 %v3178, 1.0
        %v3367 = vadd.f32 %v3180, 1.0
        %v3368 = vadd.f32 %v3182, 1.0
        %v3369 = vadd.f32 %v3184, 1.0
        %v3370 = vadd.f32 %v3186, 1.0
        %v3371 = vadd.f32 %v3188, 1.0
        %v3372 = vadd.f32 %v3190, 1.0
        %v3373 = vadd.f32 %v3192, 1.0
        %v3374 = vadd.f32 %v3194, 1.0
        %v3375 = vadd.f32 %v3196, 1.0
        %v3376 = vadd.f32 %v3198, 1.0
        %v3377 = vadd.f32 %v3200, 1.0
        %v3378 = vadd.f32 %v3202, 1.0
        %v3379 = vadd.f32 %v3204, 1.0
        %v3380 = vadd.f32 %v3206, 1.0
        %v3381 = vadd.f32 %v3208, 1.0
        %v3382 = vadd.f32 %v3210, 1.0
        %v3383 = vadd.f32 %v3212, 1.0
        %v3384 = vadd.f32 %v3214, 1.0
        %v3385 = vadd.f32 %v3216, 1.0
        %v3386 = vadd.f32 %v3218, 1.0
        %v3387 = vadd.f32 %v3220, 1.0
        %v3388 = vadd.f32 %v3222, 1.0
        %v3389 = vadd.f32 %v3224, 1.0
        %v3390 = vadd.f32 %v3226, 1.0
        %v3391 = vadd.f32 %v3228, 1.0
        %v3392 = vadd.f32 %v3230, 1.0
        %v3393 = vadd.f32 %v3232, 1.0
        %v3394 = vadd.f32 %v3234, 1.0
        %v3395 = vadd.f32 %v3236, 1.0
        %v3396 = vadd.f32 %v3238, 1.0
        %v3397 = vadd.f32 %v3240, 1.0
        %v3398 = vadd.f32 %v3242, 1.0
        %v3399 = vadd.f32 %v3244, 1.0
        %v3400 = vadd.f32 %v3246, 1.0
        %v3401 = vadd.f32 %v3248, 1.0
        %v3402 = vadd.f32 %v3250, 1.0
        %v3403 = vadd.f32 %v3252, 1.0
        %v3404 = vadd.f32 %v3254, 1.0
        %v3405 = vadd.f32 %v3256, 1.0
        %v3406 = vadd.f32 %v3258, 1.0
        %v3407 = vadd.f32 %v3260, 1.0
        %v3408 = vadd.f32 %v3262, 1.0
        %v3409 = vadd.f32 %v3264, 1.0
        %v3410 = vadd.f32 %v3266, 1.0
        %v3411 = vadd.f32 %v3268, 1.0
        %v3412 = vadd.f32 %v3270, 1.0
        %v3413 = vadd.f32 %v3272, 1.0
        %v3414 = vadd.f32 %v3274, 1.0
        %v3415 = vadd.f32 %v3276, 1.0
        %v3416 = vadd.f32 %v3278, 1.0
        %v3417 = vadd.f32 %v3280, 1.0
        %v3418 = vadd.f32 %v3282, 1.0
        %v3419 = vadd.f32 %v3284, 1.0
        %v3420 = vadd.f32 %v3286, 1.0
        %v3421 = vadd.f32 %v3288, 1.0
        %v3422 = vadd.f32 %v3290, 1.0
        %v3423 = vadd.f32 %v3292, 1.0
        %v3424 = vadd.f32 %v3294, 1.0
        %v3425 = vadd.f32 %v3296, 1.0
        %v3426 = vadd.f32 %v3298, 1.0
        %v3427 = vrcp.pop %v3299
        %v3428 = vmul.f32 1.0, %v3427
        %v3429 = vrcp.pop %v3300
        %v3430 = vmul.f32 1.0, %v3429
        %v3431 = vrcp.pop %v3301
        %v3432 = vmul.f32 1.0, %v3431
        %v3433 = vrcp.pop %v3302
        %v3434 = vmul.f32 1.0, %v3433
        %v3435 = vrcp.pop %v3303
        %v3436 = vmul.f32 1.0, %v3435
        %v3437 = vrcp.pop %v3304
        %v3438 = vmul.f32 1.0, %v3437
        %v3439 = vrcp.pop %v3305
        %v3440 = vmul.f32 1.0, %v3439
        %v3441 = vrcp.pop %v3306
        %v3442 = vmul.f32 1.0, %v3441
        %v3443 = vrcp.pop %v3307
        %v3444 = vmul.f32 1.0, %v3443
        %v3445 = vrcp.pop %v3308
        %v3446 = vmul.f32 1.0, %v3445
        %v3447 = vrcp.pop %v3309
        %v3448 = vmul.f32 1.0, %v3447
        %v3449 = vrcp.pop %v3310
        %v3450 = vmul.f32 1.0, %v3449
        %v3451 = vrcp.pop %v3311
        %v3452 = vmul.f32 1.0, %v3451
        %v3453 = vrcp.pop %v3312
        %v3454 = vmul.f32 1.0, %v3453
        %v3455 = vrcp.pop %v3313
        %v3456 = vmul.f32 1.0, %v3455
        %v3457 = vrcp.pop %v3314
        %v3458 = vmul.f32 1.0, %v3457
        %v3459 = vrcp.pop %v3315
        %v3460 = vmul.f32 1.0, %v3459
        %v3461 = vrcp.pop %v3316
        %v3462 = vmul.f32 1.0, %v3461
        %v3463 = vrcp.pop %v3317
        %v3464 = vmul.f32 1.0, %v3463
        %v3465 = vrcp.pop %v3318
        %v3466 = vmul.f32 1.0, %v3465
        %v3467 = vrcp.pop %v3319
        %v3468 = vmul.f32 1.0, %v3467
        %v3469 = vrcp.pop %v3320
        %v3470 = vmul.f32 1.0, %v3469
        %v3471 = vrcp.pop %v3321
        %v3472 = vmul.f32 1.0, %v3471
        %v3473 = vrcp.pop %v3322
        %v3474 = vmul.f32 1.0, %v3473
        %v3475 = vrcp.pop %v3323
        %v3476 = vmul.f32 1.0, %v3475
        %v3477 = vrcp.pop %v3324
        %v3478 = vmul.f32 1.0, %v3477
        %v3479 = vrcp.pop %v3325
        %v3480 = vmul.f32 1.0, %v3479
        %v3481 = vrcp.pop %v3326
        %v3482 = vmul.f32 1.0, %v3481
        %v3483 = vrcp.pop %v3327
        %v3484 = vmul.f32 1.0, %v3483
        %v3485 = vrcp.pop %v3328
        %v3486 = vmul.f32 1.0, %v3485
        %v3487 = vrcp.pop %v3329
        %v3488 = vmul.f32 1.0, %v3487
        %v3489 = vrcp.pop %v3330
        %v3490 = vmul.f32 1.0, %v3489
        %v3491 = vrcp.pop %v3331
        %v3492 = vmul.f32 1.0, %v3491
        %v3493 = vrcp.pop %v3332
        %v3494 = vmul.f32 1.0, %v3493
        %v3495 = vrcp.pop %v3333
        %v3496 = vmul.f32 1.0, %v3495
        %v3497 = vrcp.pop %v3334
        %v3498 = vmul.f32 1.0, %v3497
        %v3499 = vrcp.pop %v3335
        %v3500 = vmul.f32 1.0, %v3499
        %v3501 = vrcp.pop %v3336
        %v3502 = vmul.f32 1.0, %v3501
        %v3503 = vrcp.pop %v3337
        %v3504 = vmul.f32 1.0, %v3503
        %v3505 = vrcp.pop %v3338
        %v3506 = vmul.f32 1.0, %v3505
        %v3507 = vrcp.pop %v3339
        %v3508 = vmul.f32 1.0, %v3507
        %v3509 = vrcp.pop %v3340
        %v3510 = vmul.f32 1.0, %v3509
        %v3511 = vrcp.pop %v3341
        %v3512 = vmul.f32 1.0, %v3511
        %v3513 = vrcp.pop %v3342
        %v3514 = vmul.f32 1.0, %v3513
        %v3515 = vrcp.pop %v3343
        %v3516 = vmul.f32 1.0, %v3515
        %v3517 = vrcp.pop %v3344
        %v3518 = vmul.f32 1.0, %v3517
        %v3519 = vrcp.pop %v3345
        %v3520 = vmul.f32 1.0, %v3519
        %v3521 = vrcp.pop %v3346
        %v3522 = vmul.f32 1.0, %v3521
        %v3523 = vrcp.pop %v3347
        %v3524 = vmul.f32 1.0, %v3523
        %v3525 = vrcp.pop %v3348
        %v3526 = vmul.f32 1.0, %v3525
        %v3527 = vrcp.pop %v3349
        %v3528 = vmul.f32 1.0, %v3527
        %v3529 = vrcp.pop %v3350
        %v3530 = vmul.f32 1.0, %v3529
        %v3531 = vrcp.pop %v3351
        %v3532 = vmul.f32 1.0, %v3531
        %v3533 = vrcp.pop %v3352
        %v3534 = vmul.f32 1.0, %v3533
        %v3535 = vrcp.pop %v3353
        %v3536 = vmul.f32 1.0, %v3535
        %v3537 = vrcp.pop %v3354
        %v3538 = vmul.f32 1.0, %v3537
        %v3539 = vrcp.pop %v3355
        %v3540 = vmul.f32 1.0, %v3539
        %v3541 = vrcp.pop %v3356
        %v3542 = vmul.f32 1.0, %v3541
        %v3543 = vrcp.pop %v3357
        %v3544 = vmul.f32 1.0, %v3543
        %v3545 = vrcp.pop %v3358
        %v3546 = vmul.f32 1.0, %v3545
        %v3547 = vrcp.pop %v3359
        %v3548 = vmul.f32 1.0, %v3547
        %v3549 = vrcp.pop %v3360
        %v3550 = vmul.f32 1.0, %v3549
        %v3551 = vrcp.pop %v3361
        %v3552 = vmul.f32 1.0, %v3551
        %v3553 = vrcp.pop %v3362
        %v3554 = vmul.f32 1.0, %v3553
        %v3555 = vrcp.pop %v3363
        %v3556 = vmul.f32 1.0, %v3555
        %v3557 = vrcp.pop %v3364
        %v3558 = vmul.f32 1.0, %v3557
        %v3559 = vrcp.pop %v3365
        %v3560 = vmul.f32 1.0, %v3559
        %v3561 = vrcp.pop %v3366
        %v3562 = vmul.f32 1.0, %v3561
        %v3563 = vrcp.pop %v3367
        %v3564 = vmul.f32 1.0, %v3563
        %v3565 = vrcp.pop %v3368
        %v3566 = vmul.f32 1.0, %v3565
        %v3567 = vrcp.pop %v3369
        %v3568 = vmul.f32 1.0, %v3567
        %v3569 = vrcp.pop %v3370
        %v3570 = vmul.f32 1.0, %v3569
        %v3571 = vrcp.pop %v3371
        %v3572 = vmul.f32 1.0, %v3571
        %v3573 = vrcp.pop %v3372
        %v3574 = vmul.f32 1.0, %v3573
        %v3575 = vrcp.pop %v3373
        %v3576 = vmul.f32 1.0, %v3575
        %v3577 = vrcp.pop %v3374
        %v3578 = vmul.f32 1.0, %v3577
        %v3579 = vrcp.pop %v3375
        %v3580 = vmul.f32 1.0, %v3579
        %v3581 = vrcp.pop %v3376
        %v3582 = vmul.f32 1.0, %v3581
        %v3583 = vrcp.pop %v3377
        %v3584 = vmul.f32 1.0, %v3583
        %v3585 = vrcp.pop %v3378
        %v3586 = vmul.f32 1.0, %v3585
        %v3587 = vrcp.pop %v3379
        %v3588 = vmul.f32 1.0, %v3587
        %v3589 = vrcp.pop %v3380
        %v3590 = vmul.f32 1.0, %v3589
        %v3591 = vrcp.pop %v3381
        %v3592 = vmul.f32 1.0, %v3591
        %v3593 = vrcp.pop %v3382
        %v3594 = vmul.f32 1.0, %v3593
        %v3595 = vrcp.pop %v3383
        %v3596 = vmul.f32 1.0, %v3595
        %v3597 = vrcp.pop %v3384
        %v3598 = vmul.f32 1.0, %v3597
        %v3599 = vrcp.pop %v3385
        %v3600 = vmul.f32 1.0, %v3599
        %v3601 = vrcp.pop %v3386
        %v3602 = vmul.f32 1.0, %v3601
        %v3603 = vrcp.pop %v3387
        %v3604 = vmul.f32 1.0, %v3603
        %v3605 = vrcp.pop %v3388
        %v3606 = vmul.f32 1.0, %v3605
        %v3607 = vrcp.pop %v3389
        %v3608 = vmul.f32 1.0, %v3607
        %v3609 = vrcp.pop %v3390
        %v3610 = vmul.f32 1.0, %v3609
        %v3611 = vrcp.pop %v3391
        %v3612 = vmul.f32 1.0, %v3611
        %v3613 = vrcp.pop %v3392
        %v3614 = vmul.f32 1.0, %v3613
        %v3615 = vrcp.pop %v3393
        %v3616 = vmul.f32 1.0, %v3615
        %v3617 = vrcp.pop %v3394
        %v3618 = vmul.f32 1.0, %v3617
        %v3619 = vrcp.pop %v3395
        %v3620 = vmul.f32 1.0, %v3619
        %v3621 = vrcp.pop %v3396
        %v3622 = vmul.f32 1.0, %v3621
        %v3623 = vrcp.pop %v3397
        %v3624 = vmul.f32 1.0, %v3623
        %v3625 = vrcp.pop %v3398
        %v3626 = vmul.f32 1.0, %v3625
        %v3627 = vrcp.pop %v3399
        %v3628 = vmul.f32 1.0, %v3627
        %v3629 = vrcp.pop %v3400
        %v3630 = vmul.f32 1.0, %v3629
        %v3631 = vrcp.pop %v3401
        %v3632 = vmul.f32 1.0, %v3631
        %v3633 = vrcp.pop %v3402
        %v3634 = vmul.f32 1.0, %v3633
        %v3635 = vrcp.pop %v3403
        %v3636 = vmul.f32 1.0, %v3635
        %v3637 = vrcp.pop %v3404
        %v3638 = vmul.f32 1.0, %v3637
        %v3639 = vrcp.pop %v3405
        %v3640 = vmul.f32 1.0, %v3639
        %v3641 = vrcp.pop %v3406
        %v3642 = vmul.f32 1.0, %v3641
        %v3643 = vrcp.pop %v3407
        %v3644 = vmul.f32 1.0, %v3643
        %v3645 = vrcp.pop %v3408
        %v3646 = vmul.f32 1.0, %v3645
        %v3647 = vrcp.pop %v3409
        %v3648 = vmul.f32 1.0, %v3647
        %v3649 = vrcp.pop %v3410
        %v3650 = vmul.f32 1.0, %v3649
        %v3651 = vrcp.pop %v3411
        %v3652 = vmul.f32 1.0, %v3651
        %v3653 = vrcp.pop %v3412
        %v3654 = vmul.f32 1.0, %v3653
        %v3655 = vrcp.pop %v3413
        %v3656 = vmul.f32 1.0, %v3655
        %v3657 = vrcp.pop %v3414
        %v3658 = vmul.f32 1.0, %v3657
        %v3659 = vrcp.pop %v3415
        %v3660 = vmul.f32 1.0, %v3659
        %v3661 = vrcp.pop %v3416
        %v3662 = vmul.f32 1.0, %v3661
        %v3663 = vrcp.pop %v3417
        %v3664 = vmul.f32 1.0, %v3663
        %v3665 = vrcp.pop %v3418
        %v3666 = vmul.f32 1.0, %v3665
        %v3667 = vrcp.pop %v3419
        %v3668 = vmul.f32 1.0, %v3667
        %v3669 = vrcp.pop %v3420
        %v3670 = vmul.f32 1.0, %v3669
        %v3671 = vrcp.pop %v3421
        %v3672 = vmul.f32 1.0, %v3671
        %v3673 = vrcp.pop %v3422
        %v3674 = vmul.f32 1.0, %v3673
        %v3675 = vrcp.pop %v3423
        %v3676 = vmul.f32 1.0, %v3675
        %v3677 = vrcp.pop %v3424
        %v3678 = vmul.f32 1.0, %v3677
        %v3679 = vrcp.pop %v3425
        %v3680 = vmul.f32 1.0, %v3679
        %v3681 = vrcp.pop %v3426
        %v3682 = vmul.f32 1.0, %v3681
        %v3683 = vmul.f32 %v2046, %v3428
        %v3684 = vmul.f32 %v2048, %v3430
        %v3685 = vmul.f32 %v2159, %v3432
        %v3686 = vmul.f32 %v2161, %v3434
        %v3687 = vmul.f32 %v2272, %v3436
        %v3688 = vmul.f32 %v2274, %v3438
        %v3689 = vmul.f32 %v2385, %v3440
        %v3690 = vmul.f32 %v2387, %v3442
        %v3691 = vmul.f32 %v2050, %v3444
        %v3692 = vmul.f32 %v2052, %v3446
        %v3693 = vmul.f32 %v2163, %v3448
        %v3694 = vmul.f32 %v2165, %v3450
        %v3695 = vmul.f32 %v2276, %v3452
        %v3696 = vmul.f32 %v2278, %v3454
        %v3697 = vmul.f32 %v2389, %v3456
        %v3698 = vmul.f32 %v2391, %v3458
        %v3699 = vmul.f32 %v2056, %v3460
        %v3700 = vmul.f32 %v2058, %v3462
        %v3701 = vmul.f32 %v2169, %v3464
        %v3702 = vmul.f32 %v2171, %v3466
        %v3703 = vmul.f32 %v2282, %v3468
        %v3704 = vmul.f32 %v2284, %v3470
        %v3705 = vmul.f32 %v2395, %v3472
        %v3706 = vmul.f32 %v2397, %v3474
        %v3707 = vmul.f32 %v2060, %v3476
        %v3708 = vmul.f32 %v2062, %v3478
        %v3709 = vmul.f32 %v2173, %v3480
        %v3710 = vmul.f32 %v2175, %v3482
        %v3711 = vmul.f32 %v2286, %v3484
        %v3712 = vmul.f32 %v2288, %v3486
        %v3713 = vmul.f32 %v2399, %v3488
        %v3714 = vmul.f32 %v2401, %v3490
        %v3715 = vmul.f32 %v2066, %v3492
        %v3716 = vmul.f32 %v2068, %v3494
        %v3717 = vmul.f32 %v2179, %v3496
        %v3718 = vmul.f32 %v2181, %v3498
        %v3719 = vmul.f32 %v2292, %v3500
        %v3720 = vmul.f32 %v2294, %v3502
        %v3721 = vmul.f32 %v2405, %v3504
        %v3722 = vmul.f32 %v2407, %v3506
        %v3723 = vmul.f32 %v2070, %v3508
        %v3724 = vmul.f32 %v2072, %v3510
        %v3725 = vmul.f32 %v2183, %v3512
        %v3726 = vmul.f32 %v2185, %v3514
        %v3727 = vmul.f32 %v2296, %v3516
        %v3728 = vmul.f32 %v2298, %v3518
        %v3729 = vmul.f32 %v2409, %v3520
        %v3730 = vmul.f32 %v2411, %v3522
        %v3731 = vmul.f32 %v2076, %v3524
        %v3732 = vmul.f32 %v2078, %v3526
        %v3733 = vmul.f32 %v2189, %v3528
        %v3734 = vmul.f32 %v2191, %v3530
        %v3735 = vmul.f32 %v2302, %v3532
        %v3736 = vmul.f32 %v2304, %v3534
        %v3737 = vmul.f32 %v2415, %v3536
        %v3738 = vmul.f32 %v2417, %v3538
        %v3739 = vmul.f32 %v2080, %v3540
        %v3740 = vmul.f32 %v2082, %v3542
        %v3741 = vmul.f32 %v2193, %v3544
        %v3742 = vmul.f32 %v2195, %v3546
        %v3743 = vmul.f32 %v2306, %v3548
        %v3744 = vmul.f32 %v2308, %v3550
        %v3745 = vmul.f32 %v2419, %v3552
        %v3746 = vmul.f32 %v2421, %v3554
        %v3747 = vmul.f32 %v2086, %v3556
        %v3748 = vmul.f32 %v2088, %v3558
        %v3749 = vmul.f32 %v2199, %v3560
        %v3750 = vmul.f32 %v2201, %v3562
        %v3751 = vmul.f32 %v2312, %v3564
        %v3752 = vmul.f32 %v2314, %v3566
        %v3753 = vmul.f32 %v2425, %v3568
        %v3754 = vmul.f32 %v2427, %v3570
        %v3755 = vmul.f32 %v2090, %v3572
        %v3756 = vmul.f32 %v2092, %v3574
        %v3757 = vmul.f32 %v2203, %v3576
        %v3758 = vmul.f32 %v2205, %v3578
        %v3759 = vmul.f32 %v2316, %v3580
        %v3760 = vmul.f32 %v2318, %v3582
        %v3761 = vmul.f32 %v2429, %v3584
        %v3762 = vmul.f32 %v2431, %v3586
        %v3763 = vmul.f32 %v2096, %v3588
        %v3764 = vmul.f32 %v2098, %v3590
        %v3765 = vmul.f32 %v2209, %v3592
        %v3766 = vmul.f32 %v2211, %v3594
        %v3767 = vmul.f32 %v2322, %v3596
        %v3768 = vmul.f32 %v2324, %v3598
        %v3769 = vmul.f32 %v2435, %v3600
        %v3770 = vmul.f32 %v2437, %v3602
        %v3771 = vmul.f32 %v2100, %v3604
        %v3772 = vmul.f32 %v2102, %v3606
        %v3773 = vmul.f32 %v2213, %v3608
        %v3774 = vmul.f32 %v2215, %v3610
        %v3775 = vmul.f32 %v2326, %v3612
        %v3776 = vmul.f32 %v2328, %v3614
        %v3777 = vmul.f32 %v2439, %v3616
        %v3778 = vmul.f32 %v2441, %v3618
        %v3779 = vmul.f32 %v2106, %v3620
        %v3780 = vmul.f32 %v2108, %v3622
        %v3781 = vmul.f32 %v2219, %v3624
        %v3782 = vmul.f32 %v2221, %v3626
        %v3783 = vmul.f32 %v2332, %v3628
        %v3784 = vmul.f32 %v2334, %v3630
        %v3785 = vmul.f32 %v2445, %v3632
        %v3786 = vmul.f32 %v2447, %v3634
        %v3787 = vmul.f32 %v2110, %v3636
        %v3788 = vmul.f32 %v2112, %v3638
        %v3789 = vmul.f32 %v2223, %v3640
        %v3790 = vmul.f32 %v2225, %v3642
        %v3791 = vmul.f32 %v2336, %v3644
        %v3792 = vmul.f32 %v2338, %v3646
        %v3793 = vmul.f32 %v2449, %v3648
        %v3794 = vmul.f32 %v2451, %v3650
        %v3795 = vmul.f32 %v2116, %v3652
        %v3796 = vmul.f32 %v2118, %v3654
        %v3797 = vmul.f32 %v2229, %v3656
        %v3798 = vmul.f32 %v2231, %v3658
        %v3799 = vmul.f32 %v2342, %v3660
        %v3800 = vmul.f32 %v2344, %v3662
        %v3801 = vmul.f32 %v2455, %v3664
        %v3802 = vmul.f32 %v2457, %v3666
        %v3803 = vmul.f32 %v2120, %v3668
        %v3804 = vmul.f32 %v2122, %v3670
        %v3805 = vmul.f32 %v2233, %v3672
        %v3806 = vmul.f32 %v2235, %v3674
        %v3807 = vmul.f32 %v2346, %v3676
        %v3808 = vmul.f32 %v2348, %v3678
        %v3809 = vmul.f32 %v2459, %v3680
        %v3810 = vmul.f32 %v2461, %v3682
        %v3811 = vmul.f32 %v3683, %v2498
        %v3812 = vmul.f32 %v3684, %v2500
        %v3813 = vmul.f32 %v3685, %v2611
        %v3814 = vmul.f32 %v3686, %v2613
        %v3815 = vmul.f32 %v3687, %v2724
        %v3816 = vmul.f32 %v3688, %v2726
        %v3817 = vmul.f32 %v3689, %v2837
        %v3818 = vmul.f32 %v3690, %v2839
        %v3819 = vmul.f32 %v3691, %v2502
        %v3820 = vmul.f32 %v3692, %v2504
        %v3821 = vmul.f32 %v3693, %v2615
        %v3822 = vmul.f32 %v3694, %v2617
        %v3823 = vmul.f32 %v3695, %v2728
        %v3824 = vmul.f32 %v3696, %v2730
        %v3825 = vmul.f32 %v3697, %v2841
        %v3826 = vmul.f32 %v3698, %v2843
        %v3827 = vmul.f32 %v3699, %v2508
        %v3828 = vmul.f32 %v3700, %v2510
        %v3829 = vmul.f32 %v3701, %v2621
        %v3830 = vmul.f32 %v3702, %v2623
        %v3831 = vmul.f32 %v3703, %v2734
        %v3832 = vmul.f32 %v3704, %v2736
        %v3833 = vmul.f32 %v3705, %v2847
        %v3834 = vmul.f32 %v3706, %v2849
        %v3835 = vmul.f32 %v3707, %v2512
        %v3836 = vmul.f32 %v3708, %v2514
        %v3837 = vmul.f32 %v3709, %v2625
        %v3838 = vmul.f32 %v3710, %v2627
        %v3839 = vmul.f32 %v3711, %v2738
        %v3840 = vmul.f32 %v3712, %v2740
        %v3841 = vmul.f32 %v3713, %v2851
        %v3842 = vmul.f32 %v3714, %v2853
        %v3843 = vmul.f32 %v3715, %v2518
        %v3844 = vmul.f32 %v3716, %v2520
        %v3845 = vmul.f32 %v3717, %v2631
        %v3846 = vmul.f32 %v3718, %v2633
        %v3847 = vmul.f32 %v3719, %v2744
        %v3848 = vmul.f32 %v3720, %v2746
        %v3849 = vmul.f32 %v3721, %v2857
        %v3850 = vmul.f32 %v3722, %v2859
        %v3851 = vmul.f32 %v3723, %v2522
        %v3852 = vmul.f32 %v3724, %v2524
        %v3853 = vmul.f32 %v3725, %v2635
        %v3854 = vmul.f32 %v3726, %v2637
        %v3855 = vmul.f32 %v3727, %v2748
        %v3856 = vmul.f32 %v3728, %v2750
        %v3857 = vmul.f32 %v3729, %v2861
        %v3858 = vmul.f32 %v3730, %v2863
        %v3859 = vmul.f32 %v3731, %v2528
        %v3860 = vmul.f32 %v3732, %v2530
        %v3861 = vmul.f32 %v3733, %v2641
        %v3862 = vmul.f32 %v3734, %v2643
        %v3863 = vmul.f32 %v3735, %v2754
        %v3864 = vmul.f32 %v3736, %v2756
        %v3865 = vmul.f32 %v3737, %v2867
        %v3866 = vmul.f32 %v3738, %v2869
        %v3867 = vmul.f32 %v3739, %v2532
        %v3868 = vmul.f32 %v3740, %v2534
        %v3869 = vmul.f32 %v3741, %v2645
        %v3870 = vmul.f32 %v3742, %v2647
        %v3871 = vmul.f32 %v3743, %v2758
        %v3872 = vmul.f32 %v3744, %v2760
        %v3873 = vmul.f32 %v3745, %v2871
        %v3874 = vmul.f32 %v3746, %v2873
        %v3875 = vmul.f32 %v3747, %v2538
        %v3876 = vmul.f32 %v3748, %v2540
        %v3877 = vmul.f32 %v3749, %v2651
        %v3878 = vmul.f32 %v3750, %v2653
        %v3879 = vmul.f32 %v3751, %v2764
        %v3880 = vmul.f32 %v3752, %v2766
        %v3881 = vmul.f32 %v3753, %v2877
        %v3882 = vmul.f32 %v3754, %v2879
        %v3883 = vmul.f32 %v3755, %v2542
        %v3884 = vmul.f32 %v3756, %v2544
        %v3885 = vmul.f32 %v3757, %v2655
        %v3886 = vmul.f32 %v3758, %v2657
        %v3887 = vmul.f32 %v3759, %v2768
        %v3888 = vmul.f32 %v3760, %v2770
        %v3889 = vmul.f32 %v3761, %v2881
        %v3890 = vmul.f32 %v3762, %v2883
        %v3891 = vmul.f32 %v3763, %v2548
        %v3892 = vmul.f32 %v3764, %v2550
        %v3893 = vmul.f32 %v3765, %v2661
        %v3894 = vmul.f32 %v3766, %v2663
        %v3895 = vmul.f32 %v3767, %v2774
        %v3896 = vmul.f32 %v3768, %v2776
        %v3897 = vmul.f32 %v3769, %v2887
        %v3898 = vmul.f32 %v3770, %v2889
        %v3899 = vmul.f32 %v3771, %v2552
        %v3900 = vmul.f32 %v3772, %v2554
        %v3901 = vmul.f32 %v3773, %v2665
        %v3902 = vmul.f32 %v3774, %v2667
        %v3903 = vmul.f32 %v3775, %v2778
        %v3904 = vmul.f32 %v3776, %v2780
        %v3905 = vmul.f32 %v3777, %v2891
        %v3906 = vmul.f32 %v3778, %v2893
        %v3907 = vmul.f32 %v3779, %v2558
        %v3908 = vmul.f32 %v3780, %v2560
        %v3909 = vmul.f32 %v3781, %v2671
        %v3910 = vmul.f32 %v3782, %v2673
        %v3911 = vmul.f32 %v3783, %v2784
        %v3912 = vmul.f32 %v3784, %v2786
        %v3913 = vmul.f32 %v3785, %v2897
        %v3914 = vmul.f32 %v3786, %v2899
        %v3915 = vmul.f32 %v3787, %v2562
        %v3916 = vmul.f32 %v3788, %v2564
        %v3917 = vmul.f32 %v3789, %v2675
        %v3918 = vmul.f32 %v3790, %v2677
        %v3919 = vmul.f32 %v3791, %v2788
        %v3920 = vmul.f32 %v3792, %v2790
        %v3921 = vmul.f32 %v3793, %v2901
        %v3922 = vmul.f32 %v3794, %v2903
        %v3923 = vmul.f32 %v3795, %v2568
        %v3924 = vmul.f32 %v3796, %v2570
        %v3925 = vmul.f32 %v3797, %v2681
        %v3926 = vmul.f32 %v3798, %v2683
        %v3927 = vmul.f32 %v3799, %v2794
        %v3928 = vmul.f32 %v3800, %v2796
        %v3929 = vmul.f32 %v3801, %v2907
        %v3930 = vmul.f32 %v3802, %v2909
        %v3931 = vmul.f32 %v3803, %v2572
        %v3932 = vmul.f32 %v3804, %v2574
        %v3933 = vmul.f32 %v3805, %v2685
        %v3934 = vmul.f32 %v3806, %v2687
        %v3935 = vmul.f32 %v3807, %v2798
        %v3936 = vmul.f32 %v3808, %v2800
        %v3937 = vmul.f32 %v3809, %v2911
        %v3938 = vmul.f32 %v3810, %v2913
        %v3939 = vld [vmem:[%s338] sm:$0xff]
        %v3940 = vld [vmem:[%s338 + $0x8] sm:$0xff]
        %v3941 = vld [vmem:[%s338 + $0x10] sm:$0xff]
        %v3942 = vld [vmem:[%s338 + $0x18] sm:$0xff]
        %v3943 = vld [vmem:[%s338 + $0x20] sm:$0xff]
        %v3944 = vld [vmem:[%s338 + $0x28] sm:$0xff]
        %v3945 = vld [vmem:[%s338 + $0x30] sm:$0xff]
        %v3946 = vld [vmem:[%s338 + $0x38] sm:$0xff]
        %v3947 = vld [vmem:[%s338 + $0x40] sm:$0xff]
        %v3948 = vld [vmem:[%s338 + $0x48] sm:$0xff]
        %v3949 = vld [vmem:[%s338 + $0x50] sm:$0xff]
        %v3950 = vld [vmem:[%s338 + $0x58] sm:$0xff]
        %v3951 = vld [vmem:[%s338 + $0x60] sm:$0xff]
        %v3952 = vld [vmem:[%s338 + $0x68] sm:$0xff]
        %v3953 = vld [vmem:[%s338 + $0x70] sm:$0xff]
        %v3954 = vld [vmem:[%s338 + $0x78] sm:$0xff]
        %3956 = vset.pattern.permute.xlu0 0
        %3957 = vperm.xlu0 %3956, %v3939
        %v3958 = vpop.permute.xlu0 %3957
        %3961 = vset.pattern.permute.xlu0 0
        %3962 = vperm.xlu0 %3961, %v3940
        %v3963 = vpop.permute.xlu0 %3962
        %3966 = vset.pattern.permute.xlu0 0
        %3967 = vperm.xlu0 %3966, %v3941
        %v3968 = vpop.permute.xlu0 %3967
        %3971 = vset.pattern.permute.xlu0 0
        %3972 = vperm.xlu0 %3971, %v3942
        %v3973 = vpop.permute.xlu0 %3972
        %3976 = vset.pattern.permute.xlu0 0
        %3977 = vperm.xlu0 %3976, %v3943
        %v3978 = vpop.permute.xlu0 %3977
        %3981 = vset.pattern.permute.xlu0 0
        %3982 = vperm.xlu0 %3981, %v3944
        %v3983 = vpop.permute.xlu0 %3982
        %3986 = vset.pattern.permute.xlu0 0
        %3987 = vperm.xlu0 %3986, %v3945
        %v3988 = vpop.permute.xlu0 %3987
        %3991 = vset.pattern.permute.xlu0 0
        %3992 = vperm.xlu0 %3991, %v3946
        %v3993 = vpop.permute.xlu0 %3992
        %3996 = vset.pattern.permute.xlu0 0
        %3997 = vperm.xlu0 %3996, %v3947
        %v3998 = vpop.permute.xlu0 %3997
        %4001 = vset.pattern.permute.xlu0 0
        %4002 = vperm.xlu0 %4001, %v3948
        %v4003 = vpop.permute.xlu0 %4002
        %4006 = vset.pattern.permute.xlu0 0
        %4007 = vperm.xlu0 %4006, %v3949
        %v4008 = vpop.permute.xlu0 %4007
        %4011 = vset.pattern.permute.xlu0 0
        %4012 = vperm.xlu0 %4011, %v3950
        %v4013 = vpop.permute.xlu0 %4012
        %4016 = vset.pattern.permute.xlu0 0
        %4017 = vperm.xlu0 %4016, %v3951
        %v4018 = vpop.permute.xlu0 %4017
        %4021 = vset.pattern.permute.xlu0 0
        %4022 = vperm.xlu0 %4021, %v3952
        %v4023 = vpop.permute.xlu0 %4022
        %4026 = vset.pattern.permute.xlu0 0
        %4027 = vperm.xlu0 %4026, %v3953
        %v4028 = vpop.permute.xlu0 %4027
        %4031 = vset.pattern.permute.xlu0 0
        %4032 = vperm.xlu0 %4031, %v3954
        %v4033 = vpop.permute.xlu0 %4032
        %v4035 = vmul.f32 %v3811, %v3958
        %v4036 = vmul.f32 %v3812, %v3958
        %v4037 = vmul.f32 %v3813, %v3958
        %v4038 = vmul.f32 %v3814, %v3958
        %v4039 = vmul.f32 %v3815, %v3958
        %v4040 = vmul.f32 %v3816, %v3958
        %v4041 = vmul.f32 %v3817, %v3958
        %v4042 = vmul.f32 %v3818, %v3958
        %v4043 = vmul.f32 %v3819, %v3963
        %v4044 = vmul.f32 %v3820, %v3963
        %v4045 = vmul.f32 %v3821, %v3963
        %v4046 = vmul.f32 %v3822, %v3963
        %v4047 = vmul.f32 %v3823, %v3963
        %v4048 = vmul.f32 %v3824, %v3963
        %v4049 = vmul.f32 %v3825, %v3963
        %v4050 = vmul.f32 %v3826, %v3963
        %v4051 = vmul.f32 %v3827, %v3968
        %v4052 = vmul.f32 %v3828, %v3968
        %v4053 = vmul.f32 %v3829, %v3968
        %v4054 = vmul.f32 %v3830, %v3968
        %v4055 = vmul.f32 %v3831, %v3968
        %v4056 = vmul.f32 %v3832, %v3968
        %v4057 = vmul.f32 %v3833, %v3968
        %v4058 = vmul.f32 %v3834, %v3968
        %v4059 = vmul.f32 %v3835, %v3973
        %v4060 = vmul.f32 %v3836, %v3973
        %v4061 = vmul.f32 %v3837, %v3973
        %v4062 = vmul.f32 %v3838, %v3973
        %v4063 = vmul.f32 %v3839, %v3973
        %v4064 = vmul.f32 %v3840, %v3973
        %v4065 = vmul.f32 %v3841, %v3973
        %v4066 = vmul.f32 %v3842, %v3973
        %v4067 = vmul.f32 %v3843, %v3978
        %v4068 = vmul.f32 %v3844, %v3978
        %v4069 = vmul.f32 %v3845, %v3978
        %v4070 = vmul.f32 %v3846, %v3978
        %v4071 = vmul.f32 %v3847, %v3978
        %v4072 = vmul.f32 %v3848, %v3978
        %v4073 = vmul.f32 %v3849, %v3978
        %v4074 = vmul.f32 %v3850, %v3978
        %v4075 = vmul.f32 %v3851, %v3983
        %v4076 = vmul.f32 %v3852, %v3983
        %v4077 = vmul.f32 %v3853, %v3983
        %v4078 = vmul.f32 %v3854, %v3983
        %v4079 = vmul.f32 %v3855, %v3983
        %v4080 = vmul.f32 %v3856, %v3983
        %v4081 = vmul.f32 %v3857, %v3983
        %v4082 = vmul.f32 %v3858, %v3983
        %v4083 = vmul.f32 %v3859, %v3988
        %v4084 = vmul.f32 %v3860, %v3988
        %v4085 = vmul.f32 %v3861, %v3988
        %v4086 = vmul.f32 %v3862, %v3988
        %v4087 = vmul.f32 %v3863, %v3988
        %v4088 = vmul.f32 %v3864, %v3988
        %v4089 = vmul.f32 %v3865, %v3988
        %v4090 = vmul.f32 %v3866, %v3988
        %v4091 = vmul.f32 %v3867, %v3993
        %v4092 = vmul.f32 %v3868, %v3993
        %v4093 = vmul.f32 %v3869, %v3993
        %v4094 = vmul.f32 %v3870, %v3993
        %v4095 = vmul.f32 %v3871, %v3993
        %v4096 = vmul.f32 %v3872, %v3993
        %v4097 = vmul.f32 %v3873, %v3993
        %v4098 = vmul.f32 %v3874, %v3993
        %v4099 = vmul.f32 %v3875, %v3998
        %v4100 = vmul.f32 %v3876, %v3998
        %v4101 = vmul.f32 %v3877, %v3998
        %v4102 = vmul.f32 %v3878, %v3998
        %v4103 = vmul.f32 %v3879, %v3998
        %v4104 = vmul.f32 %v3880, %v3998
        %v4105 = vmul.f32 %v3881, %v3998
        %v4106 = vmul.f32 %v3882, %v3998
        %v4107 = vmul.f32 %v3883, %v4003
        %v4108 = vmul.f32 %v3884, %v4003
        %v4109 = vmul.f32 %v3885, %v4003
        %v4110 = vmul.f32 %v3886, %v4003
        %v4111 = vmul.f32 %v3887, %v4003
        %v4112 = vmul.f32 %v3888, %v4003
        %v4113 = vmul.f32 %v3889, %v4003
        %v4114 = vmul.f32 %v3890, %v4003
        %v4115 = vmul.f32 %v3891, %v4008
        %v4116 = vmul.f32 %v3892, %v4008
        %v4117 = vmul.f32 %v3893, %v4008
        %v4118 = vmul.f32 %v3894, %v4008
        %v4119 = vmul.f32 %v3895, %v4008
        %v4120 = vmul.f32 %v3896, %v4008
        %v4121 = vmul.f32 %v3897, %v4008
        %v4122 = vmul.f32 %v3898, %v4008
        %v4123 = vmul.f32 %v3899, %v4013
        %v4124 = vmul.f32 %v3900, %v4013
        %v4125 = vmul.f32 %v3901, %v4013
        %v4126 = vmul.f32 %v3902, %v4013
        %v4127 = vmul.f32 %v3903, %v4013
        %v4128 = vmul.f32 %v3904, %v4013
        %v4129 = vmul.f32 %v3905, %v4013
        %v4130 = vmul.f32 %v3906, %v4013
        %v4131 = vmul.f32 %v3907, %v4018
        %v4132 = vmul.f32 %v3908, %v4018
        %v4133 = vmul.f32 %v3909, %v4018
        %v4134 = vmul.f32 %v3910, %v4018
        %v4135 = vmul.f32 %v3911, %v4018
        %v4136 = vmul.f32 %v3912, %v4018
        %v4137 = vmul.f32 %v3913, %v4018
        %v4138 = vmul.f32 %v3914, %v4018
        %v4139 = vmul.f32 %v3915, %v4023
        %v4140 = vmul.f32 %v3916, %v4023
        %v4141 = vmul.f32 %v3917, %v4023
        %v4142 = vmul.f32 %v3918, %v4023
        %v4143 = vmul.f32 %v3919, %v4023
        %v4144 = vmul.f32 %v3920, %v4023
        %v4145 = vmul.f32 %v3921, %v4023
        %v4146 = vmul.f32 %v3922, %v4023
        %v4147 = vmul.f32 %v3923, %v4028
        %v4148 = vmul.f32 %v3924, %v4028
        %v4149 = vmul.f32 %v3925, %v4028
        %v4150 = vmul.f32 %v3926, %v4028
        %v4151 = vmul.f32 %v3927, %v4028
        %v4152 = vmul.f32 %v3928, %v4028
        %v4153 = vmul.f32 %v3929, %v4028
        %v4154 = vmul.f32 %v3930, %v4028
        %v4155 = vmul.f32 %v3931, %v4033
        %v4156 = vmul.f32 %v3932, %v4033
        %v4157 = vmul.f32 %v3933, %v4033
        %v4158 = vmul.f32 %v3934, %v4033
        %v4159 = vmul.f32 %v3935, %v4033
        %v4160 = vmul.f32 %v3936, %v4033
        %v4161 = vmul.f32 %v3937, %v4033
        %v4162 = vmul.f32 %v3938, %v4033
        %v4163 = vpack.c.bf16 %v4043, %v4035
        %v4164 = vpack.c.bf16 %v4044, %v4036
        %v4165 = vpack.c.bf16 %v4045, %v4037
        %v4166 = vpack.c.bf16 %v4046, %v4038
        %v4167 = vpack.c.bf16 %v4047, %v4039
        %v4168 = vpack.c.bf16 %v4048, %v4040
        %v4169 = vpack.c.bf16 %v4049, %v4041
        %v4170 = vpack.c.bf16 %v4050, %v4042
        %v4171 = vpack.c.bf16 %v4059, %v4051
        %v4172 = vpack.c.bf16 %v4060, %v4052
        %v4173 = vpack.c.bf16 %v4061, %v4053
        %v4174 = vpack.c.bf16 %v4062, %v4054
        %v4175 = vpack.c.bf16 %v4063, %v4055
        %v4176 = vpack.c.bf16 %v4064, %v4056
        %v4177 = vpack.c.bf16 %v4065, %v4057
        %v4178 = vpack.c.bf16 %v4066, %v4058
        %v4179 = vpack.c.bf16 %v4075, %v4067
        %v4180 = vpack.c.bf16 %v4076, %v4068
        %v4181 = vpack.c.bf16 %v4077, %v4069
        %v4182 = vpack.c.bf16 %v4078, %v4070
        %v4183 = vpack.c.bf16 %v4079, %v4071
        %v4184 = vpack.c.bf16 %v4080, %v4072
        %v4185 = vpack.c.bf16 %v4081, %v4073
        %v4186 = vpack.c.bf16 %v4082, %v4074
        %v4187 = vpack.c.bf16 %v4091, %v4083
        %v4188 = vpack.c.bf16 %v4092, %v4084
        %v4189 = vpack.c.bf16 %v4093, %v4085
        %v4190 = vpack.c.bf16 %v4094, %v4086
        %v4191 = vpack.c.bf16 %v4095, %v4087
        %v4192 = vpack.c.bf16 %v4096, %v4088
        %v4193 = vpack.c.bf16 %v4097, %v4089
        %v4194 = vpack.c.bf16 %v4098, %v4090
        %v4195 = vpack.c.bf16 %v4107, %v4099
        %v4196 = vpack.c.bf16 %v4108, %v4100
        %v4197 = vpack.c.bf16 %v4109, %v4101
        %v4198 = vpack.c.bf16 %v4110, %v4102
        %v4199 = vpack.c.bf16 %v4111, %v4103
        %v4200 = vpack.c.bf16 %v4112, %v4104
        %v4201 = vpack.c.bf16 %v4113, %v4105
        %v4202 = vpack.c.bf16 %v4114, %v4106
        %v4203 = vpack.c.bf16 %v4123, %v4115
        %v4204 = vpack.c.bf16 %v4124, %v4116
        %v4205 = vpack.c.bf16 %v4125, %v4117
        %v4206 = vpack.c.bf16 %v4126, %v4118
        %v4207 = vpack.c.bf16 %v4127, %v4119
        %v4208 = vpack.c.bf16 %v4128, %v4120
        %v4209 = vpack.c.bf16 %v4129, %v4121
        %v4210 = vpack.c.bf16 %v4130, %v4122
        %v4211 = vpack.c.bf16 %v4139, %v4131
        %v4212 = vpack.c.bf16 %v4140, %v4132
        %v4213 = vpack.c.bf16 %v4141, %v4133
        %v4214 = vpack.c.bf16 %v4142, %v4134
        %v4215 = vpack.c.bf16 %v4143, %v4135
        %v4216 = vpack.c.bf16 %v4144, %v4136
        %v4217 = vpack.c.bf16 %v4145, %v4137
        %v4218 = vpack.c.bf16 %v4146, %v4138
        %v4219 = vpack.c.bf16 %v4155, %v4147
        %v4220 = vpack.c.bf16 %v4156, %v4148
        %v4221 = vpack.c.bf16 %v4157, %v4149
        %v4222 = vpack.c.bf16 %v4158, %v4150
        %v4223 = vpack.c.bf16 %v4159, %v4151
        %v4224 = vpack.c.bf16 %v4160, %v4152
        %v4225 = vpack.c.bf16 %v4161, %v4153
        %v4226 = vpack.c.bf16 %v4162, %v4154
        %v4227 = vld [vmem:[#allocation2] sm:$0xff]
        %v4228 = vld [vmem:[#allocation2 + $0x8] sm:$0xff]
        %v4229 = vld [vmem:[#allocation2 + $0x10] sm:$0xff]
        %v4230 = vld [vmem:[#allocation2 + $0x18] sm:$0xff]
        %v4231 = vld [vmem:[#allocation2 + $0x20] sm:$0xff]
        %v4232 = vld [vmem:[#allocation2 + $0x28] sm:$0xff]
        %v4233 = vld [vmem:[#allocation2 + $0x30] sm:$0xff]
        %v4234 = vld [vmem:[#allocation2 + $0x38] sm:$0xff]
        %v4235 = vld [vmem:[#allocation2 + $0x40] sm:$0xff]
        %v4236 = vld [vmem:[#allocation2 + $0x48] sm:$0xff]
        %v4237 = vld [vmem:[#allocation2 + $0x50] sm:$0xff]
        %v4238 = vld [vmem:[#allocation2 + $0x58] sm:$0xff]
        %v4239 = vld [vmem:[#allocation2 + $0x60] sm:$0xff]
        %v4240 = vld [vmem:[#allocation2 + $0x68] sm:$0xff]
        %v4241 = vld [vmem:[#allocation2 + $0x70] sm:$0xff]
        %v4242 = vld [vmem:[#allocation2 + $0x78] sm:$0xff]
        %v4243 = vld [vmem:[#allocation2 + $0x80] sm:$0xff]
        %v4244 = vld [vmem:[#allocation2 + $0x88] sm:$0xff]
        %v4245 = vld [vmem:[#allocation2 + $0x90] sm:$0xff]
        %v4246 = vld [vmem:[#allocation2 + $0x98] sm:$0xff]
        %v4247 = vld [vmem:[#allocation2 + $0xa0] sm:$0xff]
        %v4248 = vld [vmem:[#allocation2 + $0xa8] sm:$0xff]
        %v4249 = vld [vmem:[#allocation2 + $0xb0] sm:$0xff]
        %v4250 = vld [vmem:[#allocation2 + $0xb8] sm:$0xff]
        %v4251 = vld [vmem:[#allocation2 + $0xc0] sm:$0xff]
        %v4252 = vld [vmem:[#allocation2 + $0xc8] sm:$0xff]
        %v4253 = vld [vmem:[#allocation2 + $0xd0] sm:$0xff]
        %v4254 = vld [vmem:[#allocation2 + $0xd8] sm:$0xff]
        %v4255 = vld [vmem:[#allocation2 + $0xe0] sm:$0xff]
        %v4256 = vld [vmem:[#allocation2 + $0xe8] sm:$0xff]
        %v4257 = vld [vmem:[#allocation2 + $0xf0] sm:$0xff]
        %v4258 = vld [vmem:[#allocation2 + $0xf8] sm:$0xff]
        %v4259 = vld [vmem:[%s328] sm:$0xff]
        %v4260 = vld [vmem:[%s328 + $0x8] sm:$0xff]
        %v4261 = vld [vmem:[%s328 + $0x10] sm:$0xff]
        %v4262 = vld [vmem:[%s328 + $0x18] sm:$0xff]
        %v4263 = vld [vmem:[%s328 + $0x20] sm:$0xff]
        %v4264 = vld [vmem:[%s328 + $0x28] sm:$0xff]
        %v4265 = vld [vmem:[%s328 + $0x30] sm:$0xff]
        %v4266 = vld [vmem:[%s328 + $0x38] sm:$0xff]
        %v4267 = vld [vmem:[%s328 + $0x40] sm:$0xff]
        %v4268 = vld [vmem:[%s328 + $0x48] sm:$0xff]
        %v4269 = vld [vmem:[%s328 + $0x50] sm:$0xff]
        %v4270 = vld [vmem:[%s328 + $0x58] sm:$0xff]
        %v4271 = vld [vmem:[%s328 + $0x60] sm:$0xff]
        %v4272 = vld [vmem:[%s328 + $0x68] sm:$0xff]
        %v4273 = vld [vmem:[%s328 + $0x70] sm:$0xff]
        %v4274 = vld [vmem:[%s328 + $0x78] sm:$0xff]
        %v4275 = vld [vmem:[%s328 + $0x80] sm:$0xff]
        %v4276 = vld [vmem:[%s328 + $0x88] sm:$0xff]
        %v4277 = vld [vmem:[%s328 + $0x90] sm:$0xff]
        %v4278 = vld [vmem:[%s328 + $0x98] sm:$0xff]
        %v4279 = vld [vmem:[%s328 + $0xa0] sm:$0xff]
        %v4280 = vld [vmem:[%s328 + $0xa8] sm:$0xff]
        %v4281 = vld [vmem:[%s328 + $0xb0] sm:$0xff]
        %v4282 = vld [vmem:[%s328 + $0xb8] sm:$0xff]
        %v4283 = vld [vmem:[%s328 + $0xc0] sm:$0xff]
        %v4284 = vld [vmem:[%s328 + $0xc8] sm:$0xff]
        %v4285 = vld [vmem:[%s328 + $0xd0] sm:$0xff]
        %v4286 = vld [vmem:[%s328 + $0xd8] sm:$0xff]
        %v4287 = vld [vmem:[%s328 + $0xe0] sm:$0xff]
        %v4288 = vld [vmem:[%s328 + $0xe8] sm:$0xff]
        %v4289 = vld [vmem:[%s328 + $0xf0] sm:$0xff]
        %v4290 = vld [vmem:[%s328 + $0xf8] sm:$0xff]
        %v4291 = vld [vmem:[%s328 + $0x100] sm:$0xff]
        %v4292 = vld [vmem:[%s328 + $0x108] sm:$0xff]
        %v4293 = vld [vmem:[%s328 + $0x110] sm:$0xff]
        %v4294 = vld [vmem:[%s328 + $0x118] sm:$0xff]
        %v4295 = vld [vmem:[%s328 + $0x120] sm:$0xff]
        %v4296 = vld [vmem:[%s328 + $0x128] sm:$0xff]
        %v4297 = vld [vmem:[%s328 + $0x130] sm:$0xff]
        %v4298 = vld [vmem:[%s328 + $0x138] sm:$0xff]
        %v4299 = vld [vmem:[%s328 + $0x140] sm:$0xff]
        %v4300 = vld [vmem:[%s328 + $0x148] sm:$0xff]
        %v4301 = vld [vmem:[%s328 + $0x150] sm:$0xff]
        %v4302 = vld [vmem:[%s328 + $0x158] sm:$0xff]
        %v4303 = vld [vmem:[%s328 + $0x160] sm:$0xff]
        %v4304 = vld [vmem:[%s328 + $0x168] sm:$0xff]
        %v4305 = vld [vmem:[%s328 + $0x170] sm:$0xff]
        %v4306 = vld [vmem:[%s328 + $0x178] sm:$0xff]
        %v4307 = vld [vmem:[%s328 + $0x180] sm:$0xff]
        %v4308 = vld [vmem:[%s328 + $0x188] sm:$0xff]
        %v4309 = vld [vmem:[%s328 + $0x190] sm:$0xff]
        %v4310 = vld [vmem:[%s328 + $0x198] sm:$0xff]
        %v4311 = vld [vmem:[%s328 + $0x1a0] sm:$0xff]
        %v4312 = vld [vmem:[%s328 + $0x1a8] sm:$0xff]
        %v4313 = vld [vmem:[%s328 + $0x1b0] sm:$0xff]
        %v4314 = vld [vmem:[%s328 + $0x1b8] sm:$0xff]
        %v4315 = vld [vmem:[%s328 + $0x1c0] sm:$0xff]
        %v4316 = vld [vmem:[%s328 + $0x1c8] sm:$0xff]
        %v4317 = vld [vmem:[%s328 + $0x1d0] sm:$0xff]
        %v4318 = vld [vmem:[%s328 + $0x1d8] sm:$0xff]
        %v4319 = vld [vmem:[%s328 + $0x1e0] sm:$0xff]
        %v4320 = vld [vmem:[%s328 + $0x1e8] sm:$0xff]
        %v4321 = vld [vmem:[%s328 + $0x1f0] sm:$0xff]
        %v4322 = vld [vmem:[%s328 + $0x1f8] sm:$0xff]
        %v4323 = vld [vmem:[%s328 + $0x200] sm:$0xff]
        %v4324 = vld [vmem:[%s328 + $0x208] sm:$0xff]
        %v4325 = vld [vmem:[%s328 + $0x210] sm:$0xff]
        %v4326 = vld [vmem:[%s328 + $0x218] sm:$0xff]
        %v4327 = vld [vmem:[%s328 + $0x220] sm:$0xff]
        %v4328 = vld [vmem:[%s328 + $0x228] sm:$0xff]
        %v4329 = vld [vmem:[%s328 + $0x230] sm:$0xff]
        %v4330 = vld [vmem:[%s328 + $0x238] sm:$0xff]
        %v4331 = vld [vmem:[%s328 + $0x240] sm:$0xff]
        %v4332 = vld [vmem:[%s328 + $0x248] sm:$0xff]
        %v4333 = vld [vmem:[%s328 + $0x250] sm:$0xff]
        %v4334 = vld [vmem:[%s328 + $0x258] sm:$0xff]
        %v4335 = vld [vmem:[%s328 + $0x260] sm:$0xff]
        %v4336 = vld [vmem:[%s328 + $0x268] sm:$0xff]
        %v4337 = vld [vmem:[%s328 + $0x270] sm:$0xff]
        %v4338 = vld [vmem:[%s328 + $0x278] sm:$0xff]
        %v4339 = vld [vmem:[%s328 + $0x280] sm:$0xff]
        %v4340 = vld [vmem:[%s328 + $0x288] sm:$0xff]
        %v4341 = vld [vmem:[%s328 + $0x290] sm:$0xff]
        %v4342 = vld [vmem:[%s328 + $0x298] sm:$0xff]
        %v4343 = vld [vmem:[%s328 + $0x2a0] sm:$0xff]
        %v4344 = vld [vmem:[%s328 + $0x2a8] sm:$0xff]
        %v4345 = vld [vmem:[%s328 + $0x2b0] sm:$0xff]
        %v4346 = vld [vmem:[%s328 + $0x2b8] sm:$0xff]
        %v4347 = vld [vmem:[%s328 + $0x2c0] sm:$0xff]
        %v4348 = vld [vmem:[%s328 + $0x2c8] sm:$0xff]
        %v4349 = vld [vmem:[%s328 + $0x2d0] sm:$0xff]
        %v4350 = vld [vmem:[%s328 + $0x2d8] sm:$0xff]
        %v4351 = vld [vmem:[%s328 + $0x2e0] sm:$0xff]
        %v4352 = vld [vmem:[%s328 + $0x2e8] sm:$0xff]
        %v4353 = vld [vmem:[%s328 + $0x2f0] sm:$0xff]
        %v4354 = vld [vmem:[%s328 + $0x2f8] sm:$0xff]
        %v4355 = vld [vmem:[%s328 + $0x300] sm:$0xff]
        %v4356 = vld [vmem:[%s328 + $0x308] sm:$0xff]
        %v4357 = vld [vmem:[%s328 + $0x310] sm:$0xff]
        %v4358 = vld [vmem:[%s328 + $0x318] sm:$0xff]
        %v4359 = vld [vmem:[%s328 + $0x320] sm:$0xff]
        %v4360 = vld [vmem:[%s328 + $0x328] sm:$0xff]
        %v4361 = vld [vmem:[%s328 + $0x330] sm:$0xff]
        %v4362 = vld [vmem:[%s328 + $0x338] sm:$0xff]
        %v4363 = vld [vmem:[%s328 + $0x340] sm:$0xff]
        %v4364 = vld [vmem:[%s328 + $0x348] sm:$0xff]
        %v4365 = vld [vmem:[%s328 + $0x350] sm:$0xff]
        %v4366 = vld [vmem:[%s328 + $0x358] sm:$0xff]
        %v4367 = vld [vmem:[%s328 + $0x360] sm:$0xff]
        %v4368 = vld [vmem:[%s328 + $0x368] sm:$0xff]
        %v4369 = vld [vmem:[%s328 + $0x370] sm:$0xff]
        %v4370 = vld [vmem:[%s328 + $0x378] sm:$0xff]
        %v4371 = vld [vmem:[%s328 + $0x380] sm:$0xff]
        %v4372 = vld [vmem:[%s328 + $0x388] sm:$0xff]
        %v4373 = vld [vmem:[%s328 + $0x390] sm:$0xff]
        %v4374 = vld [vmem:[%s328 + $0x398] sm:$0xff]
        %v4375 = vld [vmem:[%s328 + $0x3a0] sm:$0xff]
        %v4376 = vld [vmem:[%s328 + $0x3a8] sm:$0xff]
        %v4377 = vld [vmem:[%s328 + $0x3b0] sm:$0xff]
        %v4378 = vld [vmem:[%s328 + $0x3b8] sm:$0xff]
        %v4379 = vld [vmem:[%s328 + $0x3c0] sm:$0xff]
        %v4380 = vld [vmem:[%s328 + $0x3c8] sm:$0xff]
        %v4381 = vld [vmem:[%s328 + $0x3d0] sm:$0xff]
        %v4382 = vld [vmem:[%s328 + $0x3d8] sm:$0xff]
        %v4383 = vld [vmem:[%s328 + $0x3e0] sm:$0xff]
        %v4384 = vld [vmem:[%s328 + $0x3e8] sm:$0xff]
        %v4385 = vld [vmem:[%s328 + $0x3f0] sm:$0xff]
        %v4386 = vld [vmem:[%s328 + $0x3f8] sm:$0xff]
        %v4515 = vunpack.c.l.b16 %v4259
        %v4516 = vunpack.c.h.b16 %v4259
        %v4517 = vunpack.c.l.b16 %v4260
        %v4518 = vunpack.c.h.b16 %v4260
        %v4519 = vunpack.c.l.b16 %v4261
        %v4520 = vunpack.c.h.b16 %v4261
        %v4521 = vunpack.c.l.b16 %v4262
        %v4522 = vunpack.c.h.b16 %v4262
        %v4523 = vunpack.c.l.b16 %v4263
        %v4524 = vunpack.c.h.b16 %v4263
        %v4525 = vunpack.c.l.b16 %v4264
        %v4526 = vunpack.c.h.b16 %v4264
        %v4527 = vunpack.c.l.b16 %v4265
        %v4528 = vunpack.c.h.b16 %v4265
        %v4529 = vunpack.c.l.b16 %v4266
        %v4530 = vunpack.c.h.b16 %v4266
        %v4531 = vunpack.c.l.b16 %v4267
        %v4532 = vunpack.c.h.b16 %v4267
        %v4533 = vunpack.c.l.b16 %v4268
        %v4534 = vunpack.c.h.b16 %v4268
        %v4535 = vunpack.c.l.b16 %v4269
        %v4536 = vunpack.c.h.b16 %v4269
        %v4537 = vunpack.c.l.b16 %v4270
        %v4538 = vunpack.c.h.b16 %v4270
        %v4539 = vunpack.c.l.b16 %v4271
        %v4540 = vunpack.c.h.b16 %v4271
        %v4541 = vunpack.c.l.b16 %v4272
        %v4542 = vunpack.c.h.b16 %v4272
        %v4543 = vunpack.c.l.b16 %v4273
        %v4544 = vunpack.c.h.b16 %v4273
        %v4545 = vunpack.c.l.b16 %v4274
        %v4546 = vunpack.c.h.b16 %v4274
        %v4547 = vunpack.c.l.b16 %v4275
        %v4548 = vunpack.c.h.b16 %v4275
        %v4549 = vunpack.c.l.b16 %v4276
        %v4550 = vunpack.c.h.b16 %v4276
        %v4551 = vunpack.c.l.b16 %v4277
        %v4552 = vunpack.c.h.b16 %v4277
        %v4553 = vunpack.c.l.b16 %v4278
        %v4554 = vunpack.c.h.b16 %v4278
        %v4555 = vunpack.c.l.b16 %v4279
        %v4556 = vunpack.c.h.b16 %v4279
        %v4557 = vunpack.c.l.b16 %v4280
        %v4558 = vunpack.c.h.b16 %v4280
        %v4559 = vunpack.c.l.b16 %v4281
        %v4560 = vunpack.c.h.b16 %v4281
        %v4561 = vunpack.c.l.b16 %v4282
        %v4562 = vunpack.c.h.b16 %v4282
        %v4563 = vunpack.c.l.b16 %v4283
        %v4564 = vunpack.c.h.b16 %v4283
        %v4565 = vunpack.c.l.b16 %v4284
        %v4566 = vunpack.c.h.b16 %v4284
        %v4567 = vunpack.c.l.b16 %v4285
        %v4568 = vunpack.c.h.b16 %v4285
        %v4569 = vunpack.c.l.b16 %v4286
        %v4570 = vunpack.c.h.b16 %v4286
        %v4571 = vunpack.c.l.b16 %v4287
        %v4572 = vunpack.c.h.b16 %v4287
        %v4573 = vunpack.c.l.b16 %v4288
        %v4574 = vunpack.c.h.b16 %v4288
        %v4575 = vunpack.c.l.b16 %v4289
        %v4576 = vunpack.c.h.b16 %v4289
        %v4577 = vunpack.c.l.b16 %v4290
        %v4578 = vunpack.c.h.b16 %v4290
        %v4579 = vunpack.c.l.b16 %v4291
        %v4580 = vunpack.c.h.b16 %v4291
        %v4581 = vunpack.c.l.b16 %v4292
        %v4582 = vunpack.c.h.b16 %v4292
        %v4583 = vunpack.c.l.b16 %v4293
        %v4584 = vunpack.c.h.b16 %v4293
        %v4585 = vunpack.c.l.b16 %v4294
        %v4586 = vunpack.c.h.b16 %v4294
        %v4587 = vunpack.c.l.b16 %v4295
        %v4588 = vunpack.c.h.b16 %v4295
        %v4589 = vunpack.c.l.b16 %v4296
        %v4590 = vunpack.c.h.b16 %v4296
        %v4591 = vunpack.c.l.b16 %v4297
        %v4592 = vunpack.c.h.b16 %v4297
        %v4593 = vunpack.c.l.b16 %v4298
        %v4594 = vunpack.c.h.b16 %v4298
        %v4595 = vunpack.c.l.b16 %v4299
        %v4596 = vunpack.c.h.b16 %v4299
        %v4597 = vunpack.c.l.b16 %v4300
        %v4598 = vunpack.c.h.b16 %v4300
        %v4599 = vunpack.c.l.b16 %v4301
        %v4600 = vunpack.c.h.b16 %v4301
        %v4601 = vunpack.c.l.b16 %v4302
        %v4602 = vunpack.c.h.b16 %v4302
        %v4603 = vunpack.c.l.b16 %v4303
        %v4604 = vunpack.c.h.b16 %v4303
        %v4605 = vunpack.c.l.b16 %v4304
        %v4606 = vunpack.c.h.b16 %v4304
        %v4607 = vunpack.c.l.b16 %v4305
        %v4608 = vunpack.c.h.b16 %v4305
        %v4609 = vunpack.c.l.b16 %v4306
        %v4610 = vunpack.c.h.b16 %v4306
        %v4611 = vunpack.c.l.b16 %v4307
        %v4612 = vunpack.c.h.b16 %v4307
        %v4613 = vunpack.c.l.b16 %v4308
        %v4614 = vunpack.c.h.b16 %v4308
        %v4615 = vunpack.c.l.b16 %v4309
        %v4616 = vunpack.c.h.b16 %v4309
        %v4617 = vunpack.c.l.b16 %v4310
        %v4618 = vunpack.c.h.b16 %v4310
        %v4619 = vunpack.c.l.b16 %v4311
        %v4620 = vunpack.c.h.b16 %v4311
        %v4621 = vunpack.c.l.b16 %v4312
        %v4622 = vunpack.c.h.b16 %v4312
        %v4623 = vunpack.c.l.b16 %v4313
        %v4624 = vunpack.c.h.b16 %v4313
        %v4625 = vunpack.c.l.b16 %v4314
        %v4626 = vunpack.c.h.b16 %v4314
        %v4627 = vunpack.c.l.b16 %v4315
        %v4628 = vunpack.c.h.b16 %v4315
        %v4629 = vunpack.c.l.b16 %v4316
        %v4630 = vunpack.c.h.b16 %v4316
        %v4631 = vunpack.c.l.b16 %v4317
        %v4632 = vunpack.c.h.b16 %v4317
        %v4633 = vunpack.c.l.b16 %v4318
        %v4634 = vunpack.c.h.b16 %v4318
        %v4635 = vunpack.c.l.b16 %v4319
        %v4636 = vunpack.c.h.b16 %v4319
        %v4637 = vunpack.c.l.b16 %v4320
        %v4638 = vunpack.c.h.b16 %v4320
        %v4639 = vunpack.c.l.b16 %v4321
        %v4640 = vunpack.c.h.b16 %v4321
        %v4641 = vunpack.c.l.b16 %v4322
        %v4642 = vunpack.c.h.b16 %v4322
        %v4643 = vunpack.c.l.b16 %v4323
        %v4644 = vunpack.c.h.b16 %v4323
        %v4645 = vunpack.c.l.b16 %v4324
        %v4646 = vunpack.c.h.b16 %v4324
        %v4647 = vunpack.c.l.b16 %v4325
        %v4648 = vunpack.c.h.b16 %v4325
        %v4649 = vunpack.c.l.b16 %v4326
        %v4650 = vunpack.c.h.b16 %v4326
        %v4651 = vunpack.c.l.b16 %v4327
        %v4652 = vunpack.c.h.b16 %v4327
        %v4653 = vunpack.c.l.b16 %v4328
        %v4654 = vunpack.c.h.b16 %v4328
        %v4655 = vunpack.c.l.b16 %v4329
        %v4656 = vunpack.c.h.b16 %v4329
        %v4657 = vunpack.c.l.b16 %v4330
        %v4658 = vunpack.c.h.b16 %v4330
        %v4659 = vunpack.c.l.b16 %v4331
        %v4660 = vunpack.c.h.b16 %v4331
        %v4661 = vunpack.c.l.b16 %v4332
        %v4662 = vunpack.c.h.b16 %v4332
        %v4663 = vunpack.c.l.b16 %v4333
        %v4664 = vunpack.c.h.b16 %v4333
        %v4665 = vunpack.c.l.b16 %v4334
        %v4666 = vunpack.c.h.b16 %v4334
        %v4667 = vunpack.c.l.b16 %v4335
        %v4668 = vunpack.c.h.b16 %v4335
        %v4669 = vunpack.c.l.b16 %v4336
        %v4670 = vunpack.c.h.b16 %v4336
        %v4671 = vunpack.c.l.b16 %v4337
        %v4672 = vunpack.c.h.b16 %v4337
        %v4673 = vunpack.c.l.b16 %v4338
        %v4674 = vunpack.c.h.b16 %v4338
        %v4675 = vunpack.c.l.b16 %v4339
        %v4676 = vunpack.c.h.b16 %v4339
        %v4677 = vunpack.c.l.b16 %v4340
        %v4678 = vunpack.c.h.b16 %v4340
        %v4679 = vunpack.c.l.b16 %v4341
        %v4680 = vunpack.c.h.b16 %v4341
        %v4681 = vunpack.c.l.b16 %v4342
        %v4682 = vunpack.c.h.b16 %v4342
        %v4683 = vunpack.c.l.b16 %v4343
        %v4684 = vunpack.c.h.b16 %v4343
        %v4685 = vunpack.c.l.b16 %v4344
        %v4686 = vunpack.c.h.b16 %v4344
        %v4687 = vunpack.c.l.b16 %v4345
        %v4688 = vunpack.c.h.b16 %v4345
        %v4689 = vunpack.c.l.b16 %v4346
        %v4690 = vunpack.c.h.b16 %v4346
        %v4691 = vunpack.c.l.b16 %v4347
        %v4692 = vunpack.c.h.b16 %v4347
        %v4693 = vunpack.c.l.b16 %v4348
        %v4694 = vunpack.c.h.b16 %v4348
        %v4695 = vunpack.c.l.b16 %v4349
        %v4696 = vunpack.c.h.b16 %v4349
        %v4697 = vunpack.c.l.b16 %v4350
        %v4698 = vunpack.c.h.b16 %v4350
        %v4699 = vunpack.c.l.b16 %v4351
        %v4700 = vunpack.c.h.b16 %v4351
        %v4701 = vunpack.c.l.b16 %v4352
        %v4702 = vunpack.c.h.b16 %v4352
        %v4703 = vunpack.c.l.b16 %v4353
        %v4704 = vunpack.c.h.b16 %v4353
        %v4705 = vunpack.c.l.b16 %v4354
        %v4706 = vunpack.c.h.b16 %v4354
        %v4707 = vunpack.c.l.b16 %v4355
        %v4708 = vunpack.c.h.b16 %v4355
        %v4709 = vunpack.c.l.b16 %v4356
        %v4710 = vunpack.c.h.b16 %v4356
        %v4711 = vunpack.c.l.b16 %v4357
        %v4712 = vunpack.c.h.b16 %v4357
        %v4713 = vunpack.c.l.b16 %v4358
        %v4714 = vunpack.c.h.b16 %v4358
        %v4715 = vunpack.c.l.b16 %v4359
        %v4716 = vunpack.c.h.b16 %v4359
        %v4717 = vunpack.c.l.b16 %v4360
        %v4718 = vunpack.c.h.b16 %v4360
        %v4719 = vunpack.c.l.b16 %v4361
        %v4720 = vunpack.c.h.b16 %v4361
        %v4721 = vunpack.c.l.b16 %v4362
        %v4722 = vunpack.c.h.b16 %v4362
        %v4723 = vunpack.c.l.b16 %v4363
        %v4724 = vunpack.c.h.b16 %v4363
        %v4725 = vunpack.c.l.b16 %v4364
        %v4726 = vunpack.c.h.b16 %v4364
        %v4727 = vunpack.c.l.b16 %v4365
        %v4728 = vunpack.c.h.b16 %v4365
        %v4729 = vunpack.c.l.b16 %v4366
        %v4730 = vunpack.c.h.b16 %v4366
        %v4731 = vunpack.c.l.b16 %v4367
        %v4732 = vunpack.c.h.b16 %v4367
        %v4733 = vunpack.c.l.b16 %v4368
        %v4734 = vunpack.c.h.b16 %v4368
        %v4735 = vunpack.c.l.b16 %v4369
        %v4736 = vunpack.c.h.b16 %v4369
        %v4737 = vunpack.c.l.b16 %v4370
        %v4738 = vunpack.c.h.b16 %v4370
        %v4739 = vunpack.c.l.b16 %v4371
        %v4740 = vunpack.c.h.b16 %v4371
        %v4741 = vunpack.c.l.b16 %v4372
        %v4742 = vunpack.c.h.b16 %v4372
        %v4743 = vunpack.c.l.b16 %v4373
        %v4744 = vunpack.c.h.b16 %v4373
        %v4745 = vunpack.c.l.b16 %v4374
        %v4746 = vunpack.c.h.b16 %v4374
        %v4747 = vunpack.c.l.b16 %v4375
        %v4748 = vunpack.c.h.b16 %v4375
        %v4749 = vunpack.c.l.b16 %v4376
        %v4750 = vunpack.c.h.b16 %v4376
        %v4751 = vunpack.c.l.b16 %v4377
        %v4752 = vunpack.c.h.b16 %v4377
        %v4753 = vunpack.c.l.b16 %v4378
        %v4754 = vunpack.c.h.b16 %v4378
        %v4755 = vunpack.c.l.b16 %v4379
        %v4756 = vunpack.c.h.b16 %v4379
        %v4757 = vunpack.c.l.b16 %v4380
        %v4758 = vunpack.c.h.b16 %v4380
        %v4759 = vunpack.c.l.b16 %v4381
        %v4760 = vunpack.c.h.b16 %v4381
        %v4761 = vunpack.c.l.b16 %v4382
        %v4762 = vunpack.c.h.b16 %v4382
        %v4763 = vunpack.c.l.b16 %v4383
        %v4764 = vunpack.c.h.b16 %v4383
        %v4765 = vunpack.c.l.b16 %v4384
        %v4766 = vunpack.c.h.b16 %v4384
        %v4767 = vunpack.c.l.b16 %v4385
        %v4768 = vunpack.c.h.b16 %v4385
        %v4769 = vunpack.c.l.b16 %v4386
        %v4770 = vunpack.c.h.b16 %v4386
        %v4771 = vpack.c.b16 %v4517, %v4515
        %v4772 = vpack.c.b16 %v4518, %v4516
        %v4773 = vpack.c.b16 %v4521, %v4519
        %v4774 = vpack.c.b16 %v4522, %v4520
        %v4775 = vpack.c.b16 %v4525, %v4523
        %v4776 = vpack.c.b16 %v4526, %v4524
        %v4777 = vpack.c.b16 %v4529, %v4527
        %v4778 = vpack.c.b16 %v4530, %v4528
        %v4779 = vpack.c.b16 %v4533, %v4531
        %v4780 = vpack.c.b16 %v4534, %v4532
        %v4781 = vpack.c.b16 %v4537, %v4535
        %v4782 = vpack.c.b16 %v4538, %v4536
        %v4783 = vpack.c.b16 %v4541, %v4539
        %v4784 = vpack.c.b16 %v4542, %v4540
        %v4785 = vpack.c.b16 %v4545, %v4543
        %v4786 = vpack.c.b16 %v4546, %v4544
        %v4787 = vpack.c.b16 %v4549, %v4547
        %v4788 = vpack.c.b16 %v4550, %v4548
        %v4789 = vpack.c.b16 %v4553, %v4551
        %v4790 = vpack.c.b16 %v4554, %v4552
        %v4791 = vpack.c.b16 %v4557, %v4555
        %v4792 = vpack.c.b16 %v4558, %v4556
        %v4793 = vpack.c.b16 %v4561, %v4559
        %v4794 = vpack.c.b16 %v4562, %v4560
        %v4795 = vpack.c.b16 %v4565, %v4563
        %v4796 = vpack.c.b16 %v4566, %v4564
        %v4797 = vpack.c.b16 %v4569, %v4567
        %v4798 = vpack.c.b16 %v4570, %v4568
        %v4799 = vpack.c.b16 %v4573, %v4571
        %v4800 = vpack.c.b16 %v4574, %v4572
        %v4801 = vpack.c.b16 %v4577, %v4575
        %v4802 = vpack.c.b16 %v4578, %v4576
        %v4803 = vpack.c.b16 %v4581, %v4579
        %v4804 = vpack.c.b16 %v4582, %v4580
        %v4805 = vpack.c.b16 %v4585, %v4583
        %v4806 = vpack.c.b16 %v4586, %v4584
        %v4807 = vpack.c.b16 %v4589, %v4587
        %v4808 = vpack.c.b16 %v4590, %v4588
        %v4809 = vpack.c.b16 %v4593, %v4591
        %v4810 = vpack.c.b16 %v4594, %v4592
        %v4811 = vpack.c.b16 %v4597, %v4595
        %v4812 = vpack.c.b16 %v4598, %v4596
        %v4813 = vpack.c.b16 %v4601, %v4599
        %v4814 = vpack.c.b16 %v4602, %v4600
        %v4815 = vpack.c.b16 %v4605, %v4603
        %v4816 = vpack.c.b16 %v4606, %v4604
        %v4817 = vpack.c.b16 %v4609, %v4607
        %v4818 = vpack.c.b16 %v4610, %v4608
        %v4819 = vpack.c.b16 %v4613, %v4611
        %v4820 = vpack.c.b16 %v4614, %v4612
        %v4821 = vpack.c.b16 %v4617, %v4615
        %v4822 = vpack.c.b16 %v4618, %v4616
        %v4823 = vpack.c.b16 %v4621, %v4619
        %v4824 = vpack.c.b16 %v4622, %v4620
        %v4825 = vpack.c.b16 %v4625, %v4623
        %v4826 = vpack.c.b16 %v4626, %v4624
        %v4827 = vpack.c.b16 %v4629, %v4627
        %v4828 = vpack.c.b16 %v4630, %v4628
        %v4829 = vpack.c.b16 %v4633, %v4631
        %v4830 = vpack.c.b16 %v4634, %v4632
        %v4831 = vpack.c.b16 %v4637, %v4635
        %v4832 = vpack.c.b16 %v4638, %v4636
        %v4833 = vpack.c.b16 %v4641, %v4639
        %v4834 = vpack.c.b16 %v4642, %v4640
        %v4835 = vpack.c.b16 %v4645, %v4643
        %v4836 = vpack.c.b16 %v4646, %v4644
        %v4837 = vpack.c.b16 %v4649, %v4647
        %v4838 = vpack.c.b16 %v4650, %v4648
        %v4839 = vpack.c.b16 %v4653, %v4651
        %v4840 = vpack.c.b16 %v4654, %v4652
        %v4841 = vpack.c.b16 %v4657, %v4655
        %v4842 = vpack.c.b16 %v4658, %v4656
        %v4843 = vpack.c.b16 %v4661, %v4659
        %v4844 = vpack.c.b16 %v4662, %v4660
        %v4845 = vpack.c.b16 %v4665, %v4663
        %v4846 = vpack.c.b16 %v4666, %v4664
        %v4847 = vpack.c.b16 %v4669, %v4667
        %v4848 = vpack.c.b16 %v4670, %v4668
        %v4849 = vpack.c.b16 %v4673, %v4671
        %v4850 = vpack.c.b16 %v4674, %v4672
        %v4851 = vpack.c.b16 %v4677, %v4675
        %v4852 = vpack.c.b16 %v4678, %v4676
        %v4853 = vpack.c.b16 %v4681, %v4679
        %v4854 = vpack.c.b16 %v4682, %v4680
        %v4855 = vpack.c.b16 %v4685, %v4683
        %v4856 = vpack.c.b16 %v4686, %v4684
        %v4857 = vpack.c.b16 %v4689, %v4687
        %v4858 = vpack.c.b16 %v4690, %v4688
        %v4859 = vpack.c.b16 %v4693, %v4691
        %v4860 = vpack.c.b16 %v4694, %v4692
        %v4861 = vpack.c.b16 %v4697, %v4695
        %v4862 = vpack.c.b16 %v4698, %v4696
        %v4863 = vpack.c.b16 %v4701, %v4699
        %v4864 = vpack.c.b16 %v4702, %v4700
        %v4865 = vpack.c.b16 %v4705, %v4703
        %v4866 = vpack.c.b16 %v4706, %v4704
        %v4867 = vpack.c.b16 %v4709, %v4707
        %v4868 = vpack.c.b16 %v4710, %v4708
        %v4869 = vpack.c.b16 %v4713, %v4711
        %v4870 = vpack.c.b16 %v4714, %v4712
        %v4871 = vpack.c.b16 %v4717, %v4715
        %v4872 = vpack.c.b16 %v4718, %v4716
        %v4873 = vpack.c.b16 %v4721, %v4719
        %v4874 = vpack.c.b16 %v4722, %v4720
        %v4875 = vpack.c.b16 %v4725, %v4723
        %v4876 = vpack.c.b16 %v4726, %v4724
        %v4877 = vpack.c.b16 %v4729, %v4727
        %v4878 = vpack.c.b16 %v4730, %v4728
        %v4879 = vpack.c.b16 %v4733, %v4731
        %v4880 = vpack.c.b16 %v4734, %v4732
        %v4881 = vpack.c.b16 %v4737, %v4735
        %v4882 = vpack.c.b16 %v4738, %v4736
        %v4883 = vpack.c.b16 %v4741, %v4739
        %v4884 = vpack.c.b16 %v4742, %v4740
        %v4885 = vpack.c.b16 %v4745, %v4743
        %v4886 = vpack.c.b16 %v4746, %v4744
        %v4887 = vpack.c.b16 %v4749, %v4747
        %v4888 = vpack.c.b16 %v4750, %v4748
        %v4889 = vpack.c.b16 %v4753, %v4751
        %v4890 = vpack.c.b16 %v4754, %v4752
        %v4891 = vpack.c.b16 %v4757, %v4755
        %v4892 = vpack.c.b16 %v4758, %v4756
        %v4893 = vpack.c.b16 %v4761, %v4759
        %v4894 = vpack.c.b16 %v4762, %v4760
        %v4895 = vpack.c.b16 %v4765, %v4763
        %v4896 = vpack.c.b16 %v4766, %v4764
        %v4897 = vpack.c.b16 %v4769, %v4767
        %v4898 = vpack.c.b16 %v4770, %v4768
        %5027 = vmatprep.subr.bf16.mxu0 %v4786
        %5028 = vmatpush1.bf16.msra.mxu0 %v4785
        %5029 = vmatprep.subr.bf16.mxu0 %v4784
        %5030 = vmatpush1.bf16.msra.mxu0 %v4783
        %5031 = vmatprep.subr.bf16.mxu0 %v4782
        %5032 = vmatpush1.bf16.msra.mxu0 %v4781
        %5033 = vmatprep.subr.bf16.mxu0 %v4780
        %5034 = vmatpush1.bf16.msra.mxu0 %v4779
        %5035 = vmatprep.subr.bf16.mxu0 %v4778
        %5036 = vmatpush1.bf16.msra.mxu0 %v4777
        %5037 = vmatprep.subr.bf16.mxu0 %v4776
        %5038 = vmatpush1.bf16.msra.mxu0 %v4775
        %5039 = vmatprep.subr.bf16.mxu0 %v4774
        %5040 = vmatpush1.bf16.msra.mxu0 %v4773
        %5041 = vmatprep.subr.bf16.mxu0 %v4772
        %5042 = vmatpush1.bf16.msra.mxu0 %v4771
        %5043 = vmatprep.subr.bf16.mxu0 %v4802
        %5044 = vmatpush2.bf16.msra.mxu0 %v4801
        %5045 = vmatprep.subr.bf16.mxu0 %v4800
        %5046 = vmatpush2.bf16.msra.mxu0 %v4799
        %5047 = vmatprep.subr.bf16.mxu0 %v4798
        %5048 = vmatpush2.bf16.msra.mxu0 %v4797
        %5049 = vmatprep.subr.bf16.mxu0 %v4796
        %5050 = vmatpush2.bf16.msra.mxu0 %v4795
        %5051 = vmatprep.subr.bf16.mxu0 %v4794
        %5052 = vmatpush2.bf16.msra.mxu0 %v4793
        %5053 = vmatprep.subr.bf16.mxu0 %v4792
        %5054 = vmatpush2.bf16.msra.mxu0 %v4791
        %5055 = vmatprep.subr.bf16.mxu0 %v4790
        %5056 = vmatpush2.bf16.msra.mxu0 %v4789
        %5057 = vmatprep.subr.bf16.mxu0 %v4788
        %5058 = vmatpush2.bf16.msra.mxu0 %v4787
        %5059 = vmatprep.mubr.bf16.mxu0 %v4164
        %5060 = vmatmul.mubr.bf16.gmra.mxu0 %v4163
        %v5061 = vpop.f32.mrf.mxu0
        %v5062 = vadd.f32 0.0, %v5061
        %v5063 = vpop.f32.mrf.mxu0
        %v5064 = vadd.f32 0.0, %v5063
        %v5065 = vpop.f32.mrf.mxu0
        %v5066 = vadd.f32 0.0, %v5065
        %v5067 = vpop.f32.mrf.mxu0
        %v5068 = vadd.f32 0.0, %v5067
        %5069 = vmatprep.mubr.bf16.mxu0 %v4172
        %5070 = vmatmul.mubr.bf16.gmra.mxu0 %v4171
        %v5071 = vpop.f32.mrf.mxu0
        %v5072 = vadd.f32 0.0, %v5071
        %v5073 = vpop.f32.mrf.mxu0
        %v5074 = vadd.f32 0.0, %v5073
        %v5075 = vpop.f32.mrf.mxu0
        %v5076 = vadd.f32 0.0, %v5075
        %v5077 = vpop.f32.mrf.mxu0
        %v5078 = vadd.f32 0.0, %v5077
        %5079 = vmatprep.mubr.bf16.mxu0 %v4180
        %5080 = vmatmul.mubr.bf16.gmra.mxu0 %v4179
        %v5081 = vpop.f32.mrf.mxu0
        %v5082 = vadd.f32 0.0, %v5081
        %v5083 = vpop.f32.mrf.mxu0
        %v5084 = vadd.f32 0.0, %v5083
        %v5085 = vpop.f32.mrf.mxu0
        %v5086 = vadd.f32 0.0, %v5085
        %v5087 = vpop.f32.mrf.mxu0
        %v5088 = vadd.f32 0.0, %v5087
        %5089 = vmatprep.mubr.bf16.mxu0 %v4188
        %5090 = vmatmul.mubr.bf16.gmra.mxu0 %v4187
        %v5091 = vpop.f32.mrf.mxu0
        %v5092 = vadd.f32 0.0, %v5091
        %v5093 = vpop.f32.mrf.mxu0
        %v5094 = vadd.f32 0.0, %v5093
        %v5095 = vpop.f32.mrf.mxu0
        %v5096 = vadd.f32 0.0, %v5095
        %v5097 = vpop.f32.mrf.mxu0
        %v5098 = vadd.f32 0.0, %v5097
        %5099 = vmatprep.mubr.bf16.mxu0 %v4196
        %5100 = vmatmul.mubr.bf16.gmra.mxu0 %v4195
        %v5101 = vpop.f32.mrf.mxu0
        %v5102 = vadd.f32 0.0, %v5101
        %v5103 = vpop.f32.mrf.mxu0
        %v5104 = vadd.f32 0.0, %v5103
        %v5105 = vpop.f32.mrf.mxu0
        %v5106 = vadd.f32 0.0, %v5105
        %v5107 = vpop.f32.mrf.mxu0
        %v5108 = vadd.f32 0.0, %v5107
        %5109 = vmatprep.mubr.bf16.mxu0 %v4204
        %5110 = vmatmul.mubr.bf16.gmra.mxu0 %v4203
        %v5111 = vpop.f32.mrf.mxu0
        %v5112 = vadd.f32 0.0, %v5111
        %v5113 = vpop.f32.mrf.mxu0
        %v5114 = vadd.f32 0.0, %v5113
        %v5115 = vpop.f32.mrf.mxu0
        %v5116 = vadd.f32 0.0, %v5115
        %v5117 = vpop.f32.mrf.mxu0
        %v5118 = vadd.f32 0.0, %v5117
        %5119 = vmatprep.mubr.bf16.mxu0 %v4212
        %5120 = vmatmul.mubr.bf16.gmra.mxu0 %v4211
        %v5121 = vpop.f32.mrf.mxu0
        %v5122 = vadd.f32 0.0, %v5121
        %v5123 = vpop.f32.mrf.mxu0
        %v5124 = vadd.f32 0.0, %v5123
        %v5125 = vpop.f32.mrf.mxu0
        %v5126 = vadd.f32 0.0, %v5125
        %v5127 = vpop.f32.mrf.mxu0
        %v5128 = vadd.f32 0.0, %v5127
        %5129 = vmatprep.mubr.bf16.mxu0 %v4220
        %5130 = vmatmul.mubr.bf16.gmra.mxu0 %v4219
        %v5131 = vpop.f32.mrf.mxu0
        %v5132 = vadd.f32 0.0, %v5131
        %v5133 = vpop.f32.mrf.mxu0
        %v5134 = vadd.f32 0.0, %v5133
        %v5135 = vpop.f32.mrf.mxu0
        %v5136 = vadd.f32 0.0, %v5135
        %v5137 = vpop.f32.mrf.mxu0
        %v5138 = vadd.f32 0.0, %v5137
        %5139 = vdwg.mxu0
        %5140 = vmatprep.subr.bf16.mxu0 %v4818
        %5141 = vmatpush1.bf16.msra.mxu0 %v4817
        %5142 = vmatprep.subr.bf16.mxu0 %v4816
        %5143 = vmatpush1.bf16.msra.mxu0 %v4815
        %5144 = vmatprep.subr.bf16.mxu0 %v4814
        %5145 = vmatpush1.bf16.msra.mxu0 %v4813
        %5146 = vmatprep.subr.bf16.mxu0 %v4812
        %5147 = vmatpush1.bf16.msra.mxu0 %v4811
        %5148 = vmatprep.subr.bf16.mxu0 %v4810
        %5149 = vmatpush1.bf16.msra.mxu0 %v4809
        %5150 = vmatprep.subr.bf16.mxu0 %v4808
        %5151 = vmatpush1.bf16.msra.mxu0 %v4807
        %5152 = vmatprep.subr.bf16.mxu0 %v4806
        %5153 = vmatpush1.bf16.msra.mxu0 %v4805
        %5154 = vmatprep.subr.bf16.mxu0 %v4804
        %5155 = vmatpush1.bf16.msra.mxu0 %v4803
        %5156 = vmatprep.subr.bf16.mxu0 %v4834
        %5157 = vmatpush2.bf16.msra.mxu0 %v4833
        %5158 = vmatprep.subr.bf16.mxu0 %v4832
        %5159 = vmatpush2.bf16.msra.mxu0 %v4831
        %5160 = vmatprep.subr.bf16.mxu0 %v4830
        %5161 = vmatpush2.bf16.msra.mxu0 %v4829
        %5162 = vmatprep.subr.bf16.mxu0 %v4828
        %5163 = vmatpush2.bf16.msra.mxu0 %v4827
        %5164 = vmatprep.subr.bf16.mxu0 %v4826
        %5165 = vmatpush2.bf16.msra.mxu0 %v4825
        %5166 = vmatprep.subr.bf16.mxu0 %v4824
        %5167 = vmatpush2.bf16.msra.mxu0 %v4823
        %5168 = vmatprep.subr.bf16.mxu0 %v4822
        %5169 = vmatpush2.bf16.msra.mxu0 %v4821
        %5170 = vmatprep.subr.bf16.mxu0 %v4820
        %5171 = vmatpush2.bf16.msra.mxu0 %v4819
        %5172 = vmatprep.mubr.bf16.mxu0 %v4166
        %5173 = vmatmul.mubr.bf16.gmra.mxu0 %v4165
        %v5174 = vpop.f32.mrf.mxu0
        %v5175 = vadd.f32 %v5062, %v5174
        %v5176 = vpop.f32.mrf.mxu0
        %v5177 = vadd.f32 %v5064, %v5176
        %v5178 = vpop.f32.mrf.mxu0
        %v5179 = vadd.f32 %v5066, %v5178
        %v5180 = vpop.f32.mrf.mxu0
        %v5181 = vadd.f32 %v5068, %v5180
        %5182 = vmatprep.mubr.bf16.mxu0 %v4174
        %5183 = vmatmul.mubr.bf16.gmra.mxu0 %v4173
        %v5184 = vpop.f32.mrf.mxu0
        %v5185 = vadd.f32 %v5072, %v5184
        %v5186 = vpop.f32.mrf.mxu0
        %v5187 = vadd.f32 %v5074, %v5186
        %v5188 = vpop.f32.mrf.mxu0
        %v5189 = vadd.f32 %v5076, %v5188
        %v5190 = vpop.f32.mrf.mxu0
        %v5191 = vadd.f32 %v5078, %v5190
        %5192 = vmatprep.mubr.bf16.mxu0 %v4182
        %5193 = vmatmul.mubr.bf16.gmra.mxu0 %v4181
        %v5194 = vpop.f32.mrf.mxu0
        %v5195 = vadd.f32 %v5082, %v5194
        %v5196 = vpop.f32.mrf.mxu0
        %v5197 = vadd.f32 %v5084, %v5196
        %v5198 = vpop.f32.mrf.mxu0
        %v5199 = vadd.f32 %v5086, %v5198
        %v5200 = vpop.f32.mrf.mxu0
        %v5201 = vadd.f32 %v5088, %v5200
        %5202 = vmatprep.mubr.bf16.mxu0 %v4190
        %5203 = vmatmul.mubr.bf16.gmra.mxu0 %v4189
        %v5204 = vpop.f32.mrf.mxu0
        %v5205 = vadd.f32 %v5092, %v5204
        %v5206 = vpop.f32.mrf.mxu0
        %v5207 = vadd.f32 %v5094, %v5206
        %v5208 = vpop.f32.mrf.mxu0
        %v5209 = vadd.f32 %v5096, %v5208
        %v5210 = vpop.f32.mrf.mxu0
        %v5211 = vadd.f32 %v5098, %v5210
        %5212 = vmatprep.mubr.bf16.mxu0 %v4198
        %5213 = vmatmul.mubr.bf16.gmra.mxu0 %v4197
        %v5214 = vpop.f32.mrf.mxu0
        %v5215 = vadd.f32 %v5102, %v5214
        %v5216 = vpop.f32.mrf.mxu0
        %v5217 = vadd.f32 %v5104, %v5216
        %v5218 = vpop.f32.mrf.mxu0
        %v5219 = vadd.f32 %v5106, %v5218
        %v5220 = vpop.f32.mrf.mxu0
        %v5221 = vadd.f32 %v5108, %v5220
        %5222 = vmatprep.mubr.bf16.mxu0 %v4206
        %5223 = vmatmul.mubr.bf16.gmra.mxu0 %v4205
        %v5224 = vpop.f32.mrf.mxu0
        %v5225 = vadd.f32 %v5112, %v5224
        %v5226 = vpop.f32.mrf.mxu0
        %v5227 = vadd.f32 %v5114, %v5226
        %v5228 = vpop.f32.mrf.mxu0
        %v5229 = vadd.f32 %v5116, %v5228
        %v5230 = vpop.f32.mrf.mxu0
        %v5231 = vadd.f32 %v5118, %v5230
        %5232 = vmatprep.mubr.bf16.mxu0 %v4214
        %5233 = vmatmul.mubr.bf16.gmra.mxu0 %v4213
        %v5234 = vpop.f32.mrf.mxu0
        %v5235 = vadd.f32 %v5122, %v5234
        %v5236 = vpop.f32.mrf.mxu0
        %v5237 = vadd.f32 %v5124, %v5236
        %v5238 = vpop.f32.mrf.mxu0
        %v5239 = vadd.f32 %v5126, %v5238
        %v5240 = vpop.f32.mrf.mxu0
        %v5241 = vadd.f32 %v5128, %v5240
        %5242 = vmatprep.mubr.bf16.mxu0 %v4222
        %5243 = vmatmul.mubr.bf16.gmra.mxu0 %v4221
        %v5244 = vpop.f32.mrf.mxu0
        %v5245 = vadd.f32 %v5132, %v5244
        %v5246 = vpop.f32.mrf.mxu0
        %v5247 = vadd.f32 %v5134, %v5246
        %v5248 = vpop.f32.mrf.mxu0
        %v5249 = vadd.f32 %v5136, %v5248
        %v5250 = vpop.f32.mrf.mxu0
        %v5251 = vadd.f32 %v5138, %v5250
        %5252 = vdwg.mxu0
        %5253 = vmatprep.subr.bf16.mxu0 %v4850
        %5254 = vmatpush1.bf16.msra.mxu0 %v4849
        %5255 = vmatprep.subr.bf16.mxu0 %v4848
        %5256 = vmatpush1.bf16.msra.mxu0 %v4847
        %5257 = vmatprep.subr.bf16.mxu0 %v4846
        %5258 = vmatpush1.bf16.msra.mxu0 %v4845
        %5259 = vmatprep.subr.bf16.mxu0 %v4844
        %5260 = vmatpush1.bf16.msra.mxu0 %v4843
        %5261 = vmatprep.subr.bf16.mxu0 %v4842
        %5262 = vmatpush1.bf16.msra.mxu0 %v4841
        %5263 = vmatprep.subr.bf16.mxu0 %v4840
        %5264 = vmatpush1.bf16.msra.mxu0 %v4839
        %5265 = vmatprep.subr.bf16.mxu0 %v4838
        %5266 = vmatpush1.bf16.msra.mxu0 %v4837
        %5267 = vmatprep.subr.bf16.mxu0 %v4836
        %5268 = vmatpush1.bf16.msra.mxu0 %v4835
        %5269 = vmatprep.subr.bf16.mxu0 %v4866
        %5270 = vmatpush2.bf16.msra.mxu0 %v4865
        %5271 = vmatprep.subr.bf16.mxu0 %v4864
        %5272 = vmatpush2.bf16.msra.mxu0 %v4863
        %5273 = vmatprep.subr.bf16.mxu0 %v4862
        %5274 = vmatpush2.bf16.msra.mxu0 %v4861
        %5275 = vmatprep.subr.bf16.mxu0 %v4860
        %5276 = vmatpush2.bf16.msra.mxu0 %v4859
        %5277 = vmatprep.subr.bf16.mxu0 %v4858
        %5278 = vmatpush2.bf16.msra.mxu0 %v4857
        %5279 = vmatprep.subr.bf16.mxu0 %v4856
        %5280 = vmatpush2.bf16.msra.mxu0 %v4855
        %5281 = vmatprep.subr.bf16.mxu0 %v4854
        %5282 = vmatpush2.bf16.msra.mxu0 %v4853
        %5283 = vmatprep.subr.bf16.mxu0 %v4852
        %5284 = vmatpush2.bf16.msra.mxu0 %v4851
        %5285 = vmatprep.mubr.bf16.mxu0 %v4168
        %5286 = vmatmul.mubr.bf16.gmra.mxu0 %v4167
        %v5287 = vpop.f32.mrf.mxu0
        %v5288 = vadd.f32 %v5175, %v5287
        %v5289 = vpop.f32.mrf.mxu0
        %v5290 = vadd.f32 %v5177, %v5289
        %v5291 = vpop.f32.mrf.mxu0
        %v5292 = vadd.f32 %v5179, %v5291
        %v5293 = vpop.f32.mrf.mxu0
        %v5294 = vadd.f32 %v5181, %v5293
        %5295 = vmatprep.mubr.bf16.mxu0 %v4176
        %5296 = vmatmul.mubr.bf16.gmra.mxu0 %v4175
        %v5297 = vpop.f32.mrf.mxu0
        %v5298 = vadd.f32 %v5185, %v5297
        %v5299 = vpop.f32.mrf.mxu0
        %v5300 = vadd.f32 %v5187, %v5299
        %v5301 = vpop.f32.mrf.mxu0
        %v5302 = vadd.f32 %v5189, %v5301
        %v5303 = vpop.f32.mrf.mxu0
        %v5304 = vadd.f32 %v5191, %v5303
        %5305 = vmatprep.mubr.bf16.mxu0 %v4184
        %5306 = vmatmul.mubr.bf16.gmra.mxu0 %v4183
        %v5307 = vpop.f32.mrf.mxu0
        %v5308 = vadd.f32 %v5195, %v5307
        %v5309 = vpop.f32.mrf.mxu0
        %v5310 = vadd.f32 %v5197, %v5309
        %v5311 = vpop.f32.mrf.mxu0
        %v5312 = vadd.f32 %v5199, %v5311
        %v5313 = vpop.f32.mrf.mxu0
        %v5314 = vadd.f32 %v5201, %v5313
        %5315 = vmatprep.mubr.bf16.mxu0 %v4192
        %5316 = vmatmul.mubr.bf16.gmra.mxu0 %v4191
        %v5317 = vpop.f32.mrf.mxu0
        %v5318 = vadd.f32 %v5205, %v5317
        %v5319 = vpop.f32.mrf.mxu0
        %v5320 = vadd.f32 %v5207, %v5319
        %v5321 = vpop.f32.mrf.mxu0
        %v5322 = vadd.f32 %v5209, %v5321
        %v5323 = vpop.f32.mrf.mxu0
        %v5324 = vadd.f32 %v5211, %v5323
        %5325 = vmatprep.mubr.bf16.mxu0 %v4200
        %5326 = vmatmul.mubr.bf16.gmra.mxu0 %v4199
        %v5327 = vpop.f32.mrf.mxu0
        %v5328 = vadd.f32 %v5215, %v5327
        %v5329 = vpop.f32.mrf.mxu0
        %v5330 = vadd.f32 %v5217, %v5329
        %v5331 = vpop.f32.mrf.mxu0
        %v5332 = vadd.f32 %v5219, %v5331
        %v5333 = vpop.f32.mrf.mxu0
        %v5334 = vadd.f32 %v5221, %v5333
        %5335 = vmatprep.mubr.bf16.mxu0 %v4208
        %5336 = vmatmul.mubr.bf16.gmra.mxu0 %v4207
        %v5337 = vpop.f32.mrf.mxu0
        %v5338 = vadd.f32 %v5225, %v5337
        %v5339 = vpop.f32.mrf.mxu0
        %v5340 = vadd.f32 %v5227, %v5339
        %v5341 = vpop.f32.mrf.mxu0
        %v5342 = vadd.f32 %v5229, %v5341
        %v5343 = vpop.f32.mrf.mxu0
        %v5344 = vadd.f32 %v5231, %v5343
        %5345 = vmatprep.mubr.bf16.mxu0 %v4216
        %5346 = vmatmul.mubr.bf16.gmra.mxu0 %v4215
        %v5347 = vpop.f32.mrf.mxu0
        %v5348 = vadd.f32 %v5235, %v5347
        %v5349 = vpop.f32.mrf.mxu0
        %v5350 = vadd.f32 %v5237, %v5349
        %v5351 = vpop.f32.mrf.mxu0
        %v5352 = vadd.f32 %v5239, %v5351
        %v5353 = vpop.f32.mrf.mxu0
        %v5354 = vadd.f32 %v5241, %v5353
        %5355 = vmatprep.mubr.bf16.mxu0 %v4224
        %5356 = vmatmul.mubr.bf16.gmra.mxu0 %v4223
        %v5357 = vpop.f32.mrf.mxu0
        %v5358 = vadd.f32 %v5245, %v5357
        %v5359 = vpop.f32.mrf.mxu0
        %v5360 = vadd.f32 %v5247, %v5359
        %v5361 = vpop.f32.mrf.mxu0
        %v5362 = vadd.f32 %v5249, %v5361
        %v5363 = vpop.f32.mrf.mxu0
        %v5364 = vadd.f32 %v5251, %v5363
        %5365 = vdwg.mxu0
        %5366 = vmatprep.subr.bf16.mxu0 %v4882
        %5367 = vmatpush1.bf16.msra.mxu0 %v4881
        %5368 = vmatprep.subr.bf16.mxu0 %v4880
        %5369 = vmatpush1.bf16.msra.mxu0 %v4879
        %5370 = vmatprep.subr.bf16.mxu0 %v4878
        %5371 = vmatpush1.bf16.msra.mxu0 %v4877
        %5372 = vmatprep.subr.bf16.mxu0 %v4876
        %5373 = vmatpush1.bf16.msra.mxu0 %v4875
        %5374 = vmatprep.subr.bf16.mxu0 %v4874
        %5375 = vmatpush1.bf16.msra.mxu0 %v4873
        %5376 = vmatprep.subr.bf16.mxu0 %v4872
        %5377 = vmatpush1.bf16.msra.mxu0 %v4871
        %5378 = vmatprep.subr.bf16.mxu0 %v4870
        %5379 = vmatpush1.bf16.msra.mxu0 %v4869
        %5380 = vmatprep.subr.bf16.mxu0 %v4868
        %5381 = vmatpush1.bf16.msra.mxu0 %v4867
        %5382 = vmatprep.subr.bf16.mxu0 %v4898
        %5383 = vmatpush2.bf16.msra.mxu0 %v4897
        %5384 = vmatprep.subr.bf16.mxu0 %v4896
        %5385 = vmatpush2.bf16.msra.mxu0 %v4895
        %5386 = vmatprep.subr.bf16.mxu0 %v4894
        %5387 = vmatpush2.bf16.msra.mxu0 %v4893
        %5388 = vmatprep.subr.bf16.mxu0 %v4892
        %5389 = vmatpush2.bf16.msra.mxu0 %v4891
        %5390 = vmatprep.subr.bf16.mxu0 %v4890
        %5391 = vmatpush2.bf16.msra.mxu0 %v4889
        %5392 = vmatprep.subr.bf16.mxu0 %v4888
        %5393 = vmatpush2.bf16.msra.mxu0 %v4887
        %5394 = vmatprep.subr.bf16.mxu0 %v4886
        %5395 = vmatpush2.bf16.msra.mxu0 %v4885
        %5396 = vmatprep.subr.bf16.mxu0 %v4884
        %5397 = vmatpush2.bf16.msra.mxu0 %v4883
        %5398 = vmatprep.mubr.bf16.mxu0 %v4170
        %5399 = vmatmul.mubr.bf16.gmra.mxu0 %v4169
        %v5400 = vpop.f32.mrf.mxu0
        %v5401 = vadd.f32 %v5288, %v5400
        %v5402 = vpop.f32.mrf.mxu0
        %v5403 = vadd.f32 %v5290, %v5402
        %v5404 = vpop.f32.mrf.mxu0
        %v5405 = vadd.f32 %v5292, %v5404
        %v5406 = vpop.f32.mrf.mxu0
        %v5407 = vadd.f32 %v5294, %v5406
        %5408 = vmatprep.mubr.bf16.mxu0 %v4178
        %5409 = vmatmul.mubr.bf16.gmra.mxu0 %v4177
        %v5410 = vpop.f32.mrf.mxu0
        %v5411 = vadd.f32 %v5298, %v5410
        %v5412 = vpop.f32.mrf.mxu0
        %v5413 = vadd.f32 %v5300, %v5412
        %v5414 = vpop.f32.mrf.mxu0
        %v5415 = vadd.f32 %v5302, %v5414
        %v5416 = vpop.f32.mrf.mxu0
        %v5417 = vadd.f32 %v5304, %v5416
        %5418 = vmatprep.mubr.bf16.mxu0 %v4186
        %5419 = vmatmul.mubr.bf16.gmra.mxu0 %v4185
        %v5420 = vpop.f32.mrf.mxu0
        %v5421 = vadd.f32 %v5308, %v5420
        %v5422 = vpop.f32.mrf.mxu0
        %v5423 = vadd.f32 %v5310, %v5422
        %v5424 = vpop.f32.mrf.mxu0
        %v5425 = vadd.f32 %v5312, %v5424
        %v5426 = vpop.f32.mrf.mxu0
        %v5427 = vadd.f32 %v5314, %v5426
        %5428 = vmatprep.mubr.bf16.mxu0 %v4194
        %5429 = vmatmul.mubr.bf16.gmra.mxu0 %v4193
        %v5430 = vpop.f32.mrf.mxu0
        %v5431 = vadd.f32 %v5318, %v5430
        %v5432 = vpop.f32.mrf.mxu0
        %v5433 = vadd.f32 %v5320, %v5432
        %v5434 = vpop.f32.mrf.mxu0
        %v5435 = vadd.f32 %v5322, %v5434
        %v5436 = vpop.f32.mrf.mxu0
        %v5437 = vadd.f32 %v5324, %v5436
        %5438 = vmatprep.mubr.bf16.mxu0 %v4202
        %5439 = vmatmul.mubr.bf16.gmra.mxu0 %v4201
        %v5440 = vpop.f32.mrf.mxu0
        %v5441 = vadd.f32 %v5328, %v5440
        %v5442 = vpop.f32.mrf.mxu0
        %v5443 = vadd.f32 %v5330, %v5442
        %v5444 = vpop.f32.mrf.mxu0
        %v5445 = vadd.f32 %v5332, %v5444
        %v5446 = vpop.f32.mrf.mxu0
        %v5447 = vadd.f32 %v5334, %v5446
        %5448 = vmatprep.mubr.bf16.mxu0 %v4210
        %5449 = vmatmul.mubr.bf16.gmra.mxu0 %v4209
        %v5450 = vpop.f32.mrf.mxu0
        %v5451 = vadd.f32 %v5338, %v5450
        %v5452 = vpop.f32.mrf.mxu0
        %v5453 = vadd.f32 %v5340, %v5452
        %v5454 = vpop.f32.mrf.mxu0
        %v5455 = vadd.f32 %v5342, %v5454
        %v5456 = vpop.f32.mrf.mxu0
        %v5457 = vadd.f32 %v5344, %v5456
        %5458 = vmatprep.mubr.bf16.mxu0 %v4218
        %5459 = vmatmul.mubr.bf16.gmra.mxu0 %v4217
        %v5460 = vpop.f32.mrf.mxu0
        %v5461 = vadd.f32 %v5348, %v5460
        %v5462 = vpop.f32.mrf.mxu0
        %v5463 = vadd.f32 %v5350, %v5462
        %v5464 = vpop.f32.mrf.mxu0
        %v5465 = vadd.f32 %v5352, %v5464
        %v5466 = vpop.f32.mrf.mxu0
        %v5467 = vadd.f32 %v5354, %v5466
        %5468 = vmatprep.mubr.bf16.mxu0 %v4226
        %5469 = vmatmul.mubr.bf16.gmra.mxu0 %v4225
        %v5470 = vpop.f32.mrf.mxu0
        %v5471 = vadd.f32 %v5358, %v5470
        %v5472 = vpop.f32.mrf.mxu0
        %v5473 = vadd.f32 %v5360, %v5472
        %v5474 = vpop.f32.mrf.mxu0
        %v5475 = vadd.f32 %v5362, %v5474
        %v5476 = vpop.f32.mrf.mxu0
        %v5477 = vadd.f32 %v5364, %v5476
        %5478 = vdwg.mxu0
        %v5479 = vadd.f32 %v4227, %v5401
        %v5480 = vadd.f32 %v4228, %v5403
        %v5481 = vadd.f32 %v4229, %v5405
        %v5482 = vadd.f32 %v4230, %v5407
        %v5483 = vadd.f32 %v4231, %v5411
        %v5484 = vadd.f32 %v4232, %v5413
        %v5485 = vadd.f32 %v4233, %v5415
        %v5486 = vadd.f32 %v4234, %v5417
        %v5487 = vadd.f32 %v4235, %v5421
        %v5488 = vadd.f32 %v4236, %v5423
        %v5489 = vadd.f32 %v4237, %v5425
        %v5490 = vadd.f32 %v4238, %v5427
        %v5491 = vadd.f32 %v4239, %v5431
        %v5492 = vadd.f32 %v4240, %v5433
        %v5493 = vadd.f32 %v4241, %v5435
        %v5494 = vadd.f32 %v4242, %v5437
        %v5495 = vadd.f32 %v4243, %v5441
        %v5496 = vadd.f32 %v4244, %v5443
        %v5497 = vadd.f32 %v4245, %v5445
        %v5498 = vadd.f32 %v4246, %v5447
        %v5499 = vadd.f32 %v4247, %v5451
        %v5500 = vadd.f32 %v4248, %v5453
        %v5501 = vadd.f32 %v4249, %v5455
        %v5502 = vadd.f32 %v4250, %v5457
        %v5503 = vadd.f32 %v4251, %v5461
        %v5504 = vadd.f32 %v4252, %v5463
        %v5505 = vadd.f32 %v4253, %v5465
        %v5506 = vadd.f32 %v4254, %v5467
        %v5507 = vadd.f32 %v4255, %v5471
        %v5508 = vadd.f32 %v4256, %v5473
        %v5509 = vadd.f32 %v4257, %v5475
        %v5510 = vadd.f32 %v4258, %v5477
        %5511 = vst [vmem:[#allocation2] sm:$0xff] %v5479
        %5512 = vst [vmem:[#allocation2 + $0x8] sm:$0xff] %v5480
        %5513 = vst [vmem:[#allocation2 + $0x10] sm:$0xff] %v5481
        %5514 = vst [vmem:[#allocation2 + $0x18] sm:$0xff] %v5482
        %5515 = vst [vmem:[#allocation2 + $0x20] sm:$0xff] %v5483
        %5516 = vst [vmem:[#allocation2 + $0x28] sm:$0xff] %v5484
        %5517 = vst [vmem:[#allocation2 + $0x30] sm:$0xff] %v5485
        %5518 = vst [vmem:[#allocation2 + $0x38] sm:$0xff] %v5486
        %5519 = vst [vmem:[#allocation2 + $0x40] sm:$0xff] %v5487
        %5520 = vst [vmem:[#allocation2 + $0x48] sm:$0xff] %v5488
        %5521 = vst [vmem:[#allocation2 + $0x50] sm:$0xff] %v5489
        %5522 = vst [vmem:[#allocation2 + $0x58] sm:$0xff] %v5490
        %5523 = vst [vmem:[#allocation2 + $0x60] sm:$0xff] %v5491
        %5524 = vst [vmem:[#allocation2 + $0x68] sm:$0xff] %v5492
        %5525 = vst [vmem:[#allocation2 + $0x70] sm:$0xff] %v5493
        %5526 = vst [vmem:[#allocation2 + $0x78] sm:$0xff] %v5494
        %5527 = vst [vmem:[#allocation2 + $0x80] sm:$0xff] %v5495
        %5528 = vst [vmem:[#allocation2 + $0x88] sm:$0xff] %v5496
        %5529 = vst [vmem:[#allocation2 + $0x90] sm:$0xff] %v5497
        %5530 = vst [vmem:[#allocation2 + $0x98] sm:$0xff] %v5498
        %5531 = vst [vmem:[#allocation2 + $0xa0] sm:$0xff] %v5499
        %5532 = vst [vmem:[#allocation2 + $0xa8] sm:$0xff] %v5500
        %5533 = vst [vmem:[#allocation2 + $0xb0] sm:$0xff] %v5501
        %5534 = vst [vmem:[#allocation2 + $0xb8] sm:$0xff] %v5502
        %5535 = vst [vmem:[#allocation2 + $0xc0] sm:$0xff] %v5503
        %5536 = vst [vmem:[#allocation2 + $0xc8] sm:$0xff] %v5504
        %5537 = vst [vmem:[#allocation2 + $0xd0] sm:$0xff] %v5505
        %5538 = vst [vmem:[#allocation2 + $0xd8] sm:$0xff] %v5506
        %5539 = vst [vmem:[#allocation2 + $0xe0] sm:$0xff] %v5507
        %5540 = vst [vmem:[#allocation2 + $0xe8] sm:$0xff] %v5508
        %5541 = vst [vmem:[#allocation2 + $0xf0] sm:$0xff] %v5509
        %5542 = vst [vmem:[#allocation2 + $0xf8] sm:$0xff] %v5510
        %p5543 = scmp.eq.s32.totalorder %s27, 3
        %p5544 = pnand %p5543, %p342
        %p5545 = pneg %p5544
        // Predicated region
        $region45: #{moe_layer_forward.3} parent=35 // pred_check
          _
        $region46: #{moe_layer_forward.3} parent=35 // pred_check_branch
          %5547 = sbr.rel (%p5544) target = $region48
        $region47: #{moe_layer_forward.3} parent=35 // pred_region
          %v5548 = vld [vmem:[#allocation2] sm:$0xff]
          %v5549 = vld [vmem:[#allocation2 + $0x8] sm:$0xff]
          %v5550 = vld [vmem:[#allocation2 + $0x10] sm:$0xff]
          %v5551 = vld [vmem:[#allocation2 + $0x18] sm:$0xff]
          %v5552 = vld [vmem:[#allocation2 + $0x20] sm:$0xff]
          %v5553 = vld [vmem:[#allocation2 + $0x28] sm:$0xff]
          %v5554 = vld [vmem:[#allocation2 + $0x30] sm:$0xff]
          %v5555 = vld [vmem:[#allocation2 + $0x38] sm:$0xff]
          %v5556 = vld [vmem:[#allocation2 + $0x40] sm:$0xff]
          %v5557 = vld [vmem:[#allocation2 + $0x48] sm:$0xff]
          %v5558 = vld [vmem:[#allocation2 + $0x50] sm:$0xff]
          %v5559 = vld [vmem:[#allocation2 + $0x58] sm:$0xff]
          %v5560 = vld [vmem:[#allocation2 + $0x60] sm:$0xff]
          %v5561 = vld [vmem:[#allocation2 + $0x68] sm:$0xff]
          %v5562 = vld [vmem:[#allocation2 + $0x70] sm:$0xff]
          %v5563 = vld [vmem:[#allocation2 + $0x78] sm:$0xff]
          %v5564 = vld [vmem:[#allocation2 + $0x80] sm:$0xff]
          %v5565 = vld [vmem:[#allocation2 + $0x88] sm:$0xff]
          %v5566 = vld [vmem:[#allocation2 + $0x90] sm:$0xff]
          %v5567 = vld [vmem:[#allocation2 + $0x98] sm:$0xff]
          %v5568 = vld [vmem:[#allocation2 + $0xa0] sm:$0xff]
          %v5569 = vld [vmem:[#allocation2 + $0xa8] sm:$0xff]
          %v5570 = vld [vmem:[#allocation2 + $0xb0] sm:$0xff]
          %v5571 = vld [vmem:[#allocation2 + $0xb8] sm:$0xff]
          %v5572 = vld [vmem:[#allocation2 + $0xc0] sm:$0xff]
          %v5573 = vld [vmem:[#allocation2 + $0xc8] sm:$0xff]
          %v5574 = vld [vmem:[#allocation2 + $0xd0] sm:$0xff]
          %v5575 = vld [vmem:[#allocation2 + $0xd8] sm:$0xff]
          %v5576 = vld [vmem:[#allocation2 + $0xe0] sm:$0xff]
          %v5577 = vld [vmem:[#allocation2 + $0xe8] sm:$0xff]
          %v5578 = vld [vmem:[#allocation2 + $0xf0] sm:$0xff]
          %v5579 = vld [vmem:[#allocation2 + $0xf8] sm:$0xff]
          %5580 = vst [vmem:[%s310] sm:$0xff] %v5548
          %5581 = vst [vmem:[%s310 + $0x8] sm:$0xff] %v5549
          %5582 = vst [vmem:[%s310 + $0x10] sm:$0xff] %v5550
          %5583 = vst [vmem:[%s310 + $0x18] sm:$0xff] %v5551
          %5584 = vst [vmem:[%s310 + $0x20] sm:$0xff] %v5552
          %5585 = vst [vmem:[%s310 + $0x28] sm:$0xff] %v5553
          %5586 = vst [vmem:[%s310 + $0x30] sm:$0xff] %v5554
          %5587 = vst [vmem:[%s310 + $0x38] sm:$0xff] %v5555
          %5588 = vst [vmem:[%s310 + $0x40] sm:$0xff] %v5556
          %5589 = vst [vmem:[%s310 + $0x48] sm:$0xff] %v5557
          %5590 = vst [vmem:[%s310 + $0x50] sm:$0xff] %v5558
          %5591 = vst [vmem:[%s310 + $0x58] sm:$0xff] %v5559
          %5592 = vst [vmem:[%s310 + $0x60] sm:$0xff] %v5560
          %5593 = vst [vmem:[%s310 + $0x68] sm:$0xff] %v5561
          %5594 = vst [vmem:[%s310 + $0x70] sm:$0xff] %v5562
          %5595 = vst [vmem:[%s310 + $0x78] sm:$0xff] %v5563
          %5596 = vst [vmem:[%s310 + $0x80] sm:$0xff] %v5564
          %5597 = vst [vmem:[%s310 + $0x88] sm:$0xff] %v5565
          %5598 = vst [vmem:[%s310 + $0x90] sm:$0xff] %v5566
          %5599 = vst [vmem:[%s310 + $0x98] sm:$0xff] %v5567
          %5600 = vst [vmem:[%s310 + $0xa0] sm:$0xff] %v5568
          %5601 = vst [vmem:[%s310 + $0xa8] sm:$0xff] %v5569
          %5602 = vst [vmem:[%s310 + $0xb0] sm:$0xff] %v5570
          %5603 = vst [vmem:[%s310 + $0xb8] sm:$0xff] %v5571
          %5604 = vst [vmem:[%s310 + $0xc0] sm:$0xff] %v5572
          %5605 = vst [vmem:[%s310 + $0xc8] sm:$0xff] %v5573
          %5606 = vst [vmem:[%s310 + $0xd0] sm:$0xff] %v5574
          %5607 = vst [vmem:[%s310 + $0xd8] sm:$0xff] %v5575
          %5608 = vst [vmem:[%s310 + $0xe0] sm:$0xff] %v5576
          %5609 = vst [vmem:[%s310 + $0xe8] sm:$0xff] %v5577
          %5610 = vst [vmem:[%s310 + $0xf0] sm:$0xff] %v5578
          %5611 = vst [vmem:[%s310 + $0xf8] sm:$0xff] %v5579
        $region48: #{moe_layer_forward.3} parent=35 // pred_fallthru
          _
        %s5612 = sand.u32 %s158, 1
        %s5613 = scalar_lea.sflag [#allocation5], %s5612
        %s5614 = sand.u32 %s158, 1
        %s5615 = smul.addr %s5614, 256
        %s5616 = scalar_lea.vmem [#allocation6], %s5615
        // Predicated region
        $region49: #{moe_layer_forward.3} parent=35 // pred_check
          %p5617 = pneg %p168
        $region50: #{moe_layer_forward.3} parent=35 // pred_check_branch
          %5619 = sbr.rel (%p5617) target = $region52
        $region51: #{moe_layer_forward.3} parent=35 // pred_region
          %s5620 = smul.u32 16, %s26
          %s5622 = ssub.s32 4096, 4096
          %5623 = vsyncadd %s5613, %s5622
          %s5624 = smul.addr %s5620, 2
          %s5625 = smul.addr %s5624, 128
          %s5626 = scalar_lea.hbm %s4, %s5625
          %s5627 = sshll.u32 %s5616, 4
          %s5628 = int_to_ptr.vmem [resolvable:$true] %s5627
          %5633 = dma.vmem_to_hbm [thread:$0]  %s5628, 4096, %s5626, %s5613, 256, 256, 16
        $region52: #{moe_layer_forward.3} parent=35 // pred_fallthru
          _
      $region36: #{moe_layer_forward.3} parent=5 // pred_fallthru
        _
      %p5634 = scmp.le.s32.totalorder 2, %s16
      // Predicated region
      $region53: #{moe_layer_forward.3} parent=5 // pred_check
        %p5635 = pneg %p5634
      $region54: #{moe_layer_forward.3} parent=5 // pred_check_branch
        %5637 = sbr.rel (%p5635) target = $region56
      $region55: #{moe_layer_forward.3} parent=5 // pred_region
        %s5638 = ssub.s32 %s16, 2
        // Predicated region
        $region57: #{moe_layer_forward.3} parent=55 // pred_check
          %p5639 = pneg %p174
        $region58: #{moe_layer_forward.3} parent=55 // pred_check_branch
          %5641 = sbr.rel (%p5639) target = $region60
        $region59: #{moe_layer_forward.3} parent=55 // pred_region
          %s5642 = sand.u32 %s159, 1
          %s5643 = scalar_lea.sflag [#allocation5], %s5642
          %s5644 = sand.u32 %s159, 1
          %s5645 = smul.addr %s5644, 256
          %s5646 = scalar_lea.vmem [#allocation6], %s5645
          %5647 = dma.done %s5643, 4096
        $region60: #{moe_layer_forward.3} parent=55 // pred_fallthru
          _
      $region56: #{moe_layer_forward.3} parent=5 // pred_fallthru
        _
    $region6: #{moe_layer_forward.3} parent=1 // loop_footer
      %s20 = sadd.s32 1, %s16
    $region7: #{moe_layer_forward.3} parent=1 // loop_footer_branch
      %15 = sbr.rel target = $region3
    $region8: #{moe_layer_forward.3} parent=1 // loop_exit
      _
    %5648 = vsyncpa [#allocation4], 1
    %s5649 = scalar_lea.sflag [#allocation4], 1
    %5650 = vsyncpa %s5649, 1
    %5651 = vsyncpa [#allocation5], 1
    %s5652 = scalar_lea.sflag [#allocation5], 1
    %5653 = vsyncpa %s5652, 1

</llo_original>
